<compile_context>
chip_gen: v6e
topology: v6e:2x2x1
jax: 0.10.0
libtpu: 0.0.40
codegen_flags: <defaults>
</compile_context>

<pallas_src>
import functools
import math

import jax
import jax.numpy as jnp
from jax.experimental import pallas as pl
from jax.experimental.pallas import tpu as pltpu


# ---------------------------------------------------------------------------
# In-kernel helpers
# ---------------------------------------------------------------------------

def _layernorm(x, g, b, eps):
    # single-pass variance (E[x^2] - mu^2), clamped to avoid tiny negative cancellation
    mu = jnp.mean(x, axis=-1, keepdims=True)
    var = jnp.maximum(jnp.mean(x * x, axis=-1, keepdims=True) - mu * mu, 0.0)
    return (x - mu) * jax.lax.rsqrt(var + eps) * g + b


def _split_heads(t, B, S, nh, dh):
    # (B*S, nh*dh) -> (B*nh, S, dh)
    return t.reshape(B, S, nh, dh).transpose(0, 2, 1, 3).reshape(B * nh, S, dh)


def _merge_heads(t, B, S, nh, dh):
    # (B*nh, S, dh) -> (B*S, nh*dh)
    return t.reshape(B, nh, S, dh).transpose(0, 2, 1, 3).reshape(B * S, nh * dh)


# ---------------------------------------------------------------------------
# Fused whole-model kernel (embedding LN + L encoder layers + CLS head + softmax)
# ---------------------------------------------------------------------------

def _clf_kernel(x_emb_ref, bias_ref, embg_ref, embb_ref,
                wqkv_ref, bqkv_ref, wo_ref, bo_ref, ln1g_ref, ln1b_ref,
                wi_ref, bi_ref, wf_ref, bf_ref, ln2g_ref, ln2b_ref,
                hw1_ref, hb1_ref, hw2_ref, hb2_ref,
                probs_ref, x_state,
                *, B, S, nh, dh, eps):
    H = nh * dh
    l = pl.program_id(0)
    last = pl.num_programs(0) - 1

    # --- grid-step-0 prologue: embedding LayerNorm (no residual), fused in-kernel ---
    @pl.when(l == 0)
    def _():
        x_state[...] = _layernorm(x_emb_ref[...], embg_ref[...], embb_ref[...], eps)

    x = x_state[...]                                       # (B*S, H) f32 residual stream
    x_bf = x.astype(jnp.bfloat16)

    # --- fused QKV projection: one lane-dense (M, 3H) MXU matmul, bf16 in / f32 acc ---
    qkv = jnp.dot(x_bf, wqkv_ref[...], preferred_element_type=jnp.float32) + bqkv_ref[...]

    # --- head-batched multi-head self-attention: all heads in one 3-D contraction ---
    q = _split_heads(qkv[:, :H], B, S, nh, dh).astype(jnp.bfloat16)        # (B*nh, S, dh)
    k = _split_heads(qkv[:, H:2 * H], B, S, nh, dh).astype(jnp.bfloat16)
    v = _split_heads(qkv[:, 2 * H:], B, S, nh, dh).astype(jnp.bfloat16)
    scale = 1.0 / math.sqrt(dh)
    s = jnp.einsum("bqd,bkd->bqk", q, k,
                   preferred_element_type=jnp.float32) * scale             # (B*nh, S, S)
    s = s + bias_ref[...]                                                  # (B*nh, 1, S) key mask
    m = jnp.max(s, axis=-1, keepdims=True)
    p = jnp.exp(s - m)
    p = p * pl.reciprocal(jnp.sum(p, axis=-1, keepdims=True), approx=True)
    ctx = jnp.einsum("bqk,bkd->bqd", p.astype(jnp.bfloat16), v,
                     preferred_element_type=jnp.float32)                   # (B*nh, S, dh)
    ctx = _merge_heads(ctx, B, S, nh, dh)                                  # (B*S, H)

    # --- output projection + residual + LayerNorm ---
    attn = jnp.dot(ctx.astype(jnp.bfloat16), wo_ref[...],
                   preferred_element_type=jnp.float32) + bo_ref[...]
    h1 = _layernorm(attn + x, ln1g_ref[...], ln1b_ref[...], eps)

    # --- FFN (GELU) + residual + LayerNorm ---
    ff = jnp.dot(h1.astype(jnp.bfloat16), wi_ref[...],
                 preferred_element_type=jnp.float32) + bi_ref[...]
    ff = 0.5 * ff * (1.0 + jnp.tanh(0.7978845608028654 * (ff + 0.044715 * ff * ff * ff)))
    ff = jnp.dot(ff.astype(jnp.bfloat16), wf_ref[...],
                 preferred_element_type=jnp.float32) + bf_ref[...]
    h2 = _layernorm(ff + h1, ln2g_ref[...], ln2b_ref[...], eps)

    x_state[...] = h2                                      # residual stream stays in VMEM

    # --- last-step epilogue: CLS row -> dense -> tanh -> out_proj -> softmax ---
    @pl.when(l == last)
    def _():
        cls = h2.reshape(B, S, H)[:, 0, :]                 # (B, H); dropout = identity (eval)
        hid = jnp.tanh(jnp.dot(cls.astype(jnp.bfloat16), hw1_ref[...],
                               preferred_element_type=jnp.float32) + hb1_ref[...])
        logits = jnp.dot(hid.astype(jnp.bfloat16), hw2_ref[...],
                         preferred_element_type=jnp.float32) + hb2_ref[...]
        mx = jnp.max(logits, axis=-1, keepdims=True)
        e = jnp.exp(logits - mx)
        # exact divide: user-facing probabilities must sum to 1 within tight tolerance
        probs_ref[...] = (e / jnp.sum(e, axis=-1, keepdims=True)).astype(probs_ref.dtype)


# ---------------------------------------------------------------------------
# Config, deterministic params (stacked per-layer, matmul weights pre-cast bf16)
# ---------------------------------------------------------------------------

class Config:
    vocab_size = 128
    max_position = 32
    type_vocab = 2
    hidden = 128          # lane-dense (multiple of 128)
    heads = 4             # head_dim = 32
    intermediate = 256    # lane-dense (multiple of 128)
    layers = 2
    num_labels = 2


def init_params(key, cfg):
    keys = iter(jax.random.split(key, 64))
    nrm = lambda shape: 0.02 * jax.random.normal(next(keys), shape, jnp.float32)
    zeros = lambda shape: jnp.zeros(shape, jnp.float32)
    ones = lambda shape: jnp.ones(shape, jnp.float32)
    L, H, I = cfg.layers, cfg.hidden, cfg.intermediate
    bf16 = jnp.bfloat16
    return {
        "word_emb": nrm((cfg.vocab_size, H)),
        "pos_emb": nrm((cfg.max_position, H)),
        "type_emb": nrm((cfg.type_vocab, H)),
        "emb_ln_g": ones((1, H)), "emb_ln_b": zeros((1, H)),
        # per-layer weights stacked along a leading L axis; MXU weights pre-cast to bf16 once
        "wqkv": nrm((L, H, 3 * H)).astype(bf16), "bqkv": zeros((L, 1, 3 * H)),
        "wo": nrm((L, H, H)).astype(bf16), "bo": zeros((L, 1, H)),
        "ln1_g": ones((L, 1, H)), "ln1_b": zeros((L, 1, H)),
        "wi": nrm((L, H, I)).astype(bf16), "bi": zeros((L, 1, I)),
        "wf": nrm((L, I, H)).astype(bf16), "bf": zeros((L, 1, H)),
        "ln2_g": ones((L, 1, H)), "ln2_b": zeros((L, 1, H)),
        "head_w1": nrm((H, H)).astype(bf16), "head_b1": zeros((1, H)),
        "head_w2": nrm((H, cfg.num_labels)).astype(bf16), "head_b2": zeros((1, cfg.num_labels)),
    }


# ---------------------------------------------------------------------------
# Forward pass: embedding gather (XLA glue) + one fused Pallas call
# ---------------------------------------------------------------------------

def clf_model_forward(params, input_ids, attention_mask, cfg):
    """ClfModel.forward: encoder -> CLS head -> softmax. Returns (B, num_labels) probs."""
    B, S = input_ids.shape
    H, I, L, NL = cfg.hidden, cfg.intermediate, cfg.layers, cfg.num_labels
    nh = cfg.heads
    dh = H // nh
    M = B * S

    # Embedding gathers are glue (left in JAX); token_type_ids implicitly all zero.
    emb = (jnp.take(params["word_emb"], input_ids, axis=0)
           + params["pos_emb"][None, :S, :]
           + params["type_emb"][0][None, None, :]).reshape(M, H)

    # HF-BERT extended attention mask, pre-expanded per head: (B*nh, 1, S) additive key bias.
    mask_bias = (1.0 - attention_mask.astype(jnp.float32)) * -1e9          # (B, S)
    mask_bias = jnp.repeat(mask_bias, nh, axis=0)[:, None, :]              # (B*nh, 1, S)

    const2 = lambda shape: pl.BlockSpec(shape, lambda l: (0, 0))
    const3 = lambda shape: pl.BlockSpec(shape, lambda l: (0, 0, 0))
    stack = lambda d0, d1: pl.BlockSpec((None, d0, d1), lambda l: (l, 0, 0))

    kern = functools.partial(_clf_kernel, B=B, S=S, nh=nh, dh=dh, eps=1e-12)
    grid_spec = pltpu.PrefetchScalarGridSpec(
        num_scalar_prefetch=0,
        grid=(L,),
        in_specs=[
            const2((M, H)),                    # embedding sum (pre-LN)
            const3((B * nh, 1, S)),            # attention key mask bias
            const2((1, H)), const2((1, H)),    # embedding LN gamma/beta
            stack(H, 3 * H), stack(1, 3 * H),  # fused QKV
            stack(H, H), stack(1, H),          # out proj
            stack(1, H), stack(1, H),          # LN1
            stack(H, I), stack(1, I),          # FFN in
            stack(I, H), stack(1, H),          # FFN out
            stack(1, H), stack(1, H),          # LN2
            const2((H, H)), const2((1, H)),    # head dense
            const2((H, NL)), const2((1, NL)),  # head out_proj
        ],
        out_specs=pl.BlockSpec((B, NL), lambda l: (0, 0)),
        scratch_shapes=[pltpu.VMEM((M, H), jnp.float32)],   # resident residual stream
    )
    return pl.pallas_call(
        kern,
        out_shape=jax.ShapeDtypeStruct((B, NL), jnp.float32),
        grid_spec=grid_spec,
        compiler_params=pltpu.CompilerParams(dimension_semantics=("arbitrary",)),
    )(emb, mask_bias, params["emb_ln_g"], params["emb_ln_b"],
      params["wqkv"], params["bqkv"], params["wo"], params["bo"],
      params["ln1_g"], params["ln1_b"], params["wi"], params["bi"],
      params["wf"], params["bf"], params["ln2_g"], params["ln2_b"],
      params["head_w1"], params["head_b1"], params["head_w2"], params["head_b2"])


if __name__ == "__main__":
    cfg = Config()
    key = jax.random.PRNGKey(0)
    pkey, dkey = jax.random.split(key)
    params = init_params(pkey, cfg)

    B, S = 2, 8   # NOTE: dispatch/latency-bound at toy size (M=16 rows << MXU width)
    input_ids = jax.random.randint(dkey, (B, S), 0, cfg.vocab_size, dtype=jnp.int32)
    attention_mask = jnp.ones((B, S), dtype=jnp.int32).at[1, 6:].set(0)   # pad last 2 tokens of row 1

    fwd = jax.jit(functools.partial(clf_model_forward, cfg=cfg))
    probs = fwd(params, input_ids, attention_mask)
    probs = jax.block_until_ready(probs)

    assert probs.shape == (B, cfg.num_labels)
    assert bool(jnp.all(jnp.isfinite(probs)))
    assert bool(jnp.allclose(jnp.sum(probs, axis=-1), 1.0, atol=1e-4))
    print("KERNEL_OK")
</pallas_src>

<mosaic_0001>
module attributes {stable_mosaic.version = 11 : i64} {
  func.func @_clf_kernel(%arg0: i32, %arg1: memref<16x128xf32, #tpu.memory_space<vmem>>, %arg2: memref<8x1x8xf32, #tpu.memory_space<vmem>>, %arg3: memref<1x128xf32, #tpu.memory_space<vmem>>, %arg4: memref<1x128xf32, #tpu.memory_space<vmem>>, %arg5: memref<1x128x384xbf16, #tpu.memory_space<vmem>>, %arg6: memref<1x1x384xf32, #tpu.memory_space<vmem>>, %arg7: memref<1x128x128xbf16, #tpu.memory_space<vmem>>, %arg8: memref<1x1x128xf32, #tpu.memory_space<vmem>>, %arg9: memref<1x1x128xf32, #tpu.memory_space<vmem>>, %arg10: memref<1x1x128xf32, #tpu.memory_space<vmem>>, %arg11: memref<1x128x256xbf16, #tpu.memory_space<vmem>>, %arg12: memref<1x1x256xf32, #tpu.memory_space<vmem>>, %arg13: memref<1x256x128xbf16, #tpu.memory_space<vmem>>, %arg14: memref<1x1x128xf32, #tpu.memory_space<vmem>>, %arg15: memref<1x1x128xf32, #tpu.memory_space<vmem>>, %arg16: memref<1x1x128xf32, #tpu.memory_space<vmem>>, %arg17: memref<128x128xbf16, #tpu.memory_space<vmem>>, %arg18: memref<1x128xf32, #tpu.memory_space<vmem>>, %arg19: memref<128x2xbf16, #tpu.memory_space<vmem>>, %arg20: memref<1x2xf32, #tpu.memory_space<vmem>>, %arg21: memref<2x2xf32, #tpu.memory_space<vmem>>, %arg22: memref<16x128xf32, #tpu.memory_space<vmem>>) attributes {dimension_semantics = [#tpu.dimension_semantics<arbitrary>], iteration_bounds = array<i64: 2>, scalar_prefetch = 0 : i64, scratch_operands = 1 : i64, tpu.core_type = #tpu.core_type<tc>, window_params = [{pipeline_mode = #tpu.pipeline_mode<synchronous>, transform_indices = @transform_0, window_bounds = array<i64: 16, 128>}, {pipeline_mode = #tpu.pipeline_mode<synchronous>, transform_indices = @transform_1, window_bounds = array<i64: 8, 1, 8>}, {pipeline_mode = #tpu.pipeline_mode<synchronous>, transform_indices = @transform_2, window_bounds = array<i64: 1, 128>}, {pipeline_mode = #tpu.pipeline_mode<synchronous>, transform_indices = @transform_3, window_bounds = array<i64: 1, 128>}, {transform_indices = @transform_4, window_bounds = array<i64: 1, 128, 384>}, {transform_indices = @transform_5, window_bounds = array<i64: 1, 1, 384>}, {transform_indices = @transform_6, window_bounds = array<i64: 1, 128, 128>}, {transform_indices = @transform_7, window_bounds = array<i64: 1, 1, 128>}, {transform_indices = @transform_8, window_bounds = array<i64: 1, 1, 128>}, {transform_indices = @transform_9, window_bounds = array<i64: 1, 1, 128>}, {transform_indices = @transform_10, window_bounds = array<i64: 1, 128, 256>}, {transform_indices = @transform_11, window_bounds = array<i64: 1, 1, 256>}, {transform_indices = @transform_12, window_bounds = array<i64: 1, 256, 128>}, {transform_indices = @transform_13, window_bounds = array<i64: 1, 1, 128>}, {transform_indices = @transform_14, window_bounds = array<i64: 1, 1, 128>}, {transform_indices = @transform_15, window_bounds = array<i64: 1, 1, 128>}, {pipeline_mode = #tpu.pipeline_mode<synchronous>, transform_indices = @transform_16, window_bounds = array<i64: 128, 128>}, {pipeline_mode = #tpu.pipeline_mode<synchronous>, transform_indices = @transform_17, window_bounds = array<i64: 1, 128>}, {pipeline_mode = #tpu.pipeline_mode<synchronous>, transform_indices = @transform_18, window_bounds = array<i64: 128, 2>}, {pipeline_mode = #tpu.pipeline_mode<synchronous>, transform_indices = @transform_19, window_bounds = array<i64: 1, 2>}, {pipeline_mode = #tpu.pipeline_mode<synchronous>, transform_indices = @transform_20, window_bounds = array<i64: 2, 2>}]} {
    %c0_i32 = arith.constant 0 : i32
    %0 = arith.cmpi eq, %arg0, %c0_i32 : i32
    %1 = arith.extui %0 : i1 to i32
    %c0_i32_0 = arith.constant 0 : i32
    %2 = arith.cmpi ne, %1, %c0_i32_0 : i32
    scf.if %2 {
      %c0_68 = arith.constant 0 : index
      %c0_69 = arith.constant 0 : index
      %147 = vector.load %arg1[%c0_68, %c0_69] : memref<16x128xf32, #tpu.memory_space<vmem>>, vector<16x128xf32>
      %c0_70 = arith.constant 0 : index
      %c0_71 = arith.constant 0 : index
      %148 = vector.load %arg3[%c0_70, %c0_71] : memref<1x128xf32, #tpu.memory_space<vmem>>, vector<1x128xf32>
      %c0_72 = arith.constant 0 : index
      %c0_73 = arith.constant 0 : index
      %149 = vector.load %arg4[%c0_72, %c0_73] : memref<1x128xf32, #tpu.memory_space<vmem>>, vector<1x128xf32>
      %cst_74 = arith.constant dense<0.000000e+00> : vector<16xf32>
      %150 = vector.multi_reduction <add>, %147, %cst_74 [1] : vector<16x128xf32> to vector<16xf32>
      %151 = vector.shape_cast %150 : vector<16xf32> to vector<16x1xf32>
      %cst_75 = arith.constant 1.280000e+02 : f32
      %152 = vector.broadcast %cst_75 : f32 to vector<16x1xf32>
      %153 = arith.divf %151, %152 : vector<16x1xf32>
      %154 = arith.mulf %147, %147 : vector<16x128xf32>
      %cst_76 = arith.constant dense<0.000000e+00> : vector<16xf32>
      %155 = vector.multi_reduction <add>, %154, %cst_76 [1] : vector<16x128xf32> to vector<16xf32>
      %156 = vector.shape_cast %155 : vector<16xf32> to vector<16x1xf32>
      %cst_77 = arith.constant 1.280000e+02 : f32
      %157 = vector.broadcast %cst_77 : f32 to vector<16x1xf32>
      %158 = arith.divf %156, %157 : vector<16x1xf32>
      %159 = arith.mulf %153, %153 : vector<16x1xf32>
      %160 = arith.subf %158, %159 : vector<16x1xf32>
      %cst_78 = arith.constant 0.000000e+00 : f32
      %161 = vector.broadcast %cst_78 : f32 to vector<16x1xf32>
      %162 = arith.maximumf %160, %161 : vector<16x1xf32>
      %163 = vector.broadcast %153 : vector<16x1xf32> to vector<16x128xf32>
      %164 = arith.subf %147, %163 : vector<16x128xf32>
      %cst_79 = arith.constant 9.99999996E-13 : f32
      %165 = vector.broadcast %cst_79 : f32 to vector<16x1xf32>
      %166 = arith.addf %162, %165 : vector<16x1xf32>
      %167 = math.rsqrt %166 : vector<16x1xf32>
      %168 = vector.broadcast %167 : vector<16x1xf32> to vector<16x128xf32>
      %169 = arith.mulf %164, %168 : vector<16x128xf32>
      %170 = vector.broadcast %148 : vector<1x128xf32> to vector<16x128xf32>
      %171 = arith.mulf %169, %170 : vector<16x128xf32>
      %172 = vector.broadcast %149 : vector<1x128xf32> to vector<16x128xf32>
      %173 = arith.addf %171, %172 : vector<16x128xf32>
      %c0_80 = arith.constant 0 : index
      %c0_81 = arith.constant 0 : index
      %174 = vector.load %arg22[%c0_80, %c0_81] : memref<16x128xf32, #tpu.memory_space<vmem>>, vector<16x128xf32>
      tpu.vector_store %arg22[%c0_80, %c0_81], %173 {strides = array<i32>} : memref<16x128xf32, #tpu.memory_space<vmem>>, vector<16x128xf32>,
    } else {
    }
    %c0 = arith.constant 0 : index
    %c0_1 = arith.constant 0 : index
    %3 = vector.load %arg22[%c0, %c0_1] : memref<16x128xf32, #tpu.memory_space<vmem>>, vector<16x128xf32>
    %4 = arith.truncf %3 : vector<16x128xf32> to vector<16x128xbf16>
    %c0_2 = arith.constant 0 : index
    %c0_3 = arith.constant 0 : index
    %c0_4 = arith.constant 0 : index
    %5 = vector.load %arg5[%c0_2, %c0_3, %c0_4] : memref<1x128x384xbf16, #tpu.memory_space<vmem>>, vector<1x128x384xbf16>
    %6 = vector.shape_cast %5 : vector<1x128x384xbf16> to vector<128x384xbf16>
    %cst = arith.constant dense<0.000000e+00> : vector<16x384xf32>
    %7 = tpu.matmul %4, %6, %cst {dimension_numbers = #tpu.dot_dimension_numbers<[1], [0], [0], [1], [0, 0, 1, 1], [], []>} : vector<16x128xbf16>, vector<128x384xbf16>, vector<16x384xf32> -> vector<16x384xf32>
    %c0_5 = arith.constant 0 : index
    %c0_6 = arith.constant 0 : index
    %c0_7 = arith.constant 0 : index
    %8 = vector.load %arg6[%c0_5, %c0_6, %c0_7] : memref<1x1x384xf32, #tpu.memory_space<vmem>>, vector<1x1x384xf32>
    %9 = vector.shape_cast %8 : vector<1x1x384xf32> to vector<1x384xf32>
    %10 = vector.broadcast %9 : vector<1x384xf32> to vector<16x384xf32>
    %11 = arith.addf %7, %10 : vector<16x384xf32>
    %12 = vector.extract_strided_slice %11 {offsets = [0, 0], sizes = [16, 128], strides = [1, 1]} : vector<16x384xf32> to vector<16x128xf32>
    %13 = vector.shape_cast %12 : vector<16x128xf32> to vector<2x8x4x32xf32>
    %14 = tpu.transpose %13, [0, 2, 1, 3] : vector<2x8x4x32xf32> -> vector<2x4x8x32xf32>
    %15 = vector.shape_cast %14 : vector<2x4x8x32xf32> to vector<8x8x32xf32>
    %16 = arith.truncf %15 : vector<8x8x32xf32> to vector<8x8x32xbf16>
    %17 = vector.extract_strided_slice %11 {offsets = [0, 128], sizes = [16, 128], strides = [1, 1]} : vector<16x384xf32> to vector<16x128xf32>
    %18 = vector.shape_cast %17 : vector<16x128xf32> to vector<2x8x4x32xf32>
    %19 = tpu.transpose %18, [0, 2, 1, 3] : vector<2x8x4x32xf32> -> vector<2x4x8x32xf32>
    %20 = vector.shape_cast %19 : vector<2x4x8x32xf32> to vector<8x8x32xf32>
    %21 = arith.truncf %20 : vector<8x8x32xf32> to vector<8x8x32xbf16>
    %22 = vector.extract_strided_slice %11 {offsets = [0, 256], sizes = [16, 128], strides = [1, 1]} : vector<16x384xf32> to vector<16x128xf32>
    %23 = vector.shape_cast %22 : vector<16x128xf32> to vector<2x8x4x32xf32>
    %24 = tpu.transpose %23, [0, 2, 1, 3] : vector<2x8x4x32xf32> -> vector<2x4x8x32xf32>
    %25 = vector.shape_cast %24 : vector<2x4x8x32xf32> to vector<8x8x32xf32>
    %26 = arith.truncf %25 : vector<8x8x32xf32> to vector<8x8x32xbf16>
    "tpu.trace_start"() <{level = 10 : i32, message = "bqd,bkd->bqk"}> : () -> ()
    %cst_8 = arith.constant dense<0.000000e+00> : vector<8x8x8xf32>
    %27 = tpu.matmul %16, %21, %cst_8 {dimension_numbers = #tpu.dot_dimension_numbers<[2], [2], [1], [1], [0, 0, 0, 1, 1, 1], [0], [0]>} : vector<8x8x32xbf16>, vector<8x8x32xbf16>, vector<8x8x8xf32> -> vector<8x8x8xf32>
    "tpu.trace_stop"() : () -> ()
    %cst_9 = arith.constant 0.176776692 : f32
    %28 = vector.broadcast %cst_9 : f32 to vector<8x8x8xf32>
    %29 = arith.mulf %27, %28 : vector<8x8x8xf32>
    %c0_10 = arith.constant 0 : index
    %c0_11 = arith.constant 0 : index
    %c0_12 = arith.constant 0 : index
    %30 = vector.load %arg2[%c0_10, %c0_11, %c0_12] : memref<8x1x8xf32, #tpu.memory_space<vmem>>, vector<8x1x8xf32>
    %31 = vector.broadcast %30 : vector<8x1x8xf32> to vector<8x8x8xf32>
    %32 = arith.addf %29, %31 : vector<8x8x8xf32>
    %cst_13 = arith.constant dense<0xFF800000> : vector<8x8xf32>
    %33 = vector.multi_reduction <maximumf>, %32, %cst_13 [2] : vector<8x8x8xf32> to vector<8x8xf32>
    %34 = vector.shape_cast %33 : vector<8x8xf32> to vector<8x8x1xf32>
    %35 = vector.broadcast %34 : vector<8x8x1xf32> to vector<8x8x8xf32>
    %36 = arith.subf %32, %35 : vector<8x8x8xf32>
    %37 = math.exp %36 : vector<8x8x8xf32>
    %cst_14 = arith.constant dense<0.000000e+00> : vector<8x8xf32>
    %38 = vector.multi_reduction <add>, %37, %cst_14 [2] : vector<8x8x8xf32> to vector<8x8xf32>
    %39 = vector.shape_cast %38 : vector<8x8xf32> to vector<8x8x1xf32>
    %40 = tpu.reciprocal %39 {approx = true} : vector<8x8x1xf32> -> vector<8x8x1xf32>
    %41 = vector.broadcast %40 : vector<8x8x1xf32> to vector<8x8x8xf32>
    %42 = arith.mulf %37, %41 : vector<8x8x8xf32>
    %43 = arith.truncf %42 : vector<8x8x8xf32> to vector<8x8x8xbf16>
    "tpu.trace_start"() <{level = 10 : i32, message = "bqk,bkd->bqd"}> : () -> ()
    %cst_15 = arith.constant dense<0.000000e+00> : vector<8x8x32xf32>
    %44 = tpu.matmul %43, %26, %cst_15 {dimension_numbers = #tpu.dot_dimension_numbers<[2], [1], [1], [2], [0, 0, 0, 1, 1, 2], [0], [0]>} : vector<8x8x8xbf16>, vector<8x8x32xbf16>, vector<8x8x32xf32> -> vector<8x8x32xf32>
    "tpu.trace_stop"() : () -> ()
    %45 = vector.shape_cast %44 : vector<8x8x32xf32> to vector<2x4x8x32xf32>
    %46 = tpu.transpose %45, [0, 2, 1, 3] : vector<2x4x8x32xf32> -> vector<2x8x4x32xf32>
    %47 = vector.shape_cast %46 : vector<2x8x4x32xf32> to vector<16x128xf32>
    %48 = arith.truncf %47 : vector<16x128xf32> to vector<16x128xbf16>
    %c0_16 = arith.constant 0 : index
    %c0_17 = arith.constant 0 : index
    %c0_18 = arith.constant 0 : index
    %49 = vector.load %arg7[%c0_16, %c0_17, %c0_18] : memref<1x128x128xbf16, #tpu.memory_space<vmem>>, vector<1x128x128xbf16>
    %50 = vector.shape_cast %49 : vector<1x128x128xbf16> to vector<128x128xbf16>
    %cst_19 = arith.constant dense<0.000000e+00> : vector<16x128xf32>
    %51 = tpu.matmul %48, %50, %cst_19 {dimension_numbers = #tpu.dot_dimension_numbers<[1], [0], [0], [1], [0, 0, 1, 1], [], []>} : vector<16x128xbf16>, vector<128x128xbf16>, vector<16x128xf32> -> vector<16x128xf32>
    %c0_20 = arith.constant 0 : index
    %c0_21 = arith.constant 0 : index
    %c0_22 = arith.constant 0 : index
    %52 = vector.load %arg8[%c0_20, %c0_21, %c0_22] : memref<1x1x128xf32, #tpu.memory_space<vmem>>, vector<1x1x128xf32>
    %53 = vector.shape_cast %52 : vector<1x1x128xf32> to vector<1x128xf32>
    %54 = vector.broadcast %53 : vector<1x128xf32> to vector<16x128xf32>
    %55 = arith.addf %51, %54 : vector<16x128xf32>
    %56 = arith.addf %55, %3 : vector<16x128xf32>
    %c0_23 = arith.constant 0 : index
    %c0_24 = arith.constant 0 : index
    %c0_25 = arith.constant 0 : index
    %57 = vector.load %arg9[%c0_23, %c0_24, %c0_25] : memref<1x1x128xf32, #tpu.memory_space<vmem>>, vector<1x1x128xf32>
    %58 = vector.shape_cast %57 : vector<1x1x128xf32> to vector<1x128xf32>
    %c0_26 = arith.constant 0 : index
    %c0_27 = arith.constant 0 : index
    %c0_28 = arith.constant 0 : index
    %59 = vector.load %arg10[%c0_26, %c0_27, %c0_28] : memref<1x1x128xf32, #tpu.memory_space<vmem>>, vector<1x1x128xf32>
    %60 = vector.shape_cast %59 : vector<1x1x128xf32> to vector<1x128xf32>
    %cst_29 = arith.constant dense<0.000000e+00> : vector<16xf32>
    %61 = vector.multi_reduction <add>, %56, %cst_29 [1] : vector<16x128xf32> to vector<16xf32>
    %62 = vector.shape_cast %61 : vector<16xf32> to vector<16x1xf32>
    %cst_30 = arith.constant 1.280000e+02 : f32
    %63 = vector.broadcast %cst_30 : f32 to vector<16x1xf32>
    %64 = arith.divf %62, %63 : vector<16x1xf32>
    %65 = arith.mulf %56, %56 : vector<16x128xf32>
    %cst_31 = arith.constant dense<0.000000e+00> : vector<16xf32>
    %66 = vector.multi_reduction <add>, %65, %cst_31 [1] : vector<16x128xf32> to vector<16xf32>
    %67 = vector.shape_cast %66 : vector<16xf32> to vector<16x1xf32>
    %cst_32 = arith.constant 1.280000e+02 : f32
    %68 = vector.broadcast %cst_32 : f32 to vector<16x1xf32>
    %69 = arith.divf %67, %68 : vector<16x1xf32>
    %70 = arith.mulf %64, %64 : vector<16x1xf32>
    %71 = arith.subf %69, %70 : vector<16x1xf32>
    %cst_33 = arith.constant 0.000000e+00 : f32
    %72 = vector.broadcast %cst_33 : f32 to vector<16x1xf32>
    %73 = arith.maximumf %71, %72 : vector<16x1xf32>
    %74 = vector.broadcast %64 : vector<16x1xf32> to vector<16x128xf32>
    %75 = arith.subf %56, %74 : vector<16x128xf32>
    %cst_34 = arith.constant 9.99999996E-13 : f32
    %76 = vector.broadcast %cst_34 : f32 to vector<16x1xf32>
    %77 = arith.addf %73, %76 : vector<16x1xf32>
    %78 = math.rsqrt %77 : vector<16x1xf32>
    %79 = vector.broadcast %78 : vector<16x1xf32> to vector<16x128xf32>
    %80 = arith.mulf %75, %79 : vector<16x128xf32>
    %81 = vector.broadcast %58 : vector<1x128xf32> to vector<16x128xf32>
    %82 = arith.mulf %80, %81 : vector<16x128xf32>
    %83 = vector.broadcast %60 : vector<1x128xf32> to vector<16x128xf32>
    %84 = arith.addf %82, %83 : vector<16x128xf32>
    %85 = arith.truncf %84 : vector<16x128xf32> to vector<16x128xbf16>
    %c0_35 = arith.constant 0 : index
    %c0_36 = arith.constant 0 : index
    %c0_37 = arith.constant 0 : index
    %86 = vector.load %arg11[%c0_35, %c0_36, %c0_37] : memref<1x128x256xbf16, #tpu.memory_space<vmem>>, vector<1x128x256xbf16>
    %87 = vector.shape_cast %86 : vector<1x128x256xbf16> to vector<128x256xbf16>
    %cst_38 = arith.constant dense<0.000000e+00> : vector<16x256xf32>
    %88 = tpu.matmul %85, %87, %cst_38 {dimension_numbers = #tpu.dot_dimension_numbers<[1], [0], [0], [1], [0, 0, 1, 1], [], []>} : vector<16x128xbf16>, vector<128x256xbf16>, vector<16x256xf32> -> vector<16x256xf32>
    %c0_39 = arith.constant 0 : index
    %c0_40 = arith.constant 0 : index
    %c0_41 = arith.constant 0 : index
    %89 = vector.load %arg12[%c0_39, %c0_40, %c0_41] : memref<1x1x256xf32, #tpu.memory_space<vmem>>, vector<1x1x256xf32>
    %90 = vector.shape_cast %89 : vector<1x1x256xf32> to vector<1x256xf32>
    %91 = vector.broadcast %90 : vector<1x256xf32> to vector<16x256xf32>
    %92 = arith.addf %88, %91 : vector<16x256xf32>
    %cst_42 = arith.constant 5.000000e-01 : f32
    %93 = vector.broadcast %cst_42 : f32 to vector<16x256xf32>
    %94 = arith.mulf %93, %92 : vector<16x256xf32>
    %cst_43 = arith.constant 4.471500e-02 : f32
    %95 = vector.broadcast %cst_43 : f32 to vector<16x256xf32>
    %96 = arith.mulf %95, %92 : vector<16x256xf32>
    %97 = arith.mulf %96, %92 : vector<16x256xf32>
    %98 = arith.mulf %97, %92 : vector<16x256xf32>
    %99 = arith.addf %92, %98 : vector<16x256xf32>
    %cst_44 = arith.constant 0.797884583 : f32
    %100 = vector.broadcast %cst_44 : f32 to vector<16x256xf32>
    %101 = arith.mulf %100, %99 : vector<16x256xf32>
    %102 = math.tanh %101 : vector<16x256xf32>
    %cst_45 = arith.constant 1.000000e+00 : f32
    %103 = vector.broadcast %cst_45 : f32 to vector<16x256xf32>
    %104 = arith.addf %103, %102 : vector<16x256xf32>
    %105 = arith.mulf %94, %104 : vector<16x256xf32>
    %106 = arith.truncf %105 : vector<16x256xf32> to vector<16x256xbf16>
    %c0_46 = arith.constant 0 : index
    %c0_47 = arith.constant 0 : index
    %c0_48 = arith.constant 0 : index
    %107 = vector.load %arg13[%c0_46, %c0_47, %c0_48] : memref<1x256x128xbf16, #tpu.memory_space<vmem>>, vector<1x256x128xbf16>
    %108 = vector.shape_cast %107 : vector<1x256x128xbf16> to vector<256x128xbf16>
    %cst_49 = arith.constant dense<0.000000e+00> : vector<16x128xf32>
    %109 = tpu.matmul %106, %108, %cst_49 {dimension_numbers = #tpu.dot_dimension_numbers<[1], [0], [0], [1], [0, 0, 1, 1], [], []>} : vector<16x256xbf16>, vector<256x128xbf16>, vector<16x128xf32> -> vector<16x128xf32>
    %c0_50 = arith.constant 0 : index
    %c0_51 = arith.constant 0 : index
    %c0_52 = arith.constant 0 : index
    %110 = vector.load %arg14[%c0_50, %c0_51, %c0_52] : memref<1x1x128xf32, #tpu.memory_space<vmem>>, vector<1x1x128xf32>
    %111 = vector.shape_cast %110 : vector<1x1x128xf32> to vector<1x128xf32>
    %112 = vector.broadcast %111 : vector<1x128xf32> to vector<16x128xf32>
    %113 = arith.addf %109, %112 : vector<16x128xf32>
    %114 = arith.addf %113, %84 : vector<16x128xf32>
    %c0_53 = arith.constant 0 : index
    %c0_54 = arith.constant 0 : index
    %c0_55 = arith.constant 0 : index
    %115 = vector.load %arg15[%c0_53, %c0_54, %c0_55] : memref<1x1x128xf32, #tpu.memory_space<vmem>>, vector<1x1x128xf32>
    %116 = vector.shape_cast %115 : vector<1x1x128xf32> to vector<1x128xf32>
    %c0_56 = arith.constant 0 : index
    %c0_57 = arith.constant 0 : index
    %c0_58 = arith.constant 0 : index
    %117 = vector.load %arg16[%c0_56, %c0_57, %c0_58] : memref<1x1x128xf32, #tpu.memory_space<vmem>>, vector<1x1x128xf32>
    %118 = vector.shape_cast %117 : vector<1x1x128xf32> to vector<1x128xf32>
    %cst_59 = arith.constant dense<0.000000e+00> : vector<16xf32>
    %119 = vector.multi_reduction <add>, %114, %cst_59 [1] : vector<16x128xf32> to vector<16xf32>
    %120 = vector.shape_cast %119 : vector<16xf32> to vector<16x1xf32>
    %cst_60 = arith.constant 1.280000e+02 : f32
    %121 = vector.broadcast %cst_60 : f32 to vector<16x1xf32>
    %122 = arith.divf %120, %121 : vector<16x1xf32>
    %123 = arith.mulf %114, %114 : vector<16x128xf32>
    %cst_61 = arith.constant dense<0.000000e+00> : vector<16xf32>
    %124 = vector.multi_reduction <add>, %123, %cst_61 [1] : vector<16x128xf32> to vector<16xf32>
    %125 = vector.shape_cast %124 : vector<16xf32> to vector<16x1xf32>
    %cst_62 = arith.constant 1.280000e+02 : f32
    %126 = vector.broadcast %cst_62 : f32 to vector<16x1xf32>
    %127 = arith.divf %125, %126 : vector<16x1xf32>
    %128 = arith.mulf %122, %122 : vector<16x1xf32>
    %129 = arith.subf %127, %128 : vector<16x1xf32>
    %cst_63 = arith.constant 0.000000e+00 : f32
    %130 = vector.broadcast %cst_63 : f32 to vector<16x1xf32>
    %131 = arith.maximumf %129, %130 : vector<16x1xf32>
    %132 = vector.broadcast %122 : vector<16x1xf32> to vector<16x128xf32>
    %133 = arith.subf %114, %132 : vector<16x128xf32>
    %cst_64 = arith.constant 9.99999996E-13 : f32
    %134 = vector.broadcast %cst_64 : f32 to vector<16x1xf32>
    %135 = arith.addf %131, %134 : vector<16x1xf32>
    %136 = math.rsqrt %135 : vector<16x1xf32>
    %137 = vector.broadcast %136 : vector<16x1xf32> to vector<16x128xf32>
    %138 = arith.mulf %133, %137 : vector<16x128xf32>
    %139 = vector.broadcast %116 : vector<1x128xf32> to vector<16x128xf32>
    %140 = arith.mulf %138, %139 : vector<16x128xf32>
    %141 = vector.broadcast %118 : vector<1x128xf32> to vector<16x128xf32>
    %142 = arith.addf %140, %141 : vector<16x128xf32>
    %c0_65 = arith.constant 0 : index
    %c0_66 = arith.constant 0 : index
    %143 = vector.load %arg22[%c0_65, %c0_66] : memref<16x128xf32, #tpu.memory_space<vmem>>, vector<16x128xf32>
    tpu.vector_store %arg22[%c0_65, %c0_66], %142 {strides = array<i32>} : memref<16x128xf32, #tpu.memory_space<vmem>>, vector<16x128xf32>,
    %c1_i32 = arith.constant 1 : i32
    %144 = arith.cmpi eq, %arg0, %c1_i32 : i32
    %145 = arith.extui %144 : i1 to i32
    %c0_i32_67 = arith.constant 0 : i32
    %146 = arith.cmpi ne, %145, %c0_i32_67 : i32
    scf.if %146 {
      %147 = vector.shape_cast %142 : vector<16x128xf32> to vector<2x8x128xf32>
      %148 = vector.extract_strided_slice %147 {offsets = [0, 0, 0], sizes = [2, 1, 128], strides = [1, 1, 1]} : vector<2x8x128xf32> to vector<2x1x128xf32>
      %149 = vector.shape_cast %148 : vector<2x1x128xf32> to vector<2x128xf32>
      %150 = arith.truncf %149 : vector<2x128xf32> to vector<2x128xbf16>
      %c0_68 = arith.constant 0 : index
      %c0_69 = arith.constant 0 : index
      %151 = vector.load %arg17[%c0_68, %c0_69] : memref<128x128xbf16, #tpu.memory_space<vmem>>, vector<128x128xbf16>
      %cst_70 = arith.constant dense<0.000000e+00> : vector<2x128xf32>
      %152 = tpu.matmul %150, %151, %cst_70 {dimension_numbers = #tpu.dot_dimension_numbers<[1], [0], [0], [1], [0, 0, 1, 1], [], []>} : vector<2x128xbf16>, vector<128x128xbf16>, vector<2x128xf32> -> vector<2x128xf32>
      %c0_71 = arith.constant 0 : index
      %c0_72 = arith.constant 0 : index
      %153 = vector.load %arg18[%c0_71, %c0_72] : memref<1x128xf32, #tpu.memory_space<vmem>>, vector<1x128xf32>
      %154 = vector.broadcast %153 : vector<1x128xf32> to vector<2x128xf32>
      %155 = arith.addf %152, %154 : vector<2x128xf32>
      %156 = math.tanh %155 : vector<2x128xf32>
      %157 = arith.truncf %156 : vector<2x128xf32> to vector<2x128xbf16>
      %c0_73 = arith.constant 0 : index
      %c0_74 = arith.constant 0 : index
      %158 = vector.load %arg19[%c0_73, %c0_74] : memref<128x2xbf16, #tpu.memory_space<vmem>>, vector<128x2xbf16>
      %cst_75 = arith.constant dense<0.000000e+00> : vector<2x2xf32>
      %159 = tpu.matmul %157, %158, %cst_75 {dimension_numbers = #tpu.dot_dimension_numbers<[1], [0], [0], [1], [0, 0, 1, 1], [], []>} : vector<2x128xbf16>, vector<128x2xbf16>, vector<2x2xf32> -> vector<2x2xf32>
      %c0_76 = arith.constant 0 : index
      %c0_77 = arith.constant 0 : index
      %160 = vector.load %arg20[%c0_76, %c0_77] : memref<1x2xf32, #tpu.memory_space<vmem>>, vector<1x2xf32>
      %161 = vector.broadcast %160 : vector<1x2xf32> to vector<2x2xf32>
      %162 = arith.addf %159, %161 : vector<2x2xf32>
      %cst_78 = arith.constant dense<0xFF800000> : vector<2xf32>
      %163 = vector.multi_reduction <maximumf>, %162, %cst_78 [1] : vector<2x2xf32> to vector<2xf32>
      %164 = vector.shape_cast %163 : vector<2xf32> to vector<2x1xf32>
      %165 = vector.broadcast %164 : vector<2x1xf32> to vector<2x2xf32>
      %166 = arith.subf %162, %165 : vector<2x2xf32>
      %167 = math.exp %166 : vector<2x2xf32>
      %cst_79 = arith.constant dense<0.000000e+00> : vector<2xf32>
      %168 = vector.multi_reduction <add>, %167, %cst_79 [1] : vector<2x2xf32> to vector<2xf32>
      %169 = vector.shape_cast %168 : vector<2xf32> to vector<2x1xf32>
      %170 = vector.broadcast %169 : vector<2x1xf32> to vector<2x2xf32>
      %171 = arith.divf %167, %170 : vector<2x2xf32>
      %c0_80 = arith.constant 0 : index
      %c0_81 = arith.constant 0 : index
      %172 = vector.load %arg21[%c0_80, %c0_81] : memref<2x2xf32, #tpu.memory_space<vmem>>, vector<2x2xf32>
      tpu.vector_store %arg21[%c0_80, %c0_81], %171 {strides = array<i32>} : memref<2x2xf32, #tpu.memory_space<vmem>>, vector<2x2xf32>,
    } else {
    }
    return
  }
  func.func @transform_0(%arg0: i32) -> (i32, i32) {
    %c0_i32 = arith.constant 0 : i32
    %c0_i32_0 = arith.constant 0 : i32
    %c0_i32_1 = arith.constant 0 : i32
    return %c0_i32, %c0_i32_0 : i32, i32
  }
  func.func @transform_1(%arg0: i32) -> (i32, i32, i32) {
    %c0_i32 = arith.constant 0 : i32
    %c0_i32_0 = arith.constant 0 : i32
    %c0_i32_1 = arith.constant 0 : i32
    %c0_i32_2 = arith.constant 0 : i32
    return %c0_i32, %c0_i32_0, %c0_i32_1 : i32, i32, i32
  }
  func.func @transform_2(%arg0: i32) -> (i32, i32) {
    %c0_i32 = arith.constant 0 : i32
    %c0_i32_0 = arith.constant 0 : i32
    %c0_i32_1 = arith.constant 0 : i32
    return %c0_i32, %c0_i32_0 : i32, i32
  }
  func.func @transform_3(%arg0: i32) -> (i32, i32) {
    %c0_i32 = arith.constant 0 : i32
    %c0_i32_0 = arith.constant 0 : i32
    %c0_i32_1 = arith.constant 0 : i32
    return %c0_i32, %c0_i32_0 : i32, i32
  }
  func.func @transform_4(%arg0: i32) -> (i32, i32, i32) {
    %c0_i32 = arith.constant 0 : i32
    %c0_i32_0 = arith.constant 0 : i32
    %c0_i32_1 = arith.constant 0 : i32
    return %arg0, %c0_i32, %c0_i32_0 : i32, i32, i32
  }
  func.func @transform_5(%arg0: i32) -> (i32, i32, i32) {
    %c0_i32 = arith.constant 0 : i32
    %c0_i32_0 = arith.constant 0 : i32
    %c0_i32_1 = arith.constant 0 : i32
    return %arg0, %c0_i32, %c0_i32_0 : i32, i32, i32
  }
  func.func @transform_6(%arg0: i32) -> (i32, i32, i32) {
    %c0_i32 = arith.constant 0 : i32
    %c0_i32_0 = arith.constant 0 : i32
    %c0_i32_1 = arith.constant 0 : i32
    return %arg0, %c0_i32, %c0_i32_0 : i32, i32, i32
  }
  func.func @transform_7(%arg0: i32) -> (i32, i32, i32) {
    %c0_i32 = arith.constant 0 : i32
    %c0_i32_0 = arith.constant 0 : i32
    %c0_i32_1 = arith.constant 0 : i32
    return %arg0, %c0_i32, %c0_i32_0 : i32, i32, i32
  }
  func.func @transform_8(%arg0: i32) -> (i32, i32, i32) {
    %c0_i32 = arith.constant 0 : i32
    %c0_i32_0 = arith.constant 0 : i32
    %c0_i32_1 = arith.constant 0 : i32
    return %arg0, %c0_i32, %c0_i32_0 : i32, i32, i32
  }
  func.func @transform_9(%arg0: i32) -> (i32, i32, i32) {
    %c0_i32 = arith.constant 0 : i32
    %c0_i32_0 = arith.constant 0 : i32
    %c0_i32_1 = arith.constant 0 : i32
    return %arg0, %c0_i32, %c0_i32_0 : i32, i32, i32
  }
  func.func @transform_10(%arg0: i32) -> (i32, i32, i32) {
    %c0_i32 = arith.constant 0 : i32
    %c0_i32_0 = arith.constant 0 : i32
    %c0_i32_1 = arith.constant 0 : i32
    return %arg0, %c0_i32, %c0_i32_0 : i32, i32, i32
  }
  func.func @transform_11(%arg0: i32) -> (i32, i32, i32) {
    %c0_i32 = arith.constant 0 : i32
    %c0_i32_0 = arith.constant 0 : i32
    %c0_i32_1 = arith.constant 0 : i32
    return %arg0, %c0_i32, %c0_i32_0 : i32, i32, i32
  }
  func.func @transform_12(%arg0: i32) -> (i32, i32, i32) {
    %c0_i32 = arith.constant 0 : i32
    %c0_i32_0 = arith.constant 0 : i32
    %c0_i32_1 = arith.constant 0 : i32
    return %arg0, %c0_i32, %c0_i32_0 : i32, i32, i32
  }
  func.func @transform_13(%arg0: i32) -> (i32, i32, i32) {
    %c0_i32 = arith.constant 0 : i32
    %c0_i32_0 = arith.constant 0 : i32
    %c0_i32_1 = arith.constant 0 : i32
    return %arg0, %c0_i32, %c0_i32_0 : i32, i32, i32
  }
  func.func @transform_14(%arg0: i32) -> (i32, i32, i32) {
    %c0_i32 = arith.constant 0 : i32
    %c0_i32_0 = arith.constant 0 : i32
    %c0_i32_1 = arith.constant 0 : i32
    return %arg0, %c0_i32, %c0_i32_0 : i32, i32, i32
  }
  func.func @transform_15(%arg0: i32) -> (i32, i32, i32) {
    %c0_i32 = arith.constant 0 : i32
    %c0_i32_0 = arith.constant 0 : i32
    %c0_i32_1 = arith.constant 0 : i32
    return %arg0, %c0_i32, %c0_i32_0 : i32, i32, i32
  }
  func.func @transform_16(%arg0: i32) -> (i32, i32) {
    %c0_i32 = arith.constant 0 : i32
    %c0_i32_0 = arith.constant 0 : i32
    %c0_i32_1 = arith.constant 0 : i32
    return %c0_i32, %c0_i32_0 : i32, i32
  }
  func.func @transform_17(%arg0: i32) -> (i32, i32) {
    %c0_i32 = arith.constant 0 : i32
    %c0_i32_0 = arith.constant 0 : i32
    %c0_i32_1 = arith.constant 0 : i32
    return %c0_i32, %c0_i32_0 : i32, i32
  }
  func.func @transform_18(%arg0: i32) -> (i32, i32) {
    %c0_i32 = arith.constant 0 : i32
    %c0_i32_0 = arith.constant 0 : i32
    %c0_i32_1 = arith.constant 0 : i32
    return %c0_i32, %c0_i32_0 : i32, i32
  }
  func.func @transform_19(%arg0: i32) -> (i32, i32) {
    %c0_i32 = arith.constant 0 : i32
    %c0_i32_0 = arith.constant 0 : i32
    %c0_i32_1 = arith.constant 0 : i32
    return %c0_i32, %c0_i32_0 : i32, i32
  }
  func.func @transform_20(%arg0: i32) -> (i32, i32) {
    %c0_i32 = arith.constant 0 : i32
    %c0_i32_0 = arith.constant 0 : i32
    %c0_i32_1 = arith.constant 0 : i32
    return %c0_i32, %c0_i32_0 : i32, i32
  }
}

</mosaic_0001>

<llo_original>
// kernel: clf_model_forward.1
$region0: #{clf_model_forward.1}
  #allocation0 [shape = 'u32[]', space=smem, size = 0x4, offset = 0x4, fixed_abs, tag = 'smem constant byte address 0x4 - core index']
  #allocation1 [shape = 'u32[144,128]{1,0:T(1,128)}', space=vmem, size = 0x12000, scoped, tag = 'internal scratch']
  #allocation2 [shape = 'f32[16,128]{1,0:T(8,128)}', space=vmem, size = 0x2000, scoped, tag = 'scratch operand']
  %s0 = inlined_call_operand.vmem [shape: f32[16,128], index: 0, kind: input, shape index: {}]
  %s1 = inlined_call_operand.vmem [shape: f32[8,1,8], index: 1, kind: input, shape index: {}]
  %s2 = inlined_call_operand.hbm [shape: f32[1,128], index: 2, kind: input, shape index: {}]
  %s3 = inlined_call_operand.hbm [shape: f32[1,128], index: 3, kind: input, shape index: {}]
  %s4 = inlined_call_operand.hbm [shape: bf16[2,128,384], index: 4, kind: input, shape index: {}]
  %s5 = inlined_call_operand.vmem [shape: f32[2,1,384], index: 5, kind: input, shape index: {}]
  %s6 = inlined_call_operand.hbm [shape: bf16[2,128,128], index: 6, kind: input, shape index: {}]
  %s7 = inlined_call_operand.vmem [shape: f32[2,1,128], index: 7, kind: input, shape index: {}]
  %s8 = inlined_call_operand.vmem [shape: f32[2,1,128], index: 8, kind: input, shape index: {}]
  %s9 = inlined_call_operand.vmem [shape: f32[2,1,128], index: 9, kind: input, shape index: {}]
  %s10 = inlined_call_operand.vmem [shape: bf16[2,128,256], index: 10, kind: input, shape index: {}]
  %s11 = inlined_call_operand.vmem [shape: f32[2,1,256], index: 11, kind: input, shape index: {}]
  %s12 = inlined_call_operand.hbm [shape: bf16[2,256,128], index: 12, kind: input, shape index: {}]
  %s13 = inlined_call_operand.vmem [shape: f32[2,1,128], index: 13, kind: input, shape index: {}]
  %s14 = inlined_call_operand.hbm [shape: f32[2,1,128], index: 14, kind: input, shape index: {}]
  %s15 = inlined_call_operand.hbm [shape: f32[2,1,128], index: 15, kind: input, shape index: {}]
  %s16 = inlined_call_operand.vmem [shape: bf16[128,128], index: 16, kind: input, shape index: {}]
  %s17 = inlined_call_operand.hbm [shape: f32[1,128], index: 17, kind: input, shape index: {}]
  %s18 = inlined_call_operand.vmem [shape: bf16[128,2], index: 18, kind: input, shape index: {}]
  %s19 = inlined_call_operand.hbm [shape: f32[1,2], index: 19, kind: input, shape index: {}]
  %s20 = inlined_call_operand.hbm [shape: f32[2,2], index: 20, kind: output, shape index: {}]
  %s21 = sld [smem:[#allocation0]]
  $region157: #{clf_model_forward.1} parent=0
    _
  %s23 = ssub.s32 1, %s21
  %s24 = scalar_select 0, %s23, %s21
  $region1: #{clf_model_forward.1} parent=0
    #allocation3 [shape = 'u8[512]{0}', space=vmem, size = 0x400, scoped, tag = 'input window, operand 2, single buffered']
    #allocation4 [shape = 's32[2]{0}', space=sflag, size = 0x8, scoped, tag = 'scoped memory for clf_model_forward.1']
    #allocation5 [shape = 's32[2]{0}', space=sflag, size = 0x8, scoped, tag = 'scoped memory for clf_model_forward.1']
    #allocation6 [shape = 'u8[512]{0}', space=vmem, size = 0x400, scoped, tag = 'input window, operand 3, single buffered']
    #allocation7 [shape = 's32[1]{0}', space=sflag, size = 0x4, scoped, tag = 'scoped memory for clf_model_forward.1']
    #allocation8 [shape = 'u8[196608]{0}', space=vmem, size = 0x30000, scoped, tag = 'input window, operand 4']
    #allocation9 [shape = 'u8[65536]{0}', space=vmem, size = 0x10000, scoped, tag = 'input window, operand 6']
    #allocation10 [shape = 'u8[131072]{0}', space=vmem, size = 0x20000, scoped, tag = 'input window, operand 12']
    #allocation11 [shape = 'u8[1024]{0}', space=vmem, size = 0x400, scoped, tag = 'input window, operand 14']
    #allocation12 [shape = 'u8[1024]{0}', space=vmem, size = 0x400, scoped, tag = 'input window, operand 15']
    #allocation13 [shape = 'u8[512]{0}', space=vmem, size = 0x400, scoped, tag = 'input window, operand 17, single buffered']
    #allocation14 [shape = 'u8[512]{0}', space=vmem, size = 0x400, scoped, tag = 'input window, operand 19, single buffered']
    #allocation15 [shape = 's32[1]{0}', space=sflag, size = 0x4, scoped, tag = 'scoped memory for clf_model_forward.1']
    #allocation16 [shape = 'u8[1024]{0}', space=vmem, size = 0x400, scoped, tag = 'output window, operand 0, single buffered']
    %25 = vsyncpa [#allocation4], 0
    %26 = vsyncpa [#allocation7], 0
    %27 = vsyncpa [#allocation15], 0
    %28 = vsyncpa [#allocation5], 0
    loop: start=0, step=1, limit=4
    $region2: #{clf_model_forward.1} parent=1 // loop_pre_header
      _
    $region3: #{clf_model_forward.1} parent=1 // loop_header
      %s30 = sphi 0, %s34
      %p31 = scmp.ge.s32.totalorder %s30, 4
      %s38 = sphi 0, %s38
      %s40 = sphi 0, %s38
      %s41 = sphi 0, %s40
      %s55 = sphi 0, %s41
      %s59 = sphi 0, %s59
      %s61 = sphi 0, %s59
      %s62 = sphi 0, %s61
      %s76 = sphi 0, %s62
      %s80 = sphi 0, %s80
      %s82 = sphi 0, %s80
      %s83 = sphi 0, %s82
      %s97 = sphi 0, %s83
      %s101 = sphi 0, %s101
      %s103 = sphi 0, %s101
      %s104 = sphi 0, %s103
      %s118 = sphi 0, %s104
      %s124 = sphi 0, %s126
      %s127 = sphi 0, %s124
      %s128 = sphi 0, %s127
      %s144 = sphi 0, %s128
      %s150 = sphi 0, %s152
      %s153 = sphi 0, %s150
      %s154 = sphi 0, %s153
      %s170 = sphi 0, %s154
      %s176 = sphi 0, %s178
      %s179 = sphi 0, %s176
      %s180 = sphi 0, %s179
      %s196 = sphi 0, %s180
      %s202 = sphi 0, %s204
      %s205 = sphi 0, %s202
      %s206 = sphi 0, %s205
      %s222 = sphi 0, %s206
      %s228 = sphi 0, %s230
      %s231 = sphi 0, %s228
      %s232 = sphi 0, %s231
      %s248 = sphi 0, %s232
      %s254 = sphi 0, %s256
      %s257 = sphi 0, %s254
      %s258 = sphi 0, %s257
      %s274 = sphi 0, %s258
      %s280 = sphi 0, %s282
      %s283 = sphi 0, %s280
      %s284 = sphi 0, %s283
      %s300 = sphi 0, %s284
      %s306 = sphi 0, %s308
      %s309 = sphi 0, %s306
      %s310 = sphi 0, %s309
      %s326 = sphi 0, %s310
      %s332 = sphi 0, %s334
      %s335 = sphi 0, %s332
      %s336 = sphi 0, %s335
      %s352 = sphi 0, %s336
      %s358 = sphi 0, %s360
      %s361 = sphi 0, %s358
      %s362 = sphi 0, %s361
      %s378 = sphi 0, %s362
      %s384 = sphi 0, %s386
      %s387 = sphi 0, %s384
      %s388 = sphi 0, %s387
      %s404 = sphi 0, %s388
      %s410 = sphi 0, %s412
      %s413 = sphi 0, %s410
      %s414 = sphi 0, %s413
      %s430 = sphi 0, %s414
      %s434 = sphi 0, %s434
      %s436 = sphi 0, %s434
      %s437 = sphi 0, %s436
      %s451 = sphi 0, %s437
      %s455 = sphi 0, %s455
      %s457 = sphi 0, %s455
      %s458 = sphi 0, %s457
      %s472 = sphi 0, %s458
      %s476 = sphi 0, %s476
      %s478 = sphi 0, %s476
      %s479 = sphi 0, %s478
      %s493 = sphi 0, %s479
      %s497 = sphi 0, %s497
      %s499 = sphi 0, %s497
      %s500 = sphi 0, %s499
      %s514 = sphi 0, %s500
      %s518 = sphi 0, %s518
      %s520 = sphi 0, %s518
      %s521 = sphi 0, %s520
      %s535 = sphi 0, %s521
    $region4: #{clf_model_forward.1} parent=1 // loop_header_branch
      %33 = sbr.rel (%p31) target = $region8
    $region5: #{clf_model_forward.1} parent=1 // loop_body
      %s35 = ssub.s32 %s30, 1
      %s36 = ssub.s32 %s30, 2
      %s37 = sadd.s32 %s30, 1
      %s39 = sadd.s32 %s38, 1
      %p42 = scmp.eq.s32.totalorder %s30, 1
      %p43 = scmp.ne.s32.totalorder %s38, %s40
      %p44 = scmp.eq.s32.totalorder %s30, 0
      %p45 = por %p43, %p44
      %p46 = scmp.ne.s32.totalorder %s38, %s40
      %p47 = scmp.eq.s32.totalorder %s35, 1
      %p48 = por %p46, %p47
      %p49 = scmp.ne.s32.totalorder %s40, %s41
      %p50 = scmp.eq.s32.totalorder %s35, 0
      %p51 = por %p49, %p50
      %p52 = scmp.ne.s32.totalorder %s40, %s41
      %p53 = scmp.eq.s32.totalorder %s36, 1
      %p54 = por %p52, %p53
      %p56 = scmp.ne.s32.totalorder %s41, %s55
      %p57 = scmp.eq.s32.totalorder %s36, 0
      %p58 = por %p56, %p57
      %s60 = sadd.s32 %s59, 1
      %p63 = scmp.eq.s32.totalorder %s30, 1
      %p64 = scmp.ne.s32.totalorder %s59, %s61
      %p65 = scmp.eq.s32.totalorder %s30, 0
      %p66 = por %p64, %p65
      %p67 = scmp.ne.s32.totalorder %s59, %s61
      %p68 = scmp.eq.s32.totalorder %s35, 1
      %p69 = por %p67, %p68
      %p70 = scmp.ne.s32.totalorder %s61, %s62
      %p71 = scmp.eq.s32.totalorder %s35, 0
      %p72 = por %p70, %p71
      %p73 = scmp.ne.s32.totalorder %s61, %s62
      %p74 = scmp.eq.s32.totalorder %s36, 1
      %p75 = por %p73, %p74
      %p77 = scmp.ne.s32.totalorder %s62, %s76
      %p78 = scmp.eq.s32.totalorder %s36, 0
      %p79 = por %p77, %p78
      %s81 = sadd.s32 %s80, 1
      %p84 = scmp.eq.s32.totalorder %s30, 1
      %p85 = scmp.ne.s32.totalorder %s80, %s82
      %p86 = scmp.eq.s32.totalorder %s30, 0
      %p87 = por %p85, %p86
      %p88 = scmp.ne.s32.totalorder %s80, %s82
      %p89 = scmp.eq.s32.totalorder %s35, 1
      %p90 = por %p88, %p89
      %p91 = scmp.ne.s32.totalorder %s82, %s83
      %p92 = scmp.eq.s32.totalorder %s35, 0
      %p93 = por %p91, %p92
      %p94 = scmp.ne.s32.totalorder %s82, %s83
      %p95 = scmp.eq.s32.totalorder %s36, 1
      %p96 = por %p94, %p95
      %p98 = scmp.ne.s32.totalorder %s83, %s97
      %p99 = scmp.eq.s32.totalorder %s36, 0
      %p100 = por %p98, %p99
      %s102 = sadd.s32 %s101, 1
      %p105 = scmp.eq.s32.totalorder %s30, 1
      %p106 = scmp.ne.s32.totalorder %s101, %s103
      %p107 = scmp.eq.s32.totalorder %s30, 0
      %p108 = por %p106, %p107
      %p109 = scmp.ne.s32.totalorder %s101, %s103
      %p110 = scmp.eq.s32.totalorder %s35, 1
      %p111 = por %p109, %p110
      %p112 = scmp.ne.s32.totalorder %s103, %s104
      %p113 = scmp.eq.s32.totalorder %s35, 0
      %p114 = por %p112, %p113
      %p115 = scmp.ne.s32.totalorder %s103, %s104
      %p116 = scmp.eq.s32.totalorder %s36, 1
      %p117 = por %p115, %p116
      %p119 = scmp.ne.s32.totalorder %s104, %s118
      %p120 = scmp.eq.s32.totalorder %s36, 0
      %p121 = por %p119, %p120
      %s122 = ssub.s32 %s30, %s37
      %p123 = scmp.eq.s32.totalorder %s122, 0
      %s125 = sadd.s32 %s124, 1
      %s126 = scalar_select %p123, %s124, %s125
      %p129 = pneg %p123
      %p130 = scmp.eq.s32.totalorder %s30, 1
      %p131 = por %p129, %p130
      %p132 = scmp.ne.s32.totalorder %s124, %s127
      %p133 = scmp.eq.s32.totalorder %s30, 0
      %p134 = por %p132, %p133
      %p135 = scmp.ne.s32.totalorder %s124, %s127
      %p136 = scmp.eq.s32.totalorder %s35, 1
      %p137 = por %p135, %p136
      %p138 = scmp.ne.s32.totalorder %s127, %s128
      %p139 = scmp.eq.s32.totalorder %s35, 0
      %p140 = por %p138, %p139
      %p141 = scmp.ne.s32.totalorder %s127, %s128
      %p142 = scmp.eq.s32.totalorder %s36, 1
      %p143 = por %p141, %p142
      %p145 = scmp.ne.s32.totalorder %s128, %s144
      %p146 = scmp.eq.s32.totalorder %s36, 0
      %p147 = por %p145, %p146
      %s148 = ssub.s32 %s30, %s37
      %p149 = scmp.eq.s32.totalorder %s148, 0
      %s151 = sadd.s32 %s150, 1
      %s152 = scalar_select %p149, %s150, %s151
      %p155 = pneg %p149
      %p156 = scmp.eq.s32.totalorder %s30, 1
      %p157 = por %p155, %p156
      %p158 = scmp.ne.s32.totalorder %s150, %s153
      %p159 = scmp.eq.s32.totalorder %s30, 0
      %p160 = por %p158, %p159
      %p161 = scmp.ne.s32.totalorder %s150, %s153
      %p162 = scmp.eq.s32.totalorder %s35, 1
      %p163 = por %p161, %p162
      %p164 = scmp.ne.s32.totalorder %s153, %s154
      %p165 = scmp.eq.s32.totalorder %s35, 0
      %p166 = por %p164, %p165
      %p167 = scmp.ne.s32.totalorder %s153, %s154
      %p168 = scmp.eq.s32.totalorder %s36, 1
      %p169 = por %p167, %p168
      %p171 = scmp.ne.s32.totalorder %s154, %s170
      %p172 = scmp.eq.s32.totalorder %s36, 0
      %p173 = por %p171, %p172
      %s174 = ssub.s32 %s30, %s37
      %p175 = scmp.eq.s32.totalorder %s174, 0
      %s177 = sadd.s32 %s176, 1
      %s178 = scalar_select %p175, %s176, %s177
      %p181 = pneg %p175
      %p182 = scmp.eq.s32.totalorder %s30, 1
      %p183 = por %p181, %p182
      %p184 = scmp.ne.s32.totalorder %s176, %s179
      %p185 = scmp.eq.s32.totalorder %s30, 0
      %p186 = por %p184, %p185
      %p187 = scmp.ne.s32.totalorder %s176, %s179
      %p188 = scmp.eq.s32.totalorder %s35, 1
      %p189 = por %p187, %p188
      %p190 = scmp.ne.s32.totalorder %s179, %s180
      %p191 = scmp.eq.s32.totalorder %s35, 0
      %p192 = por %p190, %p191
      %p193 = scmp.ne.s32.totalorder %s179, %s180
      %p194 = scmp.eq.s32.totalorder %s36, 1
      %p195 = por %p193, %p194
      %p197 = scmp.ne.s32.totalorder %s180, %s196
      %p198 = scmp.eq.s32.totalorder %s36, 0
      %p199 = por %p197, %p198
      %s200 = ssub.s32 %s30, %s37
      %p201 = scmp.eq.s32.totalorder %s200, 0
      %s203 = sadd.s32 %s202, 1
      %s204 = scalar_select %p201, %s202, %s203
      %p207 = pneg %p201
      %p208 = scmp.eq.s32.totalorder %s30, 1
      %p209 = por %p207, %p208
      %p210 = scmp.ne.s32.totalorder %s202, %s205
      %p211 = scmp.eq.s32.totalorder %s30, 0
      %p212 = por %p210, %p211
      %p213 = scmp.ne.s32.totalorder %s202, %s205
      %p214 = scmp.eq.s32.totalorder %s35, 1
      %p215 = por %p213, %p214
      %p216 = scmp.ne.s32.totalorder %s205, %s206
      %p217 = scmp.eq.s32.totalorder %s35, 0
      %p218 = por %p216, %p217
      %p219 = scmp.ne.s32.totalorder %s205, %s206
      %p220 = scmp.eq.s32.totalorder %s36, 1
      %p221 = por %p219, %p220
      %p223 = scmp.ne.s32.totalorder %s206, %s222
      %p224 = scmp.eq.s32.totalorder %s36, 0
      %p225 = por %p223, %p224
      %s226 = ssub.s32 %s30, %s37
      %p227 = scmp.eq.s32.totalorder %s226, 0
      %s229 = sadd.s32 %s228, 1
      %s230 = scalar_select %p227, %s228, %s229
      %p233 = pneg %p227
      %p234 = scmp.eq.s32.totalorder %s30, 1
      %p235 = por %p233, %p234
      %p236 = scmp.ne.s32.totalorder %s228, %s231
      %p237 = scmp.eq.s32.totalorder %s30, 0
      %p238 = por %p236, %p237
      %p239 = scmp.ne.s32.totalorder %s228, %s231
      %p240 = scmp.eq.s32.totalorder %s35, 1
      %p241 = por %p239, %p240
      %p242 = scmp.ne.s32.totalorder %s231, %s232
      %p243 = scmp.eq.s32.totalorder %s35, 0
      %p244 = por %p242, %p243
      %p245 = scmp.ne.s32.totalorder %s231, %s232
      %p246 = scmp.eq.s32.totalorder %s36, 1
      %p247 = por %p245, %p246
      %p249 = scmp.ne.s32.totalorder %s232, %s248
      %p250 = scmp.eq.s32.totalorder %s36, 0
      %p251 = por %p249, %p250
      %s252 = ssub.s32 %s30, %s37
      %p253 = scmp.eq.s32.totalorder %s252, 0
      %s255 = sadd.s32 %s254, 1
      %s256 = scalar_select %p253, %s254, %s255
      %p259 = pneg %p253
      %p260 = scmp.eq.s32.totalorder %s30, 1
      %p261 = por %p259, %p260
      %p262 = scmp.ne.s32.totalorder %s254, %s257
      %p263 = scmp.eq.s32.totalorder %s30, 0
      %p264 = por %p262, %p263
      %p265 = scmp.ne.s32.totalorder %s254, %s257
      %p266 = scmp.eq.s32.totalorder %s35, 1
      %p267 = por %p265, %p266
      %p268 = scmp.ne.s32.totalorder %s257, %s258
      %p269 = scmp.eq.s32.totalorder %s35, 0
      %p270 = por %p268, %p269
      %p271 = scmp.ne.s32.totalorder %s257, %s258
      %p272 = scmp.eq.s32.totalorder %s36, 1
      %p273 = por %p271, %p272
      %p275 = scmp.ne.s32.totalorder %s258, %s274
      %p276 = scmp.eq.s32.totalorder %s36, 0
      %p277 = por %p275, %p276
      %s278 = ssub.s32 %s30, %s37
      %p279 = scmp.eq.s32.totalorder %s278, 0
      %s281 = sadd.s32 %s280, 1
      %s282 = scalar_select %p279, %s280, %s281
      %p285 = pneg %p279
      %p286 = scmp.eq.s32.totalorder %s30, 1
      %p287 = por %p285, %p286
      %p288 = scmp.ne.s32.totalorder %s280, %s283
      %p289 = scmp.eq.s32.totalorder %s30, 0
      %p290 = por %p288, %p289
      %p291 = scmp.ne.s32.totalorder %s280, %s283
      %p292 = scmp.eq.s32.totalorder %s35, 1
      %p293 = por %p291, %p292
      %p294 = scmp.ne.s32.totalorder %s283, %s284
      %p295 = scmp.eq.s32.totalorder %s35, 0
      %p296 = por %p294, %p295
      %p297 = scmp.ne.s32.totalorder %s283, %s284
      %p298 = scmp.eq.s32.totalorder %s36, 1
      %p299 = por %p297, %p298
      %p301 = scmp.ne.s32.totalorder %s284, %s300
      %p302 = scmp.eq.s32.totalorder %s36, 0
      %p303 = por %p301, %p302
      %s304 = ssub.s32 %s30, %s37
      %p305 = scmp.eq.s32.totalorder %s304, 0
      %s307 = sadd.s32 %s306, 1
      %s308 = scalar_select %p305, %s306, %s307
      %p311 = pneg %p305
      %p312 = scmp.eq.s32.totalorder %s30, 1
      %p313 = por %p311, %p312
      %p314 = scmp.ne.s32.totalorder %s306, %s309
      %p315 = scmp.eq.s32.totalorder %s30, 0
      %p316 = por %p314, %p315
      %p317 = scmp.ne.s32.totalorder %s306, %s309
      %p318 = scmp.eq.s32.totalorder %s35, 1
      %p319 = por %p317, %p318
      %p320 = scmp.ne.s32.totalorder %s309, %s310
      %p321 = scmp.eq.s32.totalorder %s35, 0
      %p322 = por %p320, %p321
      %p323 = scmp.ne.s32.totalorder %s309, %s310
      %p324 = scmp.eq.s32.totalorder %s36, 1
      %p325 = por %p323, %p324
      %p327 = scmp.ne.s32.totalorder %s310, %s326
      %p328 = scmp.eq.s32.totalorder %s36, 0
      %p329 = por %p327, %p328
      %s330 = ssub.s32 %s30, %s37
      %p331 = scmp.eq.s32.totalorder %s330, 0
      %s333 = sadd.s32 %s332, 1
      %s334 = scalar_select %p331, %s332, %s333
      %p337 = pneg %p331
      %p338 = scmp.eq.s32.totalorder %s30, 1
      %p339 = por %p337, %p338
      %p340 = scmp.ne.s32.totalorder %s332, %s335
      %p341 = scmp.eq.s32.totalorder %s30, 0
      %p342 = por %p340, %p341
      %p343 = scmp.ne.s32.totalorder %s332, %s335
      %p344 = scmp.eq.s32.totalorder %s35, 1
      %p345 = por %p343, %p344
      %p346 = scmp.ne.s32.totalorder %s335, %s336
      %p347 = scmp.eq.s32.totalorder %s35, 0
      %p348 = por %p346, %p347
      %p349 = scmp.ne.s32.totalorder %s335, %s336
      %p350 = scmp.eq.s32.totalorder %s36, 1
      %p351 = por %p349, %p350
      %p353 = scmp.ne.s32.totalorder %s336, %s352
      %p354 = scmp.eq.s32.totalorder %s36, 0
      %p355 = por %p353, %p354
      %s356 = ssub.s32 %s30, %s37
      %p357 = scmp.eq.s32.totalorder %s356, 0
      %s359 = sadd.s32 %s358, 1
      %s360 = scalar_select %p357, %s358, %s359
      %p363 = pneg %p357
      %p364 = scmp.eq.s32.totalorder %s30, 1
      %p365 = por %p363, %p364
      %p366 = scmp.ne.s32.totalorder %s358, %s361
      %p367 = scmp.eq.s32.totalorder %s30, 0
      %p368 = por %p366, %p367
      %p369 = scmp.ne.s32.totalorder %s358, %s361
      %p370 = scmp.eq.s32.totalorder %s35, 1
      %p371 = por %p369, %p370
      %p372 = scmp.ne.s32.totalorder %s361, %s362
      %p373 = scmp.eq.s32.totalorder %s35, 0
      %p374 = por %p372, %p373
      %p375 = scmp.ne.s32.totalorder %s361, %s362
      %p376 = scmp.eq.s32.totalorder %s36, 1
      %p377 = por %p375, %p376
      %p379 = scmp.ne.s32.totalorder %s362, %s378
      %p380 = scmp.eq.s32.totalorder %s36, 0
      %p381 = por %p379, %p380
      %s382 = ssub.s32 %s30, %s37
      %p383 = scmp.eq.s32.totalorder %s382, 0
      %s385 = sadd.s32 %s384, 1
      %s386 = scalar_select %p383, %s384, %s385
      %p389 = pneg %p383
      %p390 = scmp.eq.s32.totalorder %s30, 1
      %p391 = por %p389, %p390
      %p392 = scmp.ne.s32.totalorder %s384, %s387
      %p393 = scmp.eq.s32.totalorder %s30, 0
      %p394 = por %p392, %p393
      %p395 = scmp.ne.s32.totalorder %s384, %s387
      %p396 = scmp.eq.s32.totalorder %s35, 1
      %p397 = por %p395, %p396
      %p398 = scmp.ne.s32.totalorder %s387, %s388
      %p399 = scmp.eq.s32.totalorder %s35, 0
      %p400 = por %p398, %p399
      %p401 = scmp.ne.s32.totalorder %s387, %s388
      %p402 = scmp.eq.s32.totalorder %s36, 1
      %p403 = por %p401, %p402
      %p405 = scmp.ne.s32.totalorder %s388, %s404
      %p406 = scmp.eq.s32.totalorder %s36, 0
      %p407 = por %p405, %p406
      %s408 = ssub.s32 %s30, %s37
      %p409 = scmp.eq.s32.totalorder %s408, 0
      %s411 = sadd.s32 %s410, 1
      %s412 = scalar_select %p409, %s410, %s411
      %p415 = pneg %p409
      %p416 = scmp.eq.s32.totalorder %s30, 1
      %p417 = por %p415, %p416
      %p418 = scmp.ne.s32.totalorder %s410, %s413
      %p419 = scmp.eq.s32.totalorder %s30, 0
      %p420 = por %p418, %p419
      %p421 = scmp.ne.s32.totalorder %s410, %s413
      %p422 = scmp.eq.s32.totalorder %s35, 1
      %p423 = por %p421, %p422
      %p424 = scmp.ne.s32.totalorder %s413, %s414
      %p425 = scmp.eq.s32.totalorder %s35, 0
      %p426 = por %p424, %p425
      %p427 = scmp.ne.s32.totalorder %s413, %s414
      %p428 = scmp.eq.s32.totalorder %s36, 1
      %p429 = por %p427, %p428
      %p431 = scmp.ne.s32.totalorder %s414, %s430
      %p432 = scmp.eq.s32.totalorder %s36, 0
      %p433 = por %p431, %p432
      %s435 = sadd.s32 %s434, 1
      %p438 = scmp.eq.s32.totalorder %s30, 1
      %p439 = scmp.ne.s32.totalorder %s434, %s436
      %p440 = scmp.eq.s32.totalorder %s30, 0
      %p441 = por %p439, %p440
      %p442 = scmp.ne.s32.totalorder %s434, %s436
      %p443 = scmp.eq.s32.totalorder %s35, 1
      %p444 = por %p442, %p443
      %p445 = scmp.ne.s32.totalorder %s436, %s437
      %p446 = scmp.eq.s32.totalorder %s35, 0
      %p447 = por %p445, %p446
      %p448 = scmp.ne.s32.totalorder %s436, %s437
      %p449 = scmp.eq.s32.totalorder %s36, 1
      %p450 = por %p448, %p449
      %p452 = scmp.ne.s32.totalorder %s437, %s451
      %p453 = scmp.eq.s32.totalorder %s36, 0
      %p454 = por %p452, %p453
      %s456 = sadd.s32 %s455, 1
      %p459 = scmp.eq.s32.totalorder %s30, 1
      %p460 = scmp.ne.s32.totalorder %s455, %s457
      %p461 = scmp.eq.s32.totalorder %s30, 0
      %p462 = por %p460, %p461
      %p463 = scmp.ne.s32.totalorder %s455, %s457
      %p464 = scmp.eq.s32.totalorder %s35, 1
      %p465 = por %p463, %p464
      %p466 = scmp.ne.s32.totalorder %s457, %s458
      %p467 = scmp.eq.s32.totalorder %s35, 0
      %p468 = por %p466, %p467
      %p469 = scmp.ne.s32.totalorder %s457, %s458
      %p470 = scmp.eq.s32.totalorder %s36, 1
      %p471 = por %p469, %p470
      %p473 = scmp.ne.s32.totalorder %s458, %s472
      %p474 = scmp.eq.s32.totalorder %s36, 0
      %p475 = por %p473, %p474
      %s477 = sadd.s32 %s476, 1
      %p480 = scmp.eq.s32.totalorder %s30, 1
      %p481 = scmp.ne.s32.totalorder %s476, %s478
      %p482 = scmp.eq.s32.totalorder %s30, 0
      %p483 = por %p481, %p482
      %p484 = scmp.ne.s32.totalorder %s476, %s478
      %p485 = scmp.eq.s32.totalorder %s35, 1
      %p486 = por %p484, %p485
      %p487 = scmp.ne.s32.totalorder %s478, %s479
      %p488 = scmp.eq.s32.totalorder %s35, 0
      %p489 = por %p487, %p488
      %p490 = scmp.ne.s32.totalorder %s478, %s479
      %p491 = scmp.eq.s32.totalorder %s36, 1
      %p492 = por %p490, %p491
      %p494 = scmp.ne.s32.totalorder %s479, %s493
      %p495 = scmp.eq.s32.totalorder %s36, 0
      %p496 = por %p494, %p495
      %s498 = sadd.s32 %s497, 1
      %p501 = scmp.eq.s32.totalorder %s30, 1
      %p502 = scmp.ne.s32.totalorder %s497, %s499
      %p503 = scmp.eq.s32.totalorder %s30, 0
      %p504 = por %p502, %p503
      %p505 = scmp.ne.s32.totalorder %s497, %s499
      %p506 = scmp.eq.s32.totalorder %s35, 1
      %p507 = por %p505, %p506
      %p508 = scmp.ne.s32.totalorder %s499, %s500
      %p509 = scmp.eq.s32.totalorder %s35, 0
      %p510 = por %p508, %p509
      %p511 = scmp.ne.s32.totalorder %s499, %s500
      %p512 = scmp.eq.s32.totalorder %s36, 1
      %p513 = por %p511, %p512
      %p515 = scmp.ne.s32.totalorder %s500, %s514
      %p516 = scmp.eq.s32.totalorder %s36, 0
      %p517 = por %p515, %p516
      %s519 = sadd.s32 %s518, 1
      %p522 = scmp.eq.s32.totalorder %s30, 1
      %p523 = scmp.ne.s32.totalorder %s518, %s520
      %p524 = scmp.eq.s32.totalorder %s30, 0
      %p525 = por %p523, %p524
      %p526 = scmp.ne.s32.totalorder %s518, %s520
      %p527 = scmp.eq.s32.totalorder %s35, 1
      %p528 = por %p526, %p527
      %p529 = scmp.ne.s32.totalorder %s520, %s521
      %p530 = scmp.eq.s32.totalorder %s35, 0
      %p531 = por %p529, %p530
      %p532 = scmp.ne.s32.totalorder %s520, %s521
      %p533 = scmp.eq.s32.totalorder %s36, 1
      %p534 = por %p532, %p533
      %p536 = scmp.ne.s32.totalorder %s521, %s535
      %p537 = scmp.eq.s32.totalorder %s36, 0
      %p538 = por %p536, %p537
      %p539 = scmp.le.s32.totalorder 1, %s30
      %p540 = scmp.lt.s32.totalorder %s30, 3
      %p541 = pnand %p539, %p540
      %p542 = pneg %p541
      // Predicated region
      $region9: #{clf_model_forward.1} parent=5 // pred_check
        _
      $region10: #{clf_model_forward.1} parent=5 // pred_check_branch
        %544 = sbr.rel (%p541) target = $region12
      $region11: #{clf_model_forward.1} parent=5 // pred_region
        %s545 = ssub.s32 %s30, 1
        // Predicated region
        $region13: #{clf_model_forward.1} parent=11 // pred_check
          %p546 = pneg %p51
        $region14: #{clf_model_forward.1} parent=11 // pred_check_branch
          %548 = sbr.rel (%p546) target = $region16
        $region15: #{clf_model_forward.1} parent=11 // pred_region
          _
        $region16: #{clf_model_forward.1} parent=11 // pred_fallthru
          _
        // Predicated region
        $region17: #{clf_model_forward.1} parent=11 // pred_check
          %p549 = pneg %p72
        $region18: #{clf_model_forward.1} parent=11 // pred_check_branch
          %551 = sbr.rel (%p549) target = $region20
        $region19: #{clf_model_forward.1} parent=11 // pred_region
          _
        $region20: #{clf_model_forward.1} parent=11 // pred_fallthru
          _
        // Predicated region
        $region21: #{clf_model_forward.1} parent=11 // pred_check
          %p552 = pneg %p93
        $region22: #{clf_model_forward.1} parent=11 // pred_check_branch
          %554 = sbr.rel (%p552) target = $region24
        $region23: #{clf_model_forward.1} parent=11 // pred_region
          %s556 = ssub.s32 16, 16
          %557 = vsyncadd [#allocation4], %s556
          %s559 = sshll.u32 [#allocation3], 4
          %s560 = int_to_ptr.vmem [resolvable:$true] %s559
          %562 = dma.hbm_to_vmem [thread:$0]  %s2, 16, %s560, [#allocation4]
        $region24: #{clf_model_forward.1} parent=11 // pred_fallthru
          _
        // Predicated region
        $region25: #{clf_model_forward.1} parent=11 // pred_check
          %p563 = pneg %p114
        $region26: #{clf_model_forward.1} parent=11 // pred_check_branch
          %565 = sbr.rel (%p563) target = $region28
        $region27: #{clf_model_forward.1} parent=11 // pred_region
          %s567 = ssub.s32 16, 16
          %568 = vsyncadd [#allocation7], %s567
          %s570 = sshll.u32 [#allocation6], 4
          %s571 = int_to_ptr.vmem [resolvable:$true] %s570
          %573 = dma.hbm_to_vmem [thread:$0]  %s3, 16, %s571, [#allocation7]
        $region28: #{clf_model_forward.1} parent=11 // pred_fallthru
          _
        // Predicated region
        $region29: #{clf_model_forward.1} parent=11 // pred_check
          %p574 = pneg %p447
        $region30: #{clf_model_forward.1} parent=11 // pred_check_branch
          %576 = sbr.rel (%p574) target = $region32
        $region31: #{clf_model_forward.1} parent=11 // pred_region
          _
        $region32: #{clf_model_forward.1} parent=11 // pred_fallthru
          _
        // Predicated region
        $region33: #{clf_model_forward.1} parent=11 // pred_check
          %p577 = pneg %p468
        $region34: #{clf_model_forward.1} parent=11 // pred_check_branch
          %579 = sbr.rel (%p577) target = $region36
        $region35: #{clf_model_forward.1} parent=11 // pred_region
          %s581 = ssub.s32 16, 16
          %582 = vsyncadd [#allocation7], %s581
          %s584 = sshll.u32 [#allocation13], 4
          %s585 = int_to_ptr.vmem [resolvable:$true] %s584
          %587 = dma.hbm_to_vmem [thread:$0]  %s17, 16, %s585, [#allocation7]
        $region36: #{clf_model_forward.1} parent=11 // pred_fallthru
          _
        // Predicated region
        $region37: #{clf_model_forward.1} parent=11 // pred_check
          %p588 = pneg %p489
        $region38: #{clf_model_forward.1} parent=11 // pred_check_branch
          %590 = sbr.rel (%p588) target = $region40
        $region39: #{clf_model_forward.1} parent=11 // pred_region
          _
        $region40: #{clf_model_forward.1} parent=11 // pred_fallthru
          _
        // Predicated region
        $region41: #{clf_model_forward.1} parent=11 // pred_check
          %p591 = pneg %p510
        $region42: #{clf_model_forward.1} parent=11 // pred_check_branch
          %593 = sbr.rel (%p591) target = $region44
        $region43: #{clf_model_forward.1} parent=11 // pred_region
          %s595 = ssub.s32 16, 16
          %596 = vsyncadd [#allocation15], %s595
          %s598 = sshll.u32 [#allocation14], 4
          %s599 = int_to_ptr.vmem [resolvable:$true] %s598
          %601 = dma.hbm_to_vmem [thread:$0]  %s19, 16, %s599, [#allocation15]
        $region44: #{clf_model_forward.1} parent=11 // pred_fallthru
          _
      $region12: #{clf_model_forward.1} parent=5 // pred_fallthru
        _
      %p602 = scmp.lt.s32.totalorder %s30, 2
      // Predicated region
      $region45: #{clf_model_forward.1} parent=5 // pred_check
        %p603 = pneg %p602
      $region46: #{clf_model_forward.1} parent=5 // pred_check_branch
        %605 = sbr.rel (%p603) target = $region48
      $region47: #{clf_model_forward.1} parent=5 // pred_region
        // Predicated region
        $region49: #{clf_model_forward.1} parent=47 // pred_check
          %p606 = pneg %p134
        $region50: #{clf_model_forward.1} parent=47 // pred_check_branch
          %608 = sbr.rel (%p606) target = $region52
        $region51: #{clf_model_forward.1} parent=47 // pred_region
          %s609 = sand.u32 %s30, 1
          %s610 = scalar_lea.sflag [#allocation4], %s609
          %s611 = sand.u32 %s124, 1
          %s612 = smul.addr %s611, 192
          %s613 = scalar_lea.vmem [#allocation8], %s612
          %s615 = ssub.s32 3072, 3072
          %616 = vsyncadd %s610, %s615
          %s617 = smul.addr %s30, 48
          %s618 = smul.addr %s617, 64
          %s619 = scalar_lea.hbm %s4, %s618
          %s620 = sshll.u32 %s613, 4
          %s621 = int_to_ptr.vmem [resolvable:$true] %s620
          %626 = dma.hbm_to_vmem [thread:$0]  %s619, 3072, %s621, %s610, 192, 192, 12
        $region52: #{clf_model_forward.1} parent=47 // pred_fallthru
          _
        // Predicated region
        $region53: #{clf_model_forward.1} parent=47 // pred_check
          %p627 = pneg %p160
        $region54: #{clf_model_forward.1} parent=47 // pred_check_branch
          %629 = sbr.rel (%p627) target = $region56
        $region55: #{clf_model_forward.1} parent=47 // pred_region
          %p630 = scmp.lt.s32.totalorder %s30, 1
          %s631 = scalar_select %p630, %s30, 1
          %s632 = smul.addr %s631, 3
          %s633 = scalar_lea.vmem %s5, %s632
        $region56: #{clf_model_forward.1} parent=47 // pred_fallthru
          _
        // Predicated region
        $region57: #{clf_model_forward.1} parent=47 // pred_check
          %p634 = pneg %p186
        $region58: #{clf_model_forward.1} parent=47 // pred_check_branch
          %636 = sbr.rel (%p634) target = $region60
        $region59: #{clf_model_forward.1} parent=47 // pred_region
          %s637 = sand.u32 %s30, 1
          %s638 = scalar_lea.sflag [#allocation4], %s637
          %s639 = sand.u32 %s176, 1
          %s640 = smul.addr %s639, 64
          %s641 = scalar_lea.vmem [#allocation9], %s640
          %s643 = ssub.s32 1024, 1024
          %644 = vsyncadd %s638, %s643
          %s645 = smul.addr %s30, 16
          %s646 = smul.addr %s645, 64
          %s647 = scalar_lea.hbm %s6, %s646
          %s648 = sshll.u32 %s641, 4
          %s649 = int_to_ptr.vmem [resolvable:$true] %s648
          %654 = dma.hbm_to_vmem [thread:$0]  %s647, 1024, %s649, %s638, 64, 64, 4
        $region60: #{clf_model_forward.1} parent=47 // pred_fallthru
          _
        // Predicated region
        $region61: #{clf_model_forward.1} parent=47 // pred_check
          %p655 = pneg %p212
        $region62: #{clf_model_forward.1} parent=47 // pred_check_branch
          %657 = sbr.rel (%p655) target = $region64
        $region63: #{clf_model_forward.1} parent=47 // pred_region
          %p658 = scmp.lt.s32.totalorder %s30, 1
          %s659 = scalar_select %p658, %s30, 1
          %s660 = scalar_lea.vmem %s7, %s659
        $region64: #{clf_model_forward.1} parent=47 // pred_fallthru
          _
        // Predicated region
        $region65: #{clf_model_forward.1} parent=47 // pred_check
          %p661 = pneg %p238
        $region66: #{clf_model_forward.1} parent=47 // pred_check_branch
          %663 = sbr.rel (%p661) target = $region68
        $region67: #{clf_model_forward.1} parent=47 // pred_region
          %p664 = scmp.lt.s32.totalorder %s30, 1
          %s665 = scalar_select %p664, %s30, 1
          %s666 = scalar_lea.vmem %s8, %s665
        $region68: #{clf_model_forward.1} parent=47 // pred_fallthru
          _
        // Predicated region
        $region69: #{clf_model_forward.1} parent=47 // pred_check
          %p667 = pneg %p264
        $region70: #{clf_model_forward.1} parent=47 // pred_check_branch
          %669 = sbr.rel (%p667) target = $region72
        $region71: #{clf_model_forward.1} parent=47 // pred_region
          %p670 = scmp.lt.s32.totalorder %s30, 1
          %s671 = scalar_select %p670, %s30, 1
          %s672 = scalar_lea.vmem %s9, %s671
        $region72: #{clf_model_forward.1} parent=47 // pred_fallthru
          _
        // Predicated region
        $region73: #{clf_model_forward.1} parent=47 // pred_check
          %p673 = pneg %p290
        $region74: #{clf_model_forward.1} parent=47 // pred_check_branch
          %675 = sbr.rel (%p673) target = $region76
        $region75: #{clf_model_forward.1} parent=47 // pred_region
          %p676 = scmp.lt.s32.totalorder %s30, 1
          %s677 = scalar_select %p676, %s30, 1
          %s678 = smul.addr %s677, 32
          %s679 = smul.addr %s678, 4
          %s680 = scalar_lea.vmem %s10, %s679
        $region76: #{clf_model_forward.1} parent=47 // pred_fallthru
          _
        // Predicated region
        $region77: #{clf_model_forward.1} parent=47 // pred_check
          %p681 = pneg %p316
        $region78: #{clf_model_forward.1} parent=47 // pred_check_branch
          %683 = sbr.rel (%p681) target = $region80
        $region79: #{clf_model_forward.1} parent=47 // pred_region
          %p684 = scmp.lt.s32.totalorder %s30, 1
          %s685 = scalar_select %p684, %s30, 1
          %s686 = smul.addr %s685, 2
          %s687 = scalar_lea.vmem %s11, %s686
        $region80: #{clf_model_forward.1} parent=47 // pred_fallthru
          _
        // Predicated region
        $region81: #{clf_model_forward.1} parent=47 // pred_check
          %p688 = pneg %p342
        $region82: #{clf_model_forward.1} parent=47 // pred_check_branch
          %690 = sbr.rel (%p688) target = $region84
        $region83: #{clf_model_forward.1} parent=47 // pred_region
          %s691 = sand.u32 %s30, 1
          %s692 = scalar_lea.sflag [#allocation4], %s691
          %s693 = sand.u32 %s332, 1
          %s694 = smul.addr %s693, 128
          %s695 = scalar_lea.vmem [#allocation10], %s694
          %s697 = ssub.s32 2048, 2048
          %698 = vsyncadd %s692, %s697
          %s699 = smul.addr %s30, 32
          %s700 = smul.addr %s699, 64
          %s701 = scalar_lea.hbm %s12, %s700
          %s702 = sshll.u32 %s695, 4
          %s703 = int_to_ptr.vmem [resolvable:$true] %s702
          %708 = dma.hbm_to_vmem [thread:$0]  %s701, 2048, %s703, %s692, 64, 64, 4
        $region84: #{clf_model_forward.1} parent=47 // pred_fallthru
          _
        // Predicated region
        $region85: #{clf_model_forward.1} parent=47 // pred_check
          %p709 = pneg %p368
        $region86: #{clf_model_forward.1} parent=47 // pred_check_branch
          %711 = sbr.rel (%p709) target = $region88
        $region87: #{clf_model_forward.1} parent=47 // pred_region
          %p712 = scmp.lt.s32.totalorder %s30, 1
          %s713 = scalar_select %p712, %s30, 1
          %s714 = scalar_lea.vmem %s13, %s713
        $region88: #{clf_model_forward.1} parent=47 // pred_fallthru
          _
        // Predicated region
        $region89: #{clf_model_forward.1} parent=47 // pred_check
          %p715 = pneg %p394
        $region90: #{clf_model_forward.1} parent=47 // pred_check_branch
          %717 = sbr.rel (%p715) target = $region92
        $region91: #{clf_model_forward.1} parent=47 // pred_region
          %s718 = sand.u32 %s30, 1
          %s719 = scalar_lea.sflag [#allocation4], %s718
          %s720 = sand.u32 %s384, 1
          %s721 = scalar_lea.vmem [#allocation11], %s720
          %s723 = ssub.s32 16, 16
          %724 = vsyncadd %s719, %s723
          %s725 = smul.addr %s30, 16
          %s726 = scalar_lea.hbm %s14, %s725
          %s728 = sshll.u32 %s721, 4
          %s729 = int_to_ptr.vmem [resolvable:$true] %s728
          %731 = dma.hbm_to_vmem [thread:$0]  %s726, 16, %s729, %s719
        $region92: #{clf_model_forward.1} parent=47 // pred_fallthru
          _
        // Predicated region
        $region93: #{clf_model_forward.1} parent=47 // pred_check
          %p732 = pneg %p420
        $region94: #{clf_model_forward.1} parent=47 // pred_check_branch
          %734 = sbr.rel (%p732) target = $region96
        $region95: #{clf_model_forward.1} parent=47 // pred_region
          %s735 = sand.u32 %s30, 1
          %s736 = scalar_lea.sflag [#allocation4], %s735
          %s737 = sand.u32 %s410, 1
          %s738 = scalar_lea.vmem [#allocation12], %s737
          %s740 = ssub.s32 16, 16
          %741 = vsyncadd %s736, %s740
          %s742 = smul.addr %s30, 16
          %s743 = scalar_lea.hbm %s15, %s742
          %s745 = sshll.u32 %s738, 4
          %s746 = int_to_ptr.vmem [resolvable:$true] %s745
          %748 = dma.hbm_to_vmem [thread:$0]  %s743, 16, %s746, %s736
        $region96: #{clf_model_forward.1} parent=47 // pred_fallthru
          _
      $region48: #{clf_model_forward.1} parent=5 // pred_fallthru
        _
      %p749 = scmp.le.s32.totalorder 1, %s30
      %p750 = scmp.lt.s32.totalorder %s30, 3
      %p751 = pnand %p749, %p750
      %p752 = pneg %p751
      // Predicated region
      $region97: #{clf_model_forward.1} parent=5 // pred_check
        _
      $region98: #{clf_model_forward.1} parent=5 // pred_check_branch
        %754 = sbr.rel (%p751) target = $region100
      $region99: #{clf_model_forward.1} parent=5 // pred_region
        %s755 = ssub.s32 %s30, 1
        // Predicated region
        $region101: #{clf_model_forward.1} parent=99 // pred_check
          %p756 = pneg %p93
        $region102: #{clf_model_forward.1} parent=99 // pred_check_branch
          %758 = sbr.rel (%p756) target = $region104
        $region103: #{clf_model_forward.1} parent=99 // pred_region
          %759 = dma.done [#allocation4], 16
        $region104: #{clf_model_forward.1} parent=99 // pred_fallthru
          _
        // Predicated region
        $region105: #{clf_model_forward.1} parent=99 // pred_check
          %p760 = pneg %p114
        $region106: #{clf_model_forward.1} parent=99 // pred_check_branch
          %762 = sbr.rel (%p760) target = $region108
        $region107: #{clf_model_forward.1} parent=99 // pred_region
          %763 = dma.done [#allocation7], 16
        $region108: #{clf_model_forward.1} parent=99 // pred_fallthru
          _
        %s764 = sand.u32 %s35, 1
        %s765 = scalar_lea.sflag [#allocation4], %s764
        %s766 = sand.u32 %s127, 1
        %s767 = smul.addr %s766, 192
        %s768 = scalar_lea.vmem [#allocation8], %s767
        // Predicated region
        $region109: #{clf_model_forward.1} parent=99 // pred_check
          %p769 = pneg %p140
        $region110: #{clf_model_forward.1} parent=99 // pred_check_branch
          %771 = sbr.rel (%p769) target = $region112
        $region111: #{clf_model_forward.1} parent=99 // pred_region
          %772 = dma.done %s765, 3072
        $region112: #{clf_model_forward.1} parent=99 // pred_fallthru
          _
        %s773 = sand.u32 %s35, 1
        %s774 = scalar_lea.sflag [#allocation4], %s773
        %s775 = sand.u32 %s179, 1
        %s776 = smul.addr %s775, 64
        %s777 = scalar_lea.vmem [#allocation9], %s776
        // Predicated region
        $region113: #{clf_model_forward.1} parent=99 // pred_check
          %p778 = pneg %p192
        $region114: #{clf_model_forward.1} parent=99 // pred_check_branch
          %780 = sbr.rel (%p778) target = $region116
        $region115: #{clf_model_forward.1} parent=99 // pred_region
          %781 = dma.done %s774, 1024
        $region116: #{clf_model_forward.1} parent=99 // pred_fallthru
          _
        %s782 = sand.u32 %s35, 1
        %s783 = scalar_lea.sflag [#allocation4], %s782
        %s784 = sand.u32 %s335, 1
        %s785 = smul.addr %s784, 128
        %s786 = scalar_lea.vmem [#allocation10], %s785
        // Predicated region
        $region117: #{clf_model_forward.1} parent=99 // pred_check
          %p787 = pneg %p348
        $region118: #{clf_model_forward.1} parent=99 // pred_check_branch
          %789 = sbr.rel (%p787) target = $region120
        $region119: #{clf_model_forward.1} parent=99 // pred_region
          %790 = dma.done %s783, 2048
        $region120: #{clf_model_forward.1} parent=99 // pred_fallthru
          _
        %s791 = sand.u32 %s35, 1
        %s792 = scalar_lea.sflag [#allocation4], %s791
        %s793 = sand.u32 %s387, 1
        %s794 = scalar_lea.vmem [#allocation11], %s793
        // Predicated region
        $region121: #{clf_model_forward.1} parent=99 // pred_check
          %p795 = pneg %p400
        $region122: #{clf_model_forward.1} parent=99 // pred_check_branch
          %797 = sbr.rel (%p795) target = $region124
        $region123: #{clf_model_forward.1} parent=99 // pred_region
          %798 = dma.done %s792, 16
        $region124: #{clf_model_forward.1} parent=99 // pred_fallthru
          _
        %s799 = sand.u32 %s35, 1
        %s800 = scalar_lea.sflag [#allocation4], %s799
        %s801 = sand.u32 %s413, 1
        %s802 = scalar_lea.vmem [#allocation12], %s801
        // Predicated region
        $region125: #{clf_model_forward.1} parent=99 // pred_check
          %p803 = pneg %p426
        $region126: #{clf_model_forward.1} parent=99 // pred_check_branch
          %805 = sbr.rel (%p803) target = $region128
        $region127: #{clf_model_forward.1} parent=99 // pred_region
          %806 = dma.done %s800, 16
        $region128: #{clf_model_forward.1} parent=99 // pred_fallthru
          _
        // Predicated region
        $region129: #{clf_model_forward.1} parent=99 // pred_check
          %p807 = pneg %p468
        $region130: #{clf_model_forward.1} parent=99 // pred_check_branch
          %809 = sbr.rel (%p807) target = $region132
        $region131: #{clf_model_forward.1} parent=99 // pred_region
          %810 = dma.done [#allocation7], 16
        $region132: #{clf_model_forward.1} parent=99 // pred_fallthru
          _
        // Predicated region
        $region133: #{clf_model_forward.1} parent=99 // pred_check
          %p811 = pneg %p510
        $region134: #{clf_model_forward.1} parent=99 // pred_check_branch
          %813 = sbr.rel (%p811) target = $region136
        $region135: #{clf_model_forward.1} parent=99 // pred_region
          %814 = dma.done [#allocation15], 16
        $region136: #{clf_model_forward.1} parent=99 // pred_fallthru
          _
        %p815 = pneg %p51
        %p816 = pneg %p48
        %p817 = pneg %p72
        %p818 = pneg %p69
        %p819 = pneg %p93
        %p820 = pneg %p90
        %p821 = pneg %p114
        %p822 = pneg %p111
        %s823 = sand.u32 %s35, 1
        %s824 = scalar_lea.sflag [#allocation4], %s823
        %s825 = sand.u32 %s127, 1
        %s826 = smul.addr %s825, 192
        %s827 = scalar_lea.vmem [#allocation8], %s826
        %p828 = pneg %p140
        %p829 = pneg %p137
        %p830 = scmp.lt.s32.totalorder %s35, 1
        %s831 = scalar_select %p830, %s35, 1
        %s832 = smul.addr %s831, 3
        %s833 = scalar_lea.vmem %s5, %s832
        %p834 = pneg %p166
        %p835 = pneg %p163
        %s836 = sand.u32 %s35, 1
        %s837 = scalar_lea.sflag [#allocation4], %s836
        %s838 = sand.u32 %s179, 1
        %s839 = smul.addr %s838, 64
        %s840 = scalar_lea.vmem [#allocation9], %s839
        %p841 = pneg %p192
        %p842 = pneg %p189
        %p843 = scmp.lt.s32.totalorder %s35, 1
        %s844 = scalar_select %p843, %s35, 1
        %s845 = scalar_lea.vmem %s7, %s844
        %p846 = pneg %p218
        %p847 = pneg %p215
        %p848 = scmp.lt.s32.totalorder %s35, 1
        %s849 = scalar_select %p848, %s35, 1
        %s850 = scalar_lea.vmem %s8, %s849
        %p851 = pneg %p244
        %p852 = pneg %p241
        %p853 = scmp.lt.s32.totalorder %s35, 1
        %s854 = scalar_select %p853, %s35, 1
        %s855 = scalar_lea.vmem %s9, %s854
        %p856 = pneg %p270
        %p857 = pneg %p267
        %p858 = scmp.lt.s32.totalorder %s35, 1
        %s859 = scalar_select %p858, %s35, 1
        %s860 = smul.addr %s859, 32
        %s861 = smul.addr %s860, 4
        %s862 = scalar_lea.vmem %s10, %s861
        %p863 = pneg %p296
        %p864 = pneg %p293
        %p865 = scmp.lt.s32.totalorder %s35, 1
        %s866 = scalar_select %p865, %s35, 1
        %s867 = smul.addr %s866, 2
        %s868 = scalar_lea.vmem %s11, %s867
        %p869 = pneg %p322
        %p870 = pneg %p319
        %s871 = sand.u32 %s35, 1
        %s872 = scalar_lea.sflag [#allocation4], %s871
        %s873 = sand.u32 %s335, 1
        %s874 = smul.addr %s873, 128
        %s875 = scalar_lea.vmem [#allocation10], %s874
        %p876 = pneg %p348
        %p877 = pneg %p345
        %p878 = scmp.lt.s32.totalorder %s35, 1
        %s879 = scalar_select %p878, %s35, 1
        %s880 = scalar_lea.vmem %s13, %s879
        %p881 = pneg %p374
        %p882 = pneg %p371
        %s883 = sand.u32 %s35, 1
        %s884 = scalar_lea.sflag [#allocation4], %s883
        %s885 = sand.u32 %s387, 1
        %s886 = scalar_lea.vmem [#allocation11], %s885
        %p887 = pneg %p400
        %p888 = pneg %p397
        %s889 = sand.u32 %s35, 1
        %s890 = scalar_lea.sflag [#allocation4], %s889
        %s891 = sand.u32 %s413, 1
        %s892 = scalar_lea.vmem [#allocation12], %s891
        %p893 = pneg %p426
        %p894 = pneg %p423
        %p895 = pneg %p447
        %p896 = pneg %p444
        %p897 = pneg %p468
        %p898 = pneg %p465
        %p899 = pneg %p489
        %p900 = pneg %p486
        %p901 = pneg %p510
        %p902 = pneg %p507
        %p903 = pneg %p531
        %p904 = pneg %p528
        %p905 = scmp.lt.s32.totalorder %s35, 1
        %s906 = scalar_select %p905, %s35, 1
        %s907 = smul.addr %s906, 3
        %s908 = scalar_lea.vmem %s5, %s907
        %p909 = scmp.lt.s32.totalorder %s35, 1
        %s910 = scalar_select %p909, %s35, 1
        %s911 = scalar_lea.vmem %s7, %s910
        %p912 = scmp.lt.s32.totalorder %s35, 1
        %s913 = scalar_select %p912, %s35, 1
        %s914 = scalar_lea.vmem %s8, %s913
        %p915 = scmp.lt.s32.totalorder %s35, 1
        %s916 = scalar_select %p915, %s35, 1
        %s917 = scalar_lea.vmem %s9, %s916
        %p918 = scmp.lt.s32.totalorder %s35, 1
        %s919 = scalar_select %p918, %s35, 1
        %s920 = smul.addr %s919, 32
        %s921 = smul.addr %s920, 4
        %s922 = scalar_lea.vmem %s10, %s921
        %p923 = scmp.lt.s32.totalorder %s35, 1
        %s924 = scalar_select %p923, %s35, 1
        %s925 = smul.addr %s924, 2
        %s926 = scalar_lea.vmem %s11, %s925
        %p927 = scmp.lt.s32.totalorder %s35, 1
        %s928 = scalar_select %p927, %s35, 1
        %s929 = scalar_lea.vmem %s13, %s928
        %p931 = scmp.eq.s32.totalorder %s35, 0
        // Predicated region
        $region137: #{clf_model_forward.1} parent=99 // pred_check
          %p932 = pneg %p931
        $region138: #{clf_model_forward.1} parent=99 // pred_check_branch
          %934 = sbr.rel (%p932) target = $region140
        $region139: #{clf_model_forward.1} parent=99 // pred_region
          %v935 = vld [vmem:[%s0] sm:$0xff]
          %v936 = vld [vmem:[%s0 + $0x8] sm:$0xff]
          %v937 = vld [vmem:[#allocation3] sm:$0x1]
          %v938 = vld [vmem:[#allocation6] sm:$0x1]
          %939 = vadd.xlane.f32.xlu0 %v935
          %v940 = vpop.xlane.xlu0 %939
          %941 = vadd.xlane.f32.xlu0 %v936
          %v942 = vpop.xlane.xlu0 %941
          %v943 = vrcp.pop 128.0
          %v944 = vmul.f32 %v940, %v943
          %v945 = vmul.f32 %v942, %v943
          %v946 = vmul.f32 %v935, %v935
          %v947 = vmul.f32 %v936, %v936
          %948 = vadd.xlane.f32.xlu0 %v946
          %v949 = vpop.xlane.xlu0 %948
          %950 = vadd.xlane.f32.xlu0 %v947
          %v951 = vpop.xlane.xlu0 %950
          %v952 = vmul.f32 %v949, %v943
          %v953 = vmul.f32 %v951, %v943
          %v954 = vmul.f32 %v944, %v944
          %v955 = vmul.f32 %v945, %v945
          %v956 = vsub.f32 %v952, %v954
          %v957 = vsub.f32 %v953, %v955
          %v958 = vmax.f32 %v956, 0.0
          %v959 = vmax.f32 %v957, 0.0
          %v960 = vsub.f32 %v935, %v944
          %v961 = vsub.f32 %v936, %v945
          %v962 = vadd.f32 %v958, 1e-12
          %v963 = vadd.f32 %v959, 1e-12
          %v964 = vrsqrt.pop %v962
          %v965 = vrsqrt.pop %v963
          %v966 = vmul.f32 %v960, %v964
          %v967 = vmul.f32 %v961, %v965
          %v969 = vlaneseq
          %v970 = vshrl.u32 %v969, 7
          %v971 = vsub.s32 0, %v970
          %v972 = vrot.slane %v937, %v971
          %v974 = vmul.f32 %v966, %v972
          %v975 = vmul.f32 %v967, %v972
          %v977 = vlaneseq
          %v978 = vshrl.u32 %v977, 7
          %v979 = vsub.s32 0, %v978
          %v980 = vrot.slane %v938, %v979
          %v982 = vadd.f32 %v974, %v980
          %v983 = vadd.f32 %v975, %v980
          %984 = vst [vmem:[#allocation2] sm:$0xff] %v982
          %985 = vst [vmem:[#allocation2 + $0x8] sm:$0xff] %v983
        $region140: #{clf_model_forward.1} parent=99 // pred_fallthru
          _
        %v986 = vld [vmem:[#allocation2] sm:$0xff]
        %v987 = vld [vmem:[#allocation2 + $0x8] sm:$0xff]
        %v988 = vpack.c.bf16 %v987, %v986
        %v989 = vld [vmem:[%s768] sm:$0xff]
        %v990 = vld [vmem:[%s768 + $0x8] sm:$0xf]
        %v991 = vld [vmem:[%s768 + $0xc] sm:$0xff]
        %v992 = vld [vmem:[%s768 + $0x14] sm:$0xf]
        %v993 = vld [vmem:[%s768 + $0x18] sm:$0xff]
        %v994 = vld [vmem:[%s768 + $0x20] sm:$0xf]
        %v995 = vld [vmem:[%s768 + $0x24] sm:$0xff]
        %v996 = vld [vmem:[%s768 + $0x2c] sm:$0xf]
        %v997 = vld [vmem:[%s768 + $0x30] sm:$0xff]
        %v998 = vld [vmem:[%s768 + $0x38] sm:$0xf]
        %v999 = vld [vmem:[%s768 + $0x3c] sm:$0xff]
        %v1000 = vld [vmem:[%s768 + $0x44] sm:$0xf]
        %v1001 = vld [vmem:[%s768 + $0x48] sm:$0xff]
        %v1002 = vld [vmem:[%s768 + $0x50] sm:$0xf]
        %v1003 = vld [vmem:[%s768 + $0x54] sm:$0xff]
        %v1004 = vld [vmem:[%s768 + $0x5c] sm:$0xf]
        %v1005 = vld [vmem:[%s768 + $0x60] sm:$0xff]
        %v1006 = vld [vmem:[%s768 + $0x68] sm:$0xf]
        %v1007 = vld [vmem:[%s768 + $0x6c] sm:$0xff]
        %v1008 = vld [vmem:[%s768 + $0x74] sm:$0xf]
        %v1009 = vld [vmem:[%s768 + $0x78] sm:$0xff]
        %v1010 = vld [vmem:[%s768 + $0x80] sm:$0xf]
        %v1011 = vld [vmem:[%s768 + $0x84] sm:$0xff]
        %v1012 = vld [vmem:[%s768 + $0x8c] sm:$0xf]
        %v1013 = vld [vmem:[%s768 + $0x90] sm:$0xff]
        %v1014 = vld [vmem:[%s768 + $0x98] sm:$0xf]
        %v1015 = vld [vmem:[%s768 + $0x9c] sm:$0xff]
        %v1016 = vld [vmem:[%s768 + $0xa4] sm:$0xf]
        %v1017 = vld [vmem:[%s768 + $0xa8] sm:$0xff]
        %v1018 = vld [vmem:[%s768 + $0xb0] sm:$0xf]
        %v1019 = vld [vmem:[%s768 + $0xb4] sm:$0xff]
        %v1020 = vld [vmem:[%s768 + $0xbc] sm:$0xf]
        %v1021 = vld [vmem:[%s908] sm:$0x7]
        %v1023 = vlaneseq
        %v1024 = vshrl.u32 %v1023, 7
        %v1025 = vsub.s32 0, %v1024
        %v1026 = vrot.slane %v1021, %v1025
        %v1027 = vlaneseq
        %v1028 = vshrl.u32 %v1027, 7
        %v1029 = vsub.s32 1, %v1028
        %v1030 = vrot.slane %v1021, %v1029
        %v1031 = vlaneseq
        %v1032 = vshrl.u32 %v1031, 7
        %v1033 = vsub.s32 2, %v1032
        %v1034 = vrot.slane %v1021, %v1033
        %v1070 = vunpack.c.l.b16 %v989
        %v1071 = vunpack.c.h.b16 %v989
        %v1072 = vunpack.c.l.b16 %v990
        %v1073 = vunpack.c.l.b16 %v991
        %v1074 = vunpack.c.h.b16 %v991
        %v1075 = vunpack.c.l.b16 %v992
        %v1076 = vunpack.c.l.b16 %v993
        %v1077 = vunpack.c.h.b16 %v993
        %v1078 = vunpack.c.l.b16 %v994
        %v1079 = vunpack.c.l.b16 %v995
        %v1080 = vunpack.c.h.b16 %v995
        %v1081 = vunpack.c.l.b16 %v996
        %v1082 = vunpack.c.l.b16 %v997
        %v1083 = vunpack.c.h.b16 %v997
        %v1084 = vunpack.c.l.b16 %v998
        %v1085 = vunpack.c.l.b16 %v999
        %v1086 = vunpack.c.h.b16 %v999
        %v1087 = vunpack.c.l.b16 %v1000
        %v1088 = vunpack.c.l.b16 %v1001
        %v1089 = vunpack.c.h.b16 %v1001
        %v1090 = vunpack.c.l.b16 %v1002
        %v1091 = vunpack.c.l.b16 %v1003
        %v1092 = vunpack.c.h.b16 %v1003
        %v1093 = vunpack.c.l.b16 %v1004
        %v1094 = vunpack.c.l.b16 %v1005
        %v1095 = vunpack.c.h.b16 %v1005
        %v1096 = vunpack.c.l.b16 %v1006
        %v1097 = vunpack.c.l.b16 %v1007
        %v1098 = vunpack.c.h.b16 %v1007
        %v1099 = vunpack.c.l.b16 %v1008
        %v1100 = vunpack.c.l.b16 %v1009
        %v1101 = vunpack.c.h.b16 %v1009
        %v1102 = vunpack.c.l.b16 %v1010
        %v1103 = vunpack.c.l.b16 %v1011
        %v1104 = vunpack.c.h.b16 %v1011
        %v1105 = vunpack.c.l.b16 %v1012
        %v1106 = vunpack.c.l.b16 %v1013
        %v1107 = vunpack.c.h.b16 %v1013
        %v1108 = vunpack.c.l.b16 %v1014
        %v1109 = vunpack.c.l.b16 %v1015
        %v1110 = vunpack.c.h.b16 %v1015
        %v1111 = vunpack.c.l.b16 %v1016
        %v1112 = vunpack.c.l.b16 %v1017
        %v1113 = vunpack.c.h.b16 %v1017
        %v1114 = vunpack.c.l.b16 %v1018
        %v1115 = vunpack.c.l.b16 %v1019
        %v1116 = vunpack.c.h.b16 %v1019
        %v1117 = vunpack.c.l.b16 %v1020
        %v1118 = vpack.c.b16 %v1073, %v1070
        %v1119 = vpack.c.b16 %v1074, %v1071
        %v1120 = vpack.c.b16 %v1075, %v1072
        %v1121 = vpack.c.b16 %v1079, %v1076
        %v1122 = vpack.c.b16 %v1080, %v1077
        %v1123 = vpack.c.b16 %v1081, %v1078
        %v1124 = vpack.c.b16 %v1085, %v1082
        %v1125 = vpack.c.b16 %v1086, %v1083
        %v1126 = vpack.c.b16 %v1087, %v1084
        %v1127 = vpack.c.b16 %v1091, %v1088
        %v1128 = vpack.c.b16 %v1092, %v1089
        %v1129 = vpack.c.b16 %v1093, %v1090
        %v1130 = vpack.c.b16 %v1097, %v1094
        %v1131 = vpack.c.b16 %v1098, %v1095
        %v1132 = vpack.c.b16 %v1099, %v1096
        %v1133 = vpack.c.b16 %v1103, %v1100
        %v1134 = vpack.c.b16 %v1104, %v1101
        %v1135 = vpack.c.b16 %v1105, %v1102
        %v1136 = vpack.c.b16 %v1109, %v1106
        %v1137 = vpack.c.b16 %v1110, %v1107
        %v1138 = vpack.c.b16 %v1111, %v1108
        %v1139 = vpack.c.b16 %v1115, %v1112
        %v1140 = vpack.c.b16 %v1116, %v1113
        %v1141 = vpack.c.b16 %v1117, %v1114
        %1166 = vmatprep.subr.bf16.mxu0 %v1140
        %1167 = vmatpush1.bf16.msra.mxu0 %v1139
        %1168 = vmatprep.subr.bf16.mxu0 %v1137
        %1169 = vmatpush1.bf16.msra.mxu0 %v1136
        %1170 = vmatprep.subr.bf16.mxu0 %v1134
        %1171 = vmatpush1.bf16.msra.mxu0 %v1133
        %1172 = vmatprep.subr.bf16.mxu0 %v1131
        %1173 = vmatpush1.bf16.msra.mxu0 %v1130
        %1174 = vmatprep.subr.bf16.mxu0 %v1128
        %1175 = vmatpush1.bf16.msra.mxu0 %v1127
        %1176 = vmatprep.subr.bf16.mxu0 %v1125
        %1177 = vmatpush1.bf16.msra.mxu0 %v1124
        %1178 = vmatprep.subr.bf16.mxu0 %v1122
        %1179 = vmatpush1.bf16.msra.mxu0 %v1121
        %1180 = vmatprep.subr.bf16.mxu0 %v1119
        %1181 = vmatpush1.bf16.msra.mxu0 %v1118
        %1182 = vmatprep.subr.bf16.mxu0 0
        %1183 = vmatpush2.bf16.msra.mxu0 0
        %1184 = vmatprep.subr.bf16.mxu0 0
        %1185 = vmatpush2.bf16.msra.mxu0 0
        %1186 = vmatprep.subr.bf16.mxu0 0
        %1187 = vmatpush2.bf16.msra.mxu0 0
        %1188 = vmatprep.subr.bf16.mxu0 0
        %1189 = vmatpush2.bf16.msra.mxu0 0
        %1190 = vmatprep.subr.bf16.mxu0 0
        %1191 = vmatpush2.bf16.msra.mxu0 0
        %1192 = vmatprep.subr.bf16.mxu0 0
        %1193 = vmatpush2.bf16.msra.mxu0 0
        %1194 = vmatprep.subr.bf16.mxu0 0
        %1195 = vmatpush2.bf16.msra.mxu0 0
        %1196 = vmatprep.subr.bf16.mxu0 0
        %1197 = vmatpush2.bf16.msra.mxu0 0
        %1198 = vmatprep.mubr.bf16.mxu0 0
        %1199 = vmatmul.mubr.bf16.gmra.mxu0 %v988
        %v1200 = vpop.f32.mrf.mxu0
        %v1201 = vadd.f32 %v1026, %v1200
        %v1202 = vpop.f32.mrf.mxu0
        %v1203 = vadd.f32 %v1030, %v1202
        %v1204 = vpop.f32.mrf.mxu0
        %v1205 = vadd.f32 %v1026, %v1204
        %v1206 = vpop.f32.mrf.mxu0
        %v1207 = vadd.f32 %v1030, %v1206
        %1208 = vdwg.mxu0
        %1209 = vmatprep.subr.bf16.mxu0 0
        %1210 = vmatpush1.bf16.msra.mxu0 %v1141
        %1211 = vmatprep.subr.bf16.mxu0 0
        %1212 = vmatpush1.bf16.msra.mxu0 %v1138
        %1213 = vmatprep.subr.bf16.mxu0 0
        %1214 = vmatpush1.bf16.msra.mxu0 %v1135
        %1215 = vmatprep.subr.bf16.mxu0 0
        %1216 = vmatpush1.bf16.msra.mxu0 %v1132
        %1217 = vmatprep.subr.bf16.mxu0 0
        %1218 = vmatpush1.bf16.msra.mxu0 %v1129
        %1219 = vmatprep.subr.bf16.mxu0 0
        %1220 = vmatpush1.bf16.msra.mxu0 %v1126
        %1221 = vmatprep.subr.bf16.mxu0 0
        %1222 = vmatpush1.bf16.msra.mxu0 %v1123
        %1223 = vmatprep.subr.bf16.mxu0 0
        %1224 = vmatpush1.bf16.msra.mxu0 %v1120
        %1225 = vmatprep.subr.bf16.mxu0 0
        %1226 = vmatpush2.bf16.msra.mxu0 0
        %1227 = vmatprep.subr.bf16.mxu0 0
        %1228 = vmatpush2.bf16.msra.mxu0 0
        %1229 = vmatprep.subr.bf16.mxu0 0
        %1230 = vmatpush2.bf16.msra.mxu0 0
        %1231 = vmatprep.subr.bf16.mxu0 0
        %1232 = vmatpush2.bf16.msra.mxu0 0
        %1233 = vmatprep.subr.bf16.mxu0 0
        %1234 = vmatpush2.bf16.msra.mxu0 0
        %1235 = vmatprep.subr.bf16.mxu0 0
        %1236 = vmatpush2.bf16.msra.mxu0 0
        %1237 = vmatprep.subr.bf16.mxu0 0
        %1238 = vmatpush2.bf16.msra.mxu0 0
        %1239 = vmatprep.subr.bf16.mxu0 0
        %1240 = vmatpush2.bf16.msra.mxu0 0
        %1241 = vmatprep.mubr.bf16.mxu0 0
        %1242 = vmatmul.mubr.bf16.gmra.mxu0 %v988
        %v1243 = vpop.f32.mrf.mxu0
        %v1244 = vadd.f32 %v1034, %v1243
        %v1245 = vpop.f32.mrf.mxu0
        %v1246 = vpop.f32.mrf.mxu0
        %v1247 = vadd.f32 %v1034, %v1246
        %v1248 = vpop.f32.mrf.mxu0
        %1249 = vdwg.mxu0
        %1252 = vrot.lane.b32.xlu0 %v1201, 96
        %v1253 = vpop.permute.xlu0 %1252
        %1254 = vrot.lane.b32.xlu0 %v1205, 96
        %v1255 = vpop.permute.xlu0 %1254
        %1258 = vrot.lane.b32.xlu0 %v1201, 64
        %v1259 = vpop.permute.xlu0 %1258
        %1260 = vrot.lane.b32.xlu0 %v1205, 64
        %v1261 = vpop.permute.xlu0 %1260
        %1264 = vrot.lane.b32.xlu0 %v1201, 32
        %v1265 = vpop.permute.xlu0 %1264
        %1266 = vrot.lane.b32.xlu0 %v1205, 32
        %v1267 = vpop.permute.xlu0 %1266
        %v1270 = vcombine.low %v1201, %v1259
        %v1271 = vcombine.high %v1201, %v1259
        %v1273 = vunpack.c.l.s4 1983009808
        %v1274 = vunpack.c.0.s8 %v1273
        %v1275 = vlaneseq
        %v1276 = vshrl.u32 %v1275, 7
        %v1277 = vsub.s32 %v1274, %v1276
        %v1278 = vrot.slane %v1270, %v1277
        %v1280 = vunpack.c.l.s4 1983009808
        %v1281 = vunpack.c.0.s8 %v1280
        %v1282 = vlaneseq
        %v1283 = vshrl.u32 %v1282, 7
        %v1284 = vsub.s32 %v1281, %v1283
        %v1285 = vrot.slane %v1271, %v1284
        %v1286 = vcombine.low %v1253, %v1265
        %v1287 = vcombine.high %v1253, %v1265
        %v1289 = vunpack.c.l.s4 1983009808
        %v1290 = vunpack.c.0.s8 %v1289
        %v1291 = vlaneseq
        %v1292 = vshrl.u32 %v1291, 7
        %v1293 = vsub.s32 %v1290, %v1292
        %v1294 = vrot.slane %v1286, %v1293
        %v1296 = vunpack.c.l.s4 1983009808
        %v1297 = vunpack.c.0.s8 %v1296
        %v1298 = vlaneseq
        %v1299 = vshrl.u32 %v1298, 7
        %v1300 = vsub.s32 %v1297, %v1299
        %v1301 = vrot.slane %v1287, %v1300
        %v1302 = vcombine.low %v1278, %v1294
        %v1303 = vcombine.high %v1278, %v1294
        %v1305 = vunpack.c.l.s4 1934713408
        %v1306 = vunpack.c.0.s8 %v1305
        %v1307 = vlaneseq
        %v1308 = vshrl.u32 %v1307, 7
        %v1309 = vsub.s32 %v1306, %v1308
        %v1310 = vrot.slane %v1302, %v1309
        %v1312 = vunpack.c.l.s4 1934713408
        %v1313 = vunpack.c.0.s8 %v1312
        %v1314 = vlaneseq
        %v1315 = vshrl.u32 %v1314, 7
        %v1316 = vsub.s32 %v1313, %v1315
        %v1317 = vrot.slane %v1303, %v1316
        %v1318 = vcombine.low %v1285, %v1301
        %v1319 = vcombine.high %v1285, %v1301
        %v1321 = vunpack.c.l.s4 1934713408
        %v1322 = vunpack.c.0.s8 %v1321
        %v1323 = vlaneseq
        %v1324 = vshrl.u32 %v1323, 7
        %v1325 = vsub.s32 %v1322, %v1324
        %v1326 = vrot.slane %v1318, %v1325
        %v1328 = vunpack.c.l.s4 1934713408
        %v1329 = vunpack.c.0.s8 %v1328
        %v1330 = vlaneseq
        %v1331 = vshrl.u32 %v1330, 7
        %v1332 = vsub.s32 %v1329, %v1331
        %v1333 = vrot.slane %v1319, %v1332
        %v1334 = vcombine.high %v1310, 0.0
        %v1335 = vcombine.high %v1317, 0.0
        %v1336 = vcombine.high %v1326, 0.0
        %v1337 = vcombine.high %v1333, 0.0
        %v1338 = vcombine.low %v1205, %v1261
        %v1339 = vcombine.high %v1205, %v1261
        %v1341 = vunpack.c.l.s4 1983009808
        %v1342 = vunpack.c.0.s8 %v1341
        %v1343 = vlaneseq
        %v1344 = vshrl.u32 %v1343, 7
        %v1345 = vsub.s32 %v1342, %v1344
        %v1346 = vrot.slane %v1338, %v1345
        %v1348 = vunpack.c.l.s4 1983009808
        %v1349 = vunpack.c.0.s8 %v1348
        %v1350 = vlaneseq
        %v1351 = vshrl.u32 %v1350, 7
        %v1352 = vsub.s32 %v1349, %v1351
        %v1353 = vrot.slane %v1339, %v1352
        %v1354 = vcombine.low %v1255, %v1267
        %v1355 = vcombine.high %v1255, %v1267
        %v1357 = vunpack.c.l.s4 1983009808
        %v1358 = vunpack.c.0.s8 %v1357
        %v1359 = vlaneseq
        %v1360 = vshrl.u32 %v1359, 7
        %v1361 = vsub.s32 %v1358, %v1360
        %v1362 = vrot.slane %v1354, %v1361
        %v1364 = vunpack.c.l.s4 1983009808
        %v1365 = vunpack.c.0.s8 %v1364
        %v1366 = vlaneseq
        %v1367 = vshrl.u32 %v1366, 7
        %v1368 = vsub.s32 %v1365, %v1367
        %v1369 = vrot.slane %v1355, %v1368
        %v1370 = vcombine.low %v1346, %v1362
        %v1371 = vcombine.high %v1346, %v1362
        %v1373 = vunpack.c.l.s4 1934713408
        %v1374 = vunpack.c.0.s8 %v1373
        %v1375 = vlaneseq
        %v1376 = vshrl.u32 %v1375, 7
        %v1377 = vsub.s32 %v1374, %v1376
        %v1378 = vrot.slane %v1370, %v1377
        %v1380 = vunpack.c.l.s4 1934713408
        %v1381 = vunpack.c.0.s8 %v1380
        %v1382 = vlaneseq
        %v1383 = vshrl.u32 %v1382, 7
        %v1384 = vsub.s32 %v1381, %v1383
        %v1385 = vrot.slane %v1371, %v1384
        %v1386 = vcombine.low %v1353, %v1369
        %v1387 = vcombine.high %v1353, %v1369
        %v1389 = vunpack.c.l.s4 1934713408
        %v1390 = vunpack.c.0.s8 %v1389
        %v1391 = vlaneseq
        %v1392 = vshrl.u32 %v1391, 7
        %v1393 = vsub.s32 %v1390, %v1392
        %v1394 = vrot.slane %v1386, %v1393
        %v1396 = vunpack.c.l.s4 1934713408
        %v1397 = vunpack.c.0.s8 %v1396
        %v1398 = vlaneseq
        %v1399 = vshrl.u32 %v1398, 7
        %v1400 = vsub.s32 %v1397, %v1399
        %v1401 = vrot.slane %v1387, %v1400
        %v1402 = vcombine.high %v1378, 0.0
        %v1403 = vcombine.high %v1385, 0.0
        %v1404 = vcombine.high %v1394, 0.0
        %v1405 = vcombine.high %v1401, 0.0
        %v1406 = vcombine.low %v1310, %v1317
        %v1408 = vunpack.c.l.s4 1983009808
        %v1409 = vunpack.c.0.s8 %v1408
        %v1410 = vlaneseq
        %v1411 = vshrl.u32 %v1410, 7
        %v1412 = vsub.s32 %v1409, %v1411
        %v1413 = vrot.slane %v1406, %v1412
        %v1414 = vcombine.low %v1334, %v1335
        %v1416 = vunpack.c.l.s4 1983009808
        %v1417 = vunpack.c.0.s8 %v1416
        %v1418 = vlaneseq
        %v1419 = vshrl.u32 %v1418, 7
        %v1420 = vsub.s32 %v1417, %v1419
        %v1421 = vrot.slane %v1414, %v1420
        %v1422 = vcombine.low %v1326, %v1333
        %v1424 = vunpack.c.l.s4 1983009808
        %v1425 = vunpack.c.0.s8 %v1424
        %v1426 = vlaneseq
        %v1427 = vshrl.u32 %v1426, 7
        %v1428 = vsub.s32 %v1425, %v1427
        %v1429 = vrot.slane %v1422, %v1428
        %v1430 = vcombine.low %v1336, %v1337
        %v1432 = vunpack.c.l.s4 1983009808
        %v1433 = vunpack.c.0.s8 %v1432
        %v1434 = vlaneseq
        %v1435 = vshrl.u32 %v1434, 7
        %v1436 = vsub.s32 %v1433, %v1435
        %v1437 = vrot.slane %v1430, %v1436
        %v1438 = vcombine.low %v1413, %v1421
        %v1439 = vcombine.high %v1413, %v1421
        %v1441 = vunpack.c.l.s4 1934713408
        %v1442 = vunpack.c.0.s8 %v1441
        %v1443 = vlaneseq
        %v1444 = vshrl.u32 %v1443, 7
        %v1445 = vsub.s32 %v1442, %v1444
        %v1446 = vrot.slane %v1438, %v1445
        %v1448 = vunpack.c.l.s4 1934713408
        %v1449 = vunpack.c.0.s8 %v1448
        %v1450 = vlaneseq
        %v1451 = vshrl.u32 %v1450, 7
        %v1452 = vsub.s32 %v1449, %v1451
        %v1453 = vrot.slane %v1439, %v1452
        %v1454 = vcombine.low %v1429, %v1437
        %v1455 = vcombine.high %v1429, %v1437
        %v1457 = vunpack.c.l.s4 1934713408
        %v1458 = vunpack.c.0.s8 %v1457
        %v1459 = vlaneseq
        %v1460 = vshrl.u32 %v1459, 7
        %v1461 = vsub.s32 %v1458, %v1460
        %v1462 = vrot.slane %v1454, %v1461
        %v1464 = vunpack.c.l.s4 1934713408
        %v1465 = vunpack.c.0.s8 %v1464
        %v1466 = vlaneseq
        %v1467 = vshrl.u32 %v1466, 7
        %v1468 = vsub.s32 %v1465, %v1467
        %v1469 = vrot.slane %v1455, %v1468
        %v1470 = vcombine.low %v1446, %v1462
        %v1471 = vcombine.high %v1446, %v1462
        %v1472 = vcombine.low %v1453, %v1469
        %v1473 = vcombine.high %v1453, %v1469
        %v1474 = vcombine.low %v1378, %v1385
        %v1476 = vunpack.c.l.s4 1983009808
        %v1477 = vunpack.c.0.s8 %v1476
        %v1478 = vlaneseq
        %v1479 = vshrl.u32 %v1478, 7
        %v1480 = vsub.s32 %v1477, %v1479
        %v1481 = vrot.slane %v1474, %v1480
        %v1482 = vcombine.low %v1402, %v1403
        %v1484 = vunpack.c.l.s4 1983009808
        %v1485 = vunpack.c.0.s8 %v1484
        %v1486 = vlaneseq
        %v1487 = vshrl.u32 %v1486, 7
        %v1488 = vsub.s32 %v1485, %v1487
        %v1489 = vrot.slane %v1482, %v1488
        %v1490 = vcombine.low %v1394, %v1401
        %v1492 = vunpack.c.l.s4 1983009808
        %v1493 = vunpack.c.0.s8 %v1492
        %v1494 = vlaneseq
        %v1495 = vshrl.u32 %v1494, 7
        %v1496 = vsub.s32 %v1493, %v1495
        %v1497 = vrot.slane %v1490, %v1496
        %v1498 = vcombine.low %v1404, %v1405
        %v1500 = vunpack.c.l.s4 1983009808
        %v1501 = vunpack.c.0.s8 %v1500
        %v1502 = vlaneseq
        %v1503 = vshrl.u32 %v1502, 7
        %v1504 = vsub.s32 %v1501, %v1503
        %v1505 = vrot.slane %v1498, %v1504
        %v1506 = vcombine.low %v1481, %v1489
        %v1507 = vcombine.high %v1481, %v1489
        %v1509 = vunpack.c.l.s4 1934713408
        %v1510 = vunpack.c.0.s8 %v1509
        %v1511 = vlaneseq
        %v1512 = vshrl.u32 %v1511, 7
        %v1513 = vsub.s32 %v1510, %v1512
        %v1514 = vrot.slane %v1506, %v1513
        %v1516 = vunpack.c.l.s4 1934713408
        %v1517 = vunpack.c.0.s8 %v1516
        %v1518 = vlaneseq
        %v1519 = vshrl.u32 %v1518, 7
        %v1520 = vsub.s32 %v1517, %v1519
        %v1521 = vrot.slane %v1507, %v1520
        %v1522 = vcombine.low %v1497, %v1505
        %v1523 = vcombine.high %v1497, %v1505
        %v1525 = vunpack.c.l.s4 1934713408
        %v1526 = vunpack.c.0.s8 %v1525
        %v1527 = vlaneseq
        %v1528 = vshrl.u32 %v1527, 7
        %v1529 = vsub.s32 %v1526, %v1528
        %v1530 = vrot.slane %v1522, %v1529
        %v1532 = vunpack.c.l.s4 1934713408
        %v1533 = vunpack.c.0.s8 %v1532
        %v1534 = vlaneseq
        %v1535 = vshrl.u32 %v1534, 7
        %v1536 = vsub.s32 %v1533, %v1535
        %v1537 = vrot.slane %v1523, %v1536
        %v1538 = vcombine.low %v1514, %v1530
        %v1539 = vcombine.high %v1514, %v1530
        %v1540 = vcombine.low %v1521, %v1537
        %v1541 = vcombine.high %v1521, %v1537
        %v1542 = vpack.c.bf16 %v1470, %v1470
        %v1543 = vpack.c.bf16 %v1471, %v1471
        %v1544 = vpack.c.bf16 %v1472, %v1472
        %v1545 = vpack.c.bf16 %v1473, %v1473
        %v1546 = vpack.c.bf16 %v1538, %v1538
        %v1547 = vpack.c.bf16 %v1539, %v1539
        %v1548 = vpack.c.bf16 %v1540, %v1540
        %v1549 = vpack.c.bf16 %v1541, %v1541
        %1552 = vrot.lane.b32.xlu0 %v1203, 96
        %v1553 = vpop.permute.xlu0 %1552
        %1554 = vrot.lane.b32.xlu0 %v1207, 96
        %v1555 = vpop.permute.xlu0 %1554
        %1558 = vrot.lane.b32.xlu0 %v1203, 64
        %v1559 = vpop.permute.xlu0 %1558
        %1560 = vrot.lane.b32.xlu0 %v1207, 64
        %v1561 = vpop.permute.xlu0 %1560
        %1564 = vrot.lane.b32.xlu0 %v1203, 32
        %v1565 = vpop.permute.xlu0 %1564
        %1566 = vrot.lane.b32.xlu0 %v1207, 32
        %v1567 = vpop.permute.xlu0 %1566
        %v1570 = vcombine.low %v1203, %v1559
        %v1571 = vcombine.high %v1203, %v1559
        %v1573 = vunpack.c.l.s4 1983009808
        %v1574 = vunpack.c.0.s8 %v1573
        %v1575 = vlaneseq
        %v1576 = vshrl.u32 %v1575, 7
        %v1577 = vsub.s32 %v1574, %v1576
        %v1578 = vrot.slane %v1570, %v1577
        %v1580 = vunpack.c.l.s4 1983009808
        %v1581 = vunpack.c.0.s8 %v1580
        %v1582 = vlaneseq
        %v1583 = vshrl.u32 %v1582, 7
        %v1584 = vsub.s32 %v1581, %v1583
        %v1585 = vrot.slane %v1571, %v1584
        %v1586 = vcombine.low %v1553, %v1565
        %v1587 = vcombine.high %v1553, %v1565
        %v1589 = vunpack.c.l.s4 1983009808
        %v1590 = vunpack.c.0.s8 %v1589
        %v1591 = vlaneseq
        %v1592 = vshrl.u32 %v1591, 7
        %v1593 = vsub.s32 %v1590, %v1592
        %v1594 = vrot.slane %v1586, %v1593
        %v1596 = vunpack.c.l.s4 1983009808
        %v1597 = vunpack.c.0.s8 %v1596
        %v1598 = vlaneseq
        %v1599 = vshrl.u32 %v1598, 7
        %v1600 = vsub.s32 %v1597, %v1599
        %v1601 = vrot.slane %v1587, %v1600
        %v1602 = vcombine.low %v1578, %v1594
        %v1603 = vcombine.high %v1578, %v1594
        %v1605 = vunpack.c.l.s4 1934713408
        %v1606 = vunpack.c.0.s8 %v1605
        %v1607 = vlaneseq
        %v1608 = vshrl.u32 %v1607, 7
        %v1609 = vsub.s32 %v1606, %v1608
        %v1610 = vrot.slane %v1602, %v1609
        %v1612 = vunpack.c.l.s4 1934713408
        %v1613 = vunpack.c.0.s8 %v1612
        %v1614 = vlaneseq
        %v1615 = vshrl.u32 %v1614, 7
        %v1616 = vsub.s32 %v1613, %v1615
        %v1617 = vrot.slane %v1603, %v1616
        %v1618 = vcombine.low %v1585, %v1601
        %v1619 = vcombine.high %v1585, %v1601
        %v1621 = vunpack.c.l.s4 1934713408
        %v1622 = vunpack.c.0.s8 %v1621
        %v1623 = vlaneseq
        %v1624 = vshrl.u32 %v1623, 7
        %v1625 = vsub.s32 %v1622, %v1624
        %v1626 = vrot.slane %v1618, %v1625
        %v1628 = vunpack.c.l.s4 1934713408
        %v1629 = vunpack.c.0.s8 %v1628
        %v1630 = vlaneseq
        %v1631 = vshrl.u32 %v1630, 7
        %v1632 = vsub.s32 %v1629, %v1631
        %v1633 = vrot.slane %v1619, %v1632
        %v1634 = vcombine.high %v1610, 0.0
        %v1635 = vcombine.high %v1617, 0.0
        %v1636 = vcombine.high %v1626, 0.0
        %v1637 = vcombine.high %v1633, 0.0
        %v1638 = vcombine.low %v1207, %v1561
        %v1639 = vcombine.high %v1207, %v1561
        %v1641 = vunpack.c.l.s4 1983009808
        %v1642 = vunpack.c.0.s8 %v1641
        %v1643 = vlaneseq
        %v1644 = vshrl.u32 %v1643, 7
        %v1645 = vsub.s32 %v1642, %v1644
        %v1646 = vrot.slane %v1638, %v1645
        %v1648 = vunpack.c.l.s4 1983009808
        %v1649 = vunpack.c.0.s8 %v1648
        %v1650 = vlaneseq
        %v1651 = vshrl.u32 %v1650, 7
        %v1652 = vsub.s32 %v1649, %v1651
        %v1653 = vrot.slane %v1639, %v1652
        %v1654 = vcombine.low %v1555, %v1567
        %v1655 = vcombine.high %v1555, %v1567
        %v1657 = vunpack.c.l.s4 1983009808
        %v1658 = vunpack.c.0.s8 %v1657
        %v1659 = vlaneseq
        %v1660 = vshrl.u32 %v1659, 7
        %v1661 = vsub.s32 %v1658, %v1660
        %v1662 = vrot.slane %v1654, %v1661
        %v1664 = vunpack.c.l.s4 1983009808
        %v1665 = vunpack.c.0.s8 %v1664
        %v1666 = vlaneseq
        %v1667 = vshrl.u32 %v1666, 7
        %v1668 = vsub.s32 %v1665, %v1667
        %v1669 = vrot.slane %v1655, %v1668
        %v1670 = vcombine.low %v1646, %v1662
        %v1671 = vcombine.high %v1646, %v1662
        %v1673 = vunpack.c.l.s4 1934713408
        %v1674 = vunpack.c.0.s8 %v1673
        %v1675 = vlaneseq
        %v1676 = vshrl.u32 %v1675, 7
        %v1677 = vsub.s32 %v1674, %v1676
        %v1678 = vrot.slane %v1670, %v1677
        %v1680 = vunpack.c.l.s4 1934713408
        %v1681 = vunpack.c.0.s8 %v1680
        %v1682 = vlaneseq
        %v1683 = vshrl.u32 %v1682, 7
        %v1684 = vsub.s32 %v1681, %v1683
        %v1685 = vrot.slane %v1671, %v1684
        %v1686 = vcombine.low %v1653, %v1669
        %v1687 = vcombine.high %v1653, %v1669
        %v1689 = vunpack.c.l.s4 1934713408
        %v1690 = vunpack.c.0.s8 %v1689
        %v1691 = vlaneseq
        %v1692 = vshrl.u32 %v1691, 7
        %v1693 = vsub.s32 %v1690, %v1692
        %v1694 = vrot.slane %v1686, %v1693
        %v1696 = vunpack.c.l.s4 1934713408
        %v1697 = vunpack.c.0.s8 %v1696
        %v1698 = vlaneseq
        %v1699 = vshrl.u32 %v1698, 7
        %v1700 = vsub.s32 %v1697, %v1699
        %v1701 = vrot.slane %v1687, %v1700
        %v1702 = vcombine.high %v1678, 0.0
        %v1703 = vcombine.high %v1685, 0.0
        %v1704 = vcombine.high %v1694, 0.0
        %v1705 = vcombine.high %v1701, 0.0
        %v1706 = vcombine.low %v1610, %v1617
        %v1708 = vunpack.c.l.s4 1983009808
        %v1709 = vunpack.c.0.s8 %v1708
        %v1710 = vlaneseq
        %v1711 = vshrl.u32 %v1710, 7
        %v1712 = vsub.s32 %v1709, %v1711
        %v1713 = vrot.slane %v1706, %v1712
        %v1714 = vcombine.low %v1634, %v1635
        %v1716 = vunpack.c.l.s4 1983009808
        %v1717 = vunpack.c.0.s8 %v1716
        %v1718 = vlaneseq
        %v1719 = vshrl.u32 %v1718, 7
        %v1720 = vsub.s32 %v1717, %v1719
        %v1721 = vrot.slane %v1714, %v1720
        %v1722 = vcombine.low %v1626, %v1633
        %v1724 = vunpack.c.l.s4 1983009808
        %v1725 = vunpack.c.0.s8 %v1724
        %v1726 = vlaneseq
        %v1727 = vshrl.u32 %v1726, 7
        %v1728 = vsub.s32 %v1725, %v1727
        %v1729 = vrot.slane %v1722, %v1728
        %v1730 = vcombine.low %v1636, %v1637
        %v1732 = vunpack.c.l.s4 1983009808
        %v1733 = vunpack.c.0.s8 %v1732
        %v1734 = vlaneseq
        %v1735 = vshrl.u32 %v1734, 7
        %v1736 = vsub.s32 %v1733, %v1735
        %v1737 = vrot.slane %v1730, %v1736
        %v1738 = vcombine.low %v1713, %v1721
        %v1739 = vcombine.high %v1713, %v1721
        %v1741 = vunpack.c.l.s4 1934713408
        %v1742 = vunpack.c.0.s8 %v1741
        %v1743 = vlaneseq
        %v1744 = vshrl.u32 %v1743, 7
        %v1745 = vsub.s32 %v1742, %v1744
        %v1746 = vrot.slane %v1738, %v1745
        %v1748 = vunpack.c.l.s4 1934713408
        %v1749 = vunpack.c.0.s8 %v1748
        %v1750 = vlaneseq
        %v1751 = vshrl.u32 %v1750, 7
        %v1752 = vsub.s32 %v1749, %v1751
        %v1753 = vrot.slane %v1739, %v1752
        %v1754 = vcombine.low %v1729, %v1737
        %v1755 = vcombine.high %v1729, %v1737
        %v1757 = vunpack.c.l.s4 1934713408
        %v1758 = vunpack.c.0.s8 %v1757
        %v1759 = vlaneseq
        %v1760 = vshrl.u32 %v1759, 7
        %v1761 = vsub.s32 %v1758, %v1760
        %v1762 = vrot.slane %v1754, %v1761
        %v1764 = vunpack.c.l.s4 1934713408
        %v1765 = vunpack.c.0.s8 %v1764
        %v1766 = vlaneseq
        %v1767 = vshrl.u32 %v1766, 7
        %v1768 = vsub.s32 %v1765, %v1767
        %v1769 = vrot.slane %v1755, %v1768
        %v1770 = vcombine.low %v1746, %v1762
        %v1771 = vcombine.high %v1746, %v1762
        %v1772 = vcombine.low %v1753, %v1769
        %v1773 = vcombine.high %v1753, %v1769
        %v1774 = vcombine.low %v1678, %v1685
        %v1776 = vunpack.c.l.s4 1983009808
        %v1777 = vunpack.c.0.s8 %v1776
        %v1778 = vlaneseq
        %v1779 = vshrl.u32 %v1778, 7
        %v1780 = vsub.s32 %v1777, %v1779
        %v1781 = vrot.slane %v1774, %v1780
        %v1782 = vcombine.low %v1702, %v1703
        %v1784 = vunpack.c.l.s4 1983009808
        %v1785 = vunpack.c.0.s8 %v1784
        %v1786 = vlaneseq
        %v1787 = vshrl.u32 %v1786, 7
        %v1788 = vsub.s32 %v1785, %v1787
        %v1789 = vrot.slane %v1782, %v1788
        %v1790 = vcombine.low %v1694, %v1701
        %v1792 = vunpack.c.l.s4 1983009808
        %v1793 = vunpack.c.0.s8 %v1792
        %v1794 = vlaneseq
        %v1795 = vshrl.u32 %v1794, 7
        %v1796 = vsub.s32 %v1793, %v1795
        %v1797 = vrot.slane %v1790, %v1796
        %v1798 = vcombine.low %v1704, %v1705
        %v1800 = vunpack.c.l.s4 1983009808
        %v1801 = vunpack.c.0.s8 %v1800
        %v1802 = vlaneseq
        %v1803 = vshrl.u32 %v1802, 7
        %v1804 = vsub.s32 %v1801, %v1803
        %v1805 = vrot.slane %v1798, %v1804
        %v1806 = vcombine.low %v1781, %v1789
        %v1807 = vcombine.high %v1781, %v1789
        %v1809 = vunpack.c.l.s4 1934713408
        %v1810 = vunpack.c.0.s8 %v1809
        %v1811 = vlaneseq
        %v1812 = vshrl.u32 %v1811, 7
        %v1813 = vsub.s32 %v1810, %v1812
        %v1814 = vrot.slane %v1806, %v1813
        %v1816 = vunpack.c.l.s4 1934713408
        %v1817 = vunpack.c.0.s8 %v1816
        %v1818 = vlaneseq
        %v1819 = vshrl.u32 %v1818, 7
        %v1820 = vsub.s32 %v1817, %v1819
        %v1821 = vrot.slane %v1807, %v1820
        %v1822 = vcombine.low %v1797, %v1805
        %v1823 = vcombine.high %v1797, %v1805
        %v1825 = vunpack.c.l.s4 1934713408
        %v1826 = vunpack.c.0.s8 %v1825
        %v1827 = vlaneseq
        %v1828 = vshrl.u32 %v1827, 7
        %v1829 = vsub.s32 %v1826, %v1828
        %v1830 = vrot.slane %v1822, %v1829
        %v1832 = vunpack.c.l.s4 1934713408
        %v1833 = vunpack.c.0.s8 %v1832
        %v1834 = vlaneseq
        %v1835 = vshrl.u32 %v1834, 7
        %v1836 = vsub.s32 %v1833, %v1835
        %v1837 = vrot.slane %v1823, %v1836
        %v1838 = vcombine.low %v1814, %v1830
        %v1839 = vcombine.high %v1814, %v1830
        %v1840 = vcombine.low %v1821, %v1837
        %v1841 = vcombine.high %v1821, %v1837
        %v1842 = vpack.c.bf16 %v1770, %v1770
        %v1843 = vpack.c.bf16 %v1771, %v1771
        %v1844 = vpack.c.bf16 %v1772, %v1772
        %v1845 = vpack.c.bf16 %v1773, %v1773
        %v1846 = vpack.c.bf16 %v1838, %v1838
        %v1847 = vpack.c.bf16 %v1839, %v1839
        %v1848 = vpack.c.bf16 %v1840, %v1840
        %v1849 = vpack.c.bf16 %v1841, %v1841
        %1852 = vrot.lane.b32.xlu0 %v1244, 96
        %v1853 = vpop.permute.xlu0 %1852
        %1854 = vrot.lane.b32.xlu0 %v1247, 96
        %v1855 = vpop.permute.xlu0 %1854
        %1858 = vrot.lane.b32.xlu0 %v1244, 64
        %v1859 = vpop.permute.xlu0 %1858
        %1860 = vrot.lane.b32.xlu0 %v1247, 64
        %v1861 = vpop.permute.xlu0 %1860
        %1864 = vrot.lane.b32.xlu0 %v1244, 32
        %v1865 = vpop.permute.xlu0 %1864
        %1866 = vrot.lane.b32.xlu0 %v1247, 32
        %v1867 = vpop.permute.xlu0 %1866
        %v1870 = vcombine.low %v1244, %v1859
        %v1871 = vcombine.high %v1244, %v1859
        %v1873 = vunpack.c.l.s4 1983009808
        %v1874 = vunpack.c.0.s8 %v1873
        %v1875 = vlaneseq
        %v1876 = vshrl.u32 %v1875, 7
        %v1877 = vsub.s32 %v1874, %v1876
        %v1878 = vrot.slane %v1870, %v1877
        %v1880 = vunpack.c.l.s4 1983009808
        %v1881 = vunpack.c.0.s8 %v1880
        %v1882 = vlaneseq
        %v1883 = vshrl.u32 %v1882, 7
        %v1884 = vsub.s32 %v1881, %v1883
        %v1885 = vrot.slane %v1871, %v1884
        %v1886 = vcombine.low %v1853, %v1865
        %v1887 = vcombine.high %v1853, %v1865
        %v1889 = vunpack.c.l.s4 1983009808
        %v1890 = vunpack.c.0.s8 %v1889
        %v1891 = vlaneseq
        %v1892 = vshrl.u32 %v1891, 7
        %v1893 = vsub.s32 %v1890, %v1892
        %v1894 = vrot.slane %v1886, %v1893
        %v1896 = vunpack.c.l.s4 1983009808
        %v1897 = vunpack.c.0.s8 %v1896
        %v1898 = vlaneseq
        %v1899 = vshrl.u32 %v1898, 7
        %v1900 = vsub.s32 %v1897, %v1899
        %v1901 = vrot.slane %v1887, %v1900
        %v1902 = vcombine.low %v1878, %v1894
        %v1903 = vcombine.high %v1878, %v1894
        %v1905 = vunpack.c.l.s4 1934713408
        %v1906 = vunpack.c.0.s8 %v1905
        %v1907 = vlaneseq
        %v1908 = vshrl.u32 %v1907, 7
        %v1909 = vsub.s32 %v1906, %v1908
        %v1910 = vrot.slane %v1902, %v1909
        %v1912 = vunpack.c.l.s4 1934713408
        %v1913 = vunpack.c.0.s8 %v1912
        %v1914 = vlaneseq
        %v1915 = vshrl.u32 %v1914, 7
        %v1916 = vsub.s32 %v1913, %v1915
        %v1917 = vrot.slane %v1903, %v1916
        %v1918 = vcombine.low %v1885, %v1901
        %v1919 = vcombine.high %v1885, %v1901
        %v1921 = vunpack.c.l.s4 1934713408
        %v1922 = vunpack.c.0.s8 %v1921
        %v1923 = vlaneseq
        %v1924 = vshrl.u32 %v1923, 7
        %v1925 = vsub.s32 %v1922, %v1924
        %v1926 = vrot.slane %v1918, %v1925
        %v1928 = vunpack.c.l.s4 1934713408
        %v1929 = vunpack.c.0.s8 %v1928
        %v1930 = vlaneseq
        %v1931 = vshrl.u32 %v1930, 7
        %v1932 = vsub.s32 %v1929, %v1931
        %v1933 = vrot.slane %v1919, %v1932
        %v1934 = vcombine.high %v1910, 0.0
        %v1935 = vcombine.high %v1917, 0.0
        %v1936 = vcombine.high %v1926, 0.0
        %v1937 = vcombine.high %v1933, 0.0
        %v1938 = vcombine.low %v1247, %v1861
        %v1939 = vcombine.high %v1247, %v1861
        %v1941 = vunpack.c.l.s4 1983009808
        %v1942 = vunpack.c.0.s8 %v1941
        %v1943 = vlaneseq
        %v1944 = vshrl.u32 %v1943, 7
        %v1945 = vsub.s32 %v1942, %v1944
        %v1946 = vrot.slane %v1938, %v1945
        %v1948 = vunpack.c.l.s4 1983009808
        %v1949 = vunpack.c.0.s8 %v1948
        %v1950 = vlaneseq
        %v1951 = vshrl.u32 %v1950, 7
        %v1952 = vsub.s32 %v1949, %v1951
        %v1953 = vrot.slane %v1939, %v1952
        %v1954 = vcombine.low %v1855, %v1867
        %v1955 = vcombine.high %v1855, %v1867
        %v1957 = vunpack.c.l.s4 1983009808
        %v1958 = vunpack.c.0.s8 %v1957
        %v1959 = vlaneseq
        %v1960 = vshrl.u32 %v1959, 7
        %v1961 = vsub.s32 %v1958, %v1960
        %v1962 = vrot.slane %v1954, %v1961
        %v1964 = vunpack.c.l.s4 1983009808
        %v1965 = vunpack.c.0.s8 %v1964
        %v1966 = vlaneseq
        %v1967 = vshrl.u32 %v1966, 7
        %v1968 = vsub.s32 %v1965, %v1967
        %v1969 = vrot.slane %v1955, %v1968
        %v1970 = vcombine.low %v1946, %v1962
        %v1971 = vcombine.high %v1946, %v1962
        %v1973 = vunpack.c.l.s4 1934713408
        %v1974 = vunpack.c.0.s8 %v1973
        %v1975 = vlaneseq
        %v1976 = vshrl.u32 %v1975, 7
        %v1977 = vsub.s32 %v1974, %v1976
        %v1978 = vrot.slane %v1970, %v1977
        %v1980 = vunpack.c.l.s4 1934713408
        %v1981 = vunpack.c.0.s8 %v1980
        %v1982 = vlaneseq
        %v1983 = vshrl.u32 %v1982, 7
        %v1984 = vsub.s32 %v1981, %v1983
        %v1985 = vrot.slane %v1971, %v1984
        %v1986 = vcombine.low %v1953, %v1969
        %v1987 = vcombine.high %v1953, %v1969
        %v1989 = vunpack.c.l.s4 1934713408
        %v1990 = vunpack.c.0.s8 %v1989
        %v1991 = vlaneseq
        %v1992 = vshrl.u32 %v1991, 7
        %v1993 = vsub.s32 %v1990, %v1992
        %v1994 = vrot.slane %v1986, %v1993
        %v1996 = vunpack.c.l.s4 1934713408
        %v1997 = vunpack.c.0.s8 %v1996
        %v1998 = vlaneseq
        %v1999 = vshrl.u32 %v1998, 7
        %v2000 = vsub.s32 %v1997, %v1999
        %v2001 = vrot.slane %v1987, %v2000
        %v2002 = vcombine.high %v1978, 0.0
        %v2003 = vcombine.high %v1985, 0.0
        %v2004 = vcombine.high %v1994, 0.0
        %v2005 = vcombine.high %v2001, 0.0
        %v2006 = vcombine.low %v1910, %v1917
        %v2008 = vunpack.c.l.s4 1983009808
        %v2009 = vunpack.c.0.s8 %v2008
        %v2010 = vlaneseq
        %v2011 = vshrl.u32 %v2010, 7
        %v2012 = vsub.s32 %v2009, %v2011
        %v2013 = vrot.slane %v2006, %v2012
        %v2014 = vcombine.low %v1934, %v1935
        %v2016 = vunpack.c.l.s4 1983009808
        %v2017 = vunpack.c.0.s8 %v2016
        %v2018 = vlaneseq
        %v2019 = vshrl.u32 %v2018, 7
        %v2020 = vsub.s32 %v2017, %v2019
        %v2021 = vrot.slane %v2014, %v2020
        %v2022 = vcombine.low %v1926, %v1933
        %v2024 = vunpack.c.l.s4 1983009808
        %v2025 = vunpack.c.0.s8 %v2024
        %v2026 = vlaneseq
        %v2027 = vshrl.u32 %v2026, 7
        %v2028 = vsub.s32 %v2025, %v2027
        %v2029 = vrot.slane %v2022, %v2028
        %v2030 = vcombine.low %v1936, %v1937
        %v2032 = vunpack.c.l.s4 1983009808
        %v2033 = vunpack.c.0.s8 %v2032
        %v2034 = vlaneseq
        %v2035 = vshrl.u32 %v2034, 7
        %v2036 = vsub.s32 %v2033, %v2035
        %v2037 = vrot.slane %v2030, %v2036
        %v2038 = vcombine.low %v2013, %v2021
        %v2039 = vcombine.high %v2013, %v2021
        %v2041 = vunpack.c.l.s4 1934713408
        %v2042 = vunpack.c.0.s8 %v2041
        %v2043 = vlaneseq
        %v2044 = vshrl.u32 %v2043, 7
        %v2045 = vsub.s32 %v2042, %v2044
        %v2046 = vrot.slane %v2038, %v2045
        %v2048 = vunpack.c.l.s4 1934713408
        %v2049 = vunpack.c.0.s8 %v2048
        %v2050 = vlaneseq
        %v2051 = vshrl.u32 %v2050, 7
        %v2052 = vsub.s32 %v2049, %v2051
        %v2053 = vrot.slane %v2039, %v2052
        %v2054 = vcombine.low %v2029, %v2037
        %v2055 = vcombine.high %v2029, %v2037
        %v2057 = vunpack.c.l.s4 1934713408
        %v2058 = vunpack.c.0.s8 %v2057
        %v2059 = vlaneseq
        %v2060 = vshrl.u32 %v2059, 7
        %v2061 = vsub.s32 %v2058, %v2060
        %v2062 = vrot.slane %v2054, %v2061
        %v2064 = vunpack.c.l.s4 1934713408
        %v2065 = vunpack.c.0.s8 %v2064
        %v2066 = vlaneseq
        %v2067 = vshrl.u32 %v2066, 7
        %v2068 = vsub.s32 %v2065, %v2067
        %v2069 = vrot.slane %v2055, %v2068
        %v2070 = vcombine.low %v2046, %v2062
        %v2071 = vcombine.high %v2046, %v2062
        %v2072 = vcombine.low %v2053, %v2069
        %v2073 = vcombine.high %v2053, %v2069
        %v2074 = vcombine.low %v1978, %v1985
        %v2076 = vunpack.c.l.s4 1983009808
        %v2077 = vunpack.c.0.s8 %v2076
        %v2078 = vlaneseq
        %v2079 = vshrl.u32 %v2078, 7
        %v2080 = vsub.s32 %v2077, %v2079
        %v2081 = vrot.slane %v2074, %v2080
        %v2082 = vcombine.low %v2002, %v2003
        %v2084 = vunpack.c.l.s4 1983009808
        %v2085 = vunpack.c.0.s8 %v2084
        %v2086 = vlaneseq
        %v2087 = vshrl.u32 %v2086, 7
        %v2088 = vsub.s32 %v2085, %v2087
        %v2089 = vrot.slane %v2082, %v2088
        %v2090 = vcombine.low %v1994, %v2001
        %v2092 = vunpack.c.l.s4 1983009808
        %v2093 = vunpack.c.0.s8 %v2092
        %v2094 = vlaneseq
        %v2095 = vshrl.u32 %v2094, 7
        %v2096 = vsub.s32 %v2093, %v2095
        %v2097 = vrot.slane %v2090, %v2096
        %v2098 = vcombine.low %v2004, %v2005
        %v2100 = vunpack.c.l.s4 1983009808
        %v2101 = vunpack.c.0.s8 %v2100
        %v2102 = vlaneseq
        %v2103 = vshrl.u32 %v2102, 7
        %v2104 = vsub.s32 %v2101, %v2103
        %v2105 = vrot.slane %v2098, %v2104
        %v2106 = vcombine.low %v2081, %v2089
        %v2107 = vcombine.high %v2081, %v2089
        %v2109 = vunpack.c.l.s4 1934713408
        %v2110 = vunpack.c.0.s8 %v2109
        %v2111 = vlaneseq
        %v2112 = vshrl.u32 %v2111, 7
        %v2113 = vsub.s32 %v2110, %v2112
        %v2114 = vrot.slane %v2106, %v2113
        %v2116 = vunpack.c.l.s4 1934713408
        %v2117 = vunpack.c.0.s8 %v2116
        %v2118 = vlaneseq
        %v2119 = vshrl.u32 %v2118, 7
        %v2120 = vsub.s32 %v2117, %v2119
        %v2121 = vrot.slane %v2107, %v2120
        %v2122 = vcombine.low %v2097, %v2105
        %v2123 = vcombine.high %v2097, %v2105
        %v2125 = vunpack.c.l.s4 1934713408
        %v2126 = vunpack.c.0.s8 %v2125
        %v2127 = vlaneseq
        %v2128 = vshrl.u32 %v2127, 7
        %v2129 = vsub.s32 %v2126, %v2128
        %v2130 = vrot.slane %v2122, %v2129
        %v2132 = vunpack.c.l.s4 1934713408
        %v2133 = vunpack.c.0.s8 %v2132
        %v2134 = vlaneseq
        %v2135 = vshrl.u32 %v2134, 7
        %v2136 = vsub.s32 %v2133, %v2135
        %v2137 = vrot.slane %v2123, %v2136
        %v2138 = vcombine.low %v2114, %v2130
        %v2139 = vcombine.high %v2114, %v2130
        %v2140 = vcombine.low %v2121, %v2137
        %v2141 = vcombine.high %v2121, %v2137
        %v2142 = vpack.c.bf16 %v2070, %v2070
        %v2143 = vpack.c.bf16 %v2071, %v2071
        %v2144 = vpack.c.bf16 %v2072, %v2072
        %v2145 = vpack.c.bf16 %v2073, %v2073
        %v2146 = vpack.c.bf16 %v2138, %v2138
        %v2147 = vpack.c.bf16 %v2139, %v2139
        %v2148 = vpack.c.bf16 %v2140, %v2140
        %v2149 = vpack.c.bf16 %v2141, %v2141
        %vm2150 = vcmask 261120
        %v2152 = vsel %vm2150, %v1542, 0
        %v2155 = vsel %vm2150, %v1842, 0
        %2157 = vmatprep.subr.bf16.mxu0 0
        %2158 = vmatpush1.bf16.xpose.msra.mxu0 0
        %2159 = vmatprep.subr.bf16.mxu0 0
        %2160 = vmatpush1.bf16.xpose.msra.mxu0 0
        %2161 = vmatprep.subr.bf16.mxu0 0
        %2162 = vmatpush1.bf16.xpose.msra.mxu0 0
        %2163 = vmatprep.subr.bf16.mxu0 0
        %2164 = vmatpush1.bf16.xpose.msra.mxu0 0
        %2165 = vmatprep.subr.bf16.mxu0 0
        %2166 = vmatpush1.bf16.xpose.msra.mxu0 0
        %2167 = vmatprep.subr.bf16.mxu0 0
        %2168 = vmatpush1.bf16.xpose.msra.mxu0 0
        %2169 = vmatprep.subr.bf16.mxu0 0
        %2170 = vmatpush1.bf16.xpose.msra.mxu0 0
        %2171 = vmatprep.subr.bf16.mxu0 0
        %2172 = vmatpush1.bf16.xpose.msra.mxu0 %v2155
        %2173 = vmatprep.subr.bf16.mxu0 0
        %2174 = vmatpush2.bf16.xpose.msra.mxu0 0
        %2175 = vmatprep.subr.bf16.mxu0 0
        %2176 = vmatpush2.bf16.xpose.msra.mxu0 0
        %2177 = vmatprep.subr.bf16.mxu0 0
        %2178 = vmatpush2.bf16.xpose.msra.mxu0 0
        %2179 = vmatprep.subr.bf16.mxu0 0
        %2180 = vmatpush2.bf16.xpose.msra.mxu0 0
        %2181 = vmatprep.subr.bf16.mxu0 0
        %2182 = vmatpush2.bf16.xpose.msra.mxu0 0
        %2183 = vmatprep.subr.bf16.mxu0 0
        %2184 = vmatpush2.bf16.xpose.msra.mxu0 0
        %2185 = vmatprep.subr.bf16.mxu0 0
        %2186 = vmatpush2.bf16.xpose.msra.mxu0 0
        %2187 = vmatprep.subr.bf16.mxu0 0
        %2188 = vmatpush2.bf16.xpose.msra.mxu0 0
        %2189 = vmatprep.mubr.bf16.mxu0 0
        %2190 = vmatmul.mubr.bf16.gmra.mxu0 %v2152
        %v2191 = vpop.f32.mrf.mxu0
        %v2192 = vadd.f32 0.0, %v2191
        %v2193 = vpop.f32.mrf.mxu0
        %v2194 = vpop.f32.mrf.mxu0
        %v2195 = vpop.f32.mrf.mxu0
        %2196 = vdwg.mxu0
        %v2198 = vsel %vm2150, %v1543, 0
        %v2201 = vsel %vm2150, %v1843, 0
        %2203 = vmatprep.subr.bf16.mxu0 0
        %2204 = vmatpush1.bf16.xpose.msra.mxu0 0
        %2205 = vmatprep.subr.bf16.mxu0 0
        %2206 = vmatpush1.bf16.xpose.msra.mxu0 0
        %2207 = vmatprep.subr.bf16.mxu0 0
        %2208 = vmatpush1.bf16.xpose.msra.mxu0 0
        %2209 = vmatprep.subr.bf16.mxu0 0
        %2210 = vmatpush1.bf16.xpose.msra.mxu0 0
        %2211 = vmatprep.subr.bf16.mxu0 0
        %2212 = vmatpush1.bf16.xpose.msra.mxu0 0
        %2213 = vmatprep.subr.bf16.mxu0 0
        %2214 = vmatpush1.bf16.xpose.msra.mxu0 0
        %2215 = vmatprep.subr.bf16.mxu0 0
        %2216 = vmatpush1.bf16.xpose.msra.mxu0 0
        %2217 = vmatprep.subr.bf16.mxu0 0
        %2218 = vmatpush1.bf16.xpose.msra.mxu0 %v2201
        %2219 = vmatprep.subr.bf16.mxu0 0
        %2220 = vmatpush2.bf16.xpose.msra.mxu0 0
        %2221 = vmatprep.subr.bf16.mxu0 0
        %2222 = vmatpush2.bf16.xpose.msra.mxu0 0
        %2223 = vmatprep.subr.bf16.mxu0 0
        %2224 = vmatpush2.bf16.xpose.msra.mxu0 0
        %2225 = vmatprep.subr.bf16.mxu0 0
        %2226 = vmatpush2.bf16.xpose.msra.mxu0 0
        %2227 = vmatprep.subr.bf16.mxu0 0
        %2228 = vmatpush2.bf16.xpose.msra.mxu0 0
        %2229 = vmatprep.subr.bf16.mxu0 0
        %2230 = vmatpush2.bf16.xpose.msra.mxu0 0
        %2231 = vmatprep.subr.bf16.mxu0 0
        %2232 = vmatpush2.bf16.xpose.msra.mxu0 0
        %2233 = vmatprep.subr.bf16.mxu0 0
        %2234 = vmatpush2.bf16.xpose.msra.mxu0 0
        %2235 = vmatprep.mubr.bf16.mxu0 0
        %2236 = vmatmul.mubr.bf16.gmra.mxu0 %v2198
        %v2237 = vpop.f32.mrf.mxu0
        %v2238 = vadd.f32 0.0, %v2237
        %v2239 = vpop.f32.mrf.mxu0
        %v2240 = vpop.f32.mrf.mxu0
        %v2241 = vpop.f32.mrf.mxu0
        %2242 = vdwg.mxu0
        %v2244 = vsel %vm2150, %v1544, 0
        %v2247 = vsel %vm2150, %v1844, 0
        %2249 = vmatprep.subr.bf16.mxu0 0
        %2250 = vmatpush1.bf16.xpose.msra.mxu0 0
        %2251 = vmatprep.subr.bf16.mxu0 0
        %2252 = vmatpush1.bf16.xpose.msra.mxu0 0
        %2253 = vmatprep.subr.bf16.mxu0 0
        %2254 = vmatpush1.bf16.xpose.msra.mxu0 0
        %2255 = vmatprep.subr.bf16.mxu0 0
        %2256 = vmatpush1.bf16.xpose.msra.mxu0 0
        %2257 = vmatprep.subr.bf16.mxu0 0
        %2258 = vmatpush1.bf16.xpose.msra.mxu0 0
        %2259 = vmatprep.subr.bf16.mxu0 0
        %2260 = vmatpush1.bf16.xpose.msra.mxu0 0
        %2261 = vmatprep.subr.bf16.mxu0 0
        %2262 = vmatpush1.bf16.xpose.msra.mxu0 0
        %2263 = vmatprep.subr.bf16.mxu0 0
        %2264 = vmatpush1.bf16.xpose.msra.mxu0 %v2247
        %2265 = vmatprep.subr.bf16.mxu0 0
        %2266 = vmatpush2.bf16.xpose.msra.mxu0 0
        %2267 = vmatprep.subr.bf16.mxu0 0
        %2268 = vmatpush2.bf16.xpose.msra.mxu0 0
        %2269 = vmatprep.subr.bf16.mxu0 0
        %2270 = vmatpush2.bf16.xpose.msra.mxu0 0
        %2271 = vmatprep.subr.bf16.mxu0 0
        %2272 = vmatpush2.bf16.xpose.msra.mxu0 0
        %2273 = vmatprep.subr.bf16.mxu0 0
        %2274 = vmatpush2.bf16.xpose.msra.mxu0 0
        %2275 = vmatprep.subr.bf16.mxu0 0
        %2276 = vmatpush2.bf16.xpose.msra.mxu0 0
        %2277 = vmatprep.subr.bf16.mxu0 0
        %2278 = vmatpush2.bf16.xpose.msra.mxu0 0
        %2279 = vmatprep.subr.bf16.mxu0 0
        %2280 = vmatpush2.bf16.xpose.msra.mxu0 0
        %2281 = vmatprep.mubr.bf16.mxu0 0
        %2282 = vmatmul.mubr.bf16.gmra.mxu0 %v2244
        %v2283 = vpop.f32.mrf.mxu0
        %v2284 = vadd.f32 0.0, %v2283
        %v2285 = vpop.f32.mrf.mxu0
        %v2286 = vpop.f32.mrf.mxu0
        %v2287 = vpop.f32.mrf.mxu0
        %2288 = vdwg.mxu0
        %v2290 = vsel %vm2150, %v1545, 0
        %v2293 = vsel %vm2150, %v1845, 0
        %2295 = vmatprep.subr.bf16.mxu0 0
        %2296 = vmatpush1.bf16.xpose.msra.mxu0 0
        %2297 = vmatprep.subr.bf16.mxu0 0
        %2298 = vmatpush1.bf16.xpose.msra.mxu0 0
        %2299 = vmatprep.subr.bf16.mxu0 0
        %2300 = vmatpush1.bf16.xpose.msra.mxu0 0
        %2301 = vmatprep.subr.bf16.mxu0 0
        %2302 = vmatpush1.bf16.xpose.msra.mxu0 0
        %2303 = vmatprep.subr.bf16.mxu0 0
        %2304 = vmatpush1.bf16.xpose.msra.mxu0 0
        %2305 = vmatprep.subr.bf16.mxu0 0
        %2306 = vmatpush1.bf16.xpose.msra.mxu0 0
        %2307 = vmatprep.subr.bf16.mxu0 0
        %2308 = vmatpush1.bf16.xpose.msra.mxu0 0
        %2309 = vmatprep.subr.bf16.mxu0 0
        %2310 = vmatpush1.bf16.xpose.msra.mxu0 %v2293
        %2311 = vmatprep.subr.bf16.mxu0 0
        %2312 = vmatpush2.bf16.xpose.msra.mxu0 0
        %2313 = vmatprep.subr.bf16.mxu0 0
        %2314 = vmatpush2.bf16.xpose.msra.mxu0 0
        %2315 = vmatprep.subr.bf16.mxu0 0
        %2316 = vmatpush2.bf16.xpose.msra.mxu0 0
        %2317 = vmatprep.subr.bf16.mxu0 0
        %2318 = vmatpush2.bf16.xpose.msra.mxu0 0
        %2319 = vmatprep.subr.bf16.mxu0 0
        %2320 = vmatpush2.bf16.xpose.msra.mxu0 0
        %2321 = vmatprep.subr.bf16.mxu0 0
        %2322 = vmatpush2.bf16.xpose.msra.mxu0 0
        %2323 = vmatprep.subr.bf16.mxu0 0
        %2324 = vmatpush2.bf16.xpose.msra.mxu0 0
        %2325 = vmatprep.subr.bf16.mxu0 0
        %2326 = vmatpush2.bf16.xpose.msra.mxu0 0
        %2327 = vmatprep.mubr.bf16.mxu0 0
        %2328 = vmatmul.mubr.bf16.gmra.mxu0 %v2290
        %v2329 = vpop.f32.mrf.mxu0
        %v2330 = vadd.f32 0.0, %v2329
        %v2331 = vpop.f32.mrf.mxu0
        %v2332 = vpop.f32.mrf.mxu0
        %v2333 = vpop.f32.mrf.mxu0
        %2334 = vdwg.mxu0
        %v2336 = vsel %vm2150, %v1546, 0
        %v2339 = vsel %vm2150, %v1846, 0
        %2341 = vmatprep.subr.bf16.mxu0 0
        %2342 = vmatpush1.bf16.xpose.msra.mxu0 0
        %2343 = vmatprep.subr.bf16.mxu0 0
        %2344 = vmatpush1.bf16.xpose.msra.mxu0 0
        %2345 = vmatprep.subr.bf16.mxu0 0
        %2346 = vmatpush1.bf16.xpose.msra.mxu0 0
        %2347 = vmatprep.subr.bf16.mxu0 0
        %2348 = vmatpush1.bf16.xpose.msra.mxu0 0
        %2349 = vmatprep.subr.bf16.mxu0 0
        %2350 = vmatpush1.bf16.xpose.msra.mxu0 0
        %2351 = vmatprep.subr.bf16.mxu0 0
        %2352 = vmatpush1.bf16.xpose.msra.mxu0 0
        %2353 = vmatprep.subr.bf16.mxu0 0
        %2354 = vmatpush1.bf16.xpose.msra.mxu0 0
        %2355 = vmatprep.subr.bf16.mxu0 0
        %2356 = vmatpush1.bf16.xpose.msra.mxu0 %v2339
        %2357 = vmatprep.subr.bf16.mxu0 0
        %2358 = vmatpush2.bf16.xpose.msra.mxu0 0
        %2359 = vmatprep.subr.bf16.mxu0 0
        %2360 = vmatpush2.bf16.xpose.msra.mxu0 0
        %2361 = vmatprep.subr.bf16.mxu0 0
        %2362 = vmatpush2.bf16.xpose.msra.mxu0 0
        %2363 = vmatprep.subr.bf16.mxu0 0
        %2364 = vmatpush2.bf16.xpose.msra.mxu0 0
        %2365 = vmatprep.subr.bf16.mxu0 0
        %2366 = vmatpush2.bf16.xpose.msra.mxu0 0
        %2367 = vmatprep.subr.bf16.mxu0 0
        %2368 = vmatpush2.bf16.xpose.msra.mxu0 0
        %2369 = vmatprep.subr.bf16.mxu0 0
        %2370 = vmatpush2.bf16.xpose.msra.mxu0 0
        %2371 = vmatprep.subr.bf16.mxu0 0
        %2372 = vmatpush2.bf16.xpose.msra.mxu0 0
        %2373 = vmatprep.mubr.bf16.mxu0 0
        %2374 = vmatmul.mubr.bf16.gmra.mxu0 %v2336
        %v2375 = vpop.f32.mrf.mxu0
        %v2376 = vadd.f32 0.0, %v2375
        %v2377 = vpop.f32.mrf.mxu0
        %v2378 = vpop.f32.mrf.mxu0
        %v2379 = vpop.f32.mrf.mxu0
        %2380 = vdwg.mxu0
        %v2382 = vsel %vm2150, %v1547, 0
        %v2385 = vsel %vm2150, %v1847, 0
        %2387 = vmatprep.subr.bf16.mxu0 0
        %2388 = vmatpush1.bf16.xpose.msra.mxu0 0
        %2389 = vmatprep.subr.bf16.mxu0 0
        %2390 = vmatpush1.bf16.xpose.msra.mxu0 0
        %2391 = vmatprep.subr.bf16.mxu0 0
        %2392 = vmatpush1.bf16.xpose.msra.mxu0 0
        %2393 = vmatprep.subr.bf16.mxu0 0
        %2394 = vmatpush1.bf16.xpose.msra.mxu0 0
        %2395 = vmatprep.subr.bf16.mxu0 0
        %2396 = vmatpush1.bf16.xpose.msra.mxu0 0
        %2397 = vmatprep.subr.bf16.mxu0 0
        %2398 = vmatpush1.bf16.xpose.msra.mxu0 0
        %2399 = vmatprep.subr.bf16.mxu0 0
        %2400 = vmatpush1.bf16.xpose.msra.mxu0 0
        %2401 = vmatprep.subr.bf16.mxu0 0
        %2402 = vmatpush1.bf16.xpose.msra.mxu0 %v2385
        %2403 = vmatprep.subr.bf16.mxu0 0
        %2404 = vmatpush2.bf16.xpose.msra.mxu0 0
        %2405 = vmatprep.subr.bf16.mxu0 0
        %2406 = vmatpush2.bf16.xpose.msra.mxu0 0
        %2407 = vmatprep.subr.bf16.mxu0 0
        %2408 = vmatpush2.bf16.xpose.msra.mxu0 0
        %2409 = vmatprep.subr.bf16.mxu0 0
        %2410 = vmatpush2.bf16.xpose.msra.mxu0 0
        %2411 = vmatprep.subr.bf16.mxu0 0
        %2412 = vmatpush2.bf16.xpose.msra.mxu0 0
        %2413 = vmatprep.subr.bf16.mxu0 0
        %2414 = vmatpush2.bf16.xpose.msra.mxu0 0
        %2415 = vmatprep.subr.bf16.mxu0 0
        %2416 = vmatpush2.bf16.xpose.msra.mxu0 0
        %2417 = vmatprep.subr.bf16.mxu0 0
        %2418 = vmatpush2.bf16.xpose.msra.mxu0 0
        %2419 = vmatprep.mubr.bf16.mxu0 0
        %2420 = vmatmul.mubr.bf16.gmra.mxu0 %v2382
        %v2421 = vpop.f32.mrf.mxu0
        %v2422 = vadd.f32 0.0, %v2421
        %v2423 = vpop.f32.mrf.mxu0
        %v2424 = vpop.f32.mrf.mxu0
        %v2425 = vpop.f32.mrf.mxu0
        %2426 = vdwg.mxu0
        %v2428 = vsel %vm2150, %v1548, 0
        %v2431 = vsel %vm2150, %v1848, 0
        %2433 = vmatprep.subr.bf16.mxu0 0
        %2434 = vmatpush1.bf16.xpose.msra.mxu0 0
        %2435 = vmatprep.subr.bf16.mxu0 0
        %2436 = vmatpush1.bf16.xpose.msra.mxu0 0
        %2437 = vmatprep.subr.bf16.mxu0 0
        %2438 = vmatpush1.bf16.xpose.msra.mxu0 0
        %2439 = vmatprep.subr.bf16.mxu0 0
        %2440 = vmatpush1.bf16.xpose.msra.mxu0 0
        %2441 = vmatprep.subr.bf16.mxu0 0
        %2442 = vmatpush1.bf16.xpose.msra.mxu0 0
        %2443 = vmatprep.subr.bf16.mxu0 0
        %2444 = vmatpush1.bf16.xpose.msra.mxu0 0
        %2445 = vmatprep.subr.bf16.mxu0 0
        %2446 = vmatpush1.bf16.xpose.msra.mxu0 0
        %2447 = vmatprep.subr.bf16.mxu0 0
        %2448 = vmatpush1.bf16.xpose.msra.mxu0 %v2431
        %2449 = vmatprep.subr.bf16.mxu0 0
        %2450 = vmatpush2.bf16.xpose.msra.mxu0 0
        %2451 = vmatprep.subr.bf16.mxu0 0
        %2452 = vmatpush2.bf16.xpose.msra.mxu0 0
        %2453 = vmatprep.subr.bf16.mxu0 0
        %2454 = vmatpush2.bf16.xpose.msra.mxu0 0
        %2455 = vmatprep.subr.bf16.mxu0 0
        %2456 = vmatpush2.bf16.xpose.msra.mxu0 0
        %2457 = vmatprep.subr.bf16.mxu0 0
        %2458 = vmatpush2.bf16.xpose.msra.mxu0 0
        %2459 = vmatprep.subr.bf16.mxu0 0
        %2460 = vmatpush2.bf16.xpose.msra.mxu0 0
        %2461 = vmatprep.subr.bf16.mxu0 0
        %2462 = vmatpush2.bf16.xpose.msra.mxu0 0
        %2463 = vmatprep.subr.bf16.mxu0 0
        %2464 = vmatpush2.bf16.xpose.msra.mxu0 0
        %2465 = vmatprep.mubr.bf16.mxu0 0
        %2466 = vmatmul.mubr.bf16.gmra.mxu0 %v2428
        %v2467 = vpop.f32.mrf.mxu0
        %v2468 = vadd.f32 0.0, %v2467
        %v2469 = vpop.f32.mrf.mxu0
        %v2470 = vpop.f32.mrf.mxu0
        %v2471 = vpop.f32.mrf.mxu0
        %2472 = vdwg.mxu0
        %v2474 = vsel %vm2150, %v1549, 0
        %v2477 = vsel %vm2150, %v1849, 0
        %2479 = vmatprep.subr.bf16.mxu0 0
        %2480 = vmatpush1.bf16.xpose.msra.mxu0 0
        %2481 = vmatprep.subr.bf16.mxu0 0
        %2482 = vmatpush1.bf16.xpose.msra.mxu0 0
        %2483 = vmatprep.subr.bf16.mxu0 0
        %2484 = vmatpush1.bf16.xpose.msra.mxu0 0
        %2485 = vmatprep.subr.bf16.mxu0 0
        %2486 = vmatpush1.bf16.xpose.msra.mxu0 0
        %2487 = vmatprep.subr.bf16.mxu0 0
        %2488 = vmatpush1.bf16.xpose.msra.mxu0 0
        %2489 = vmatprep.subr.bf16.mxu0 0
        %2490 = vmatpush1.bf16.xpose.msra.mxu0 0
        %2491 = vmatprep.subr.bf16.mxu0 0
        %2492 = vmatpush1.bf16.xpose.msra.mxu0 0
        %2493 = vmatprep.subr.bf16.mxu0 0
        %2494 = vmatpush1.bf16.xpose.msra.mxu0 %v2477
        %2495 = vmatprep.subr.bf16.mxu0 0
        %2496 = vmatpush2.bf16.xpose.msra.mxu0 0
        %2497 = vmatprep.subr.bf16.mxu0 0
        %2498 = vmatpush2.bf16.xpose.msra.mxu0 0
        %2499 = vmatprep.subr.bf16.mxu0 0
        %2500 = vmatpush2.bf16.xpose.msra.mxu0 0
        %2501 = vmatprep.subr.bf16.mxu0 0
        %2502 = vmatpush2.bf16.xpose.msra.mxu0 0
        %2503 = vmatprep.subr.bf16.mxu0 0
        %2504 = vmatpush2.bf16.xpose.msra.mxu0 0
        %2505 = vmatprep.subr.bf16.mxu0 0
        %2506 = vmatpush2.bf16.xpose.msra.mxu0 0
        %2507 = vmatprep.subr.bf16.mxu0 0
        %2508 = vmatpush2.bf16.xpose.msra.mxu0 0
        %2509 = vmatprep.subr.bf16.mxu0 0
        %2510 = vmatpush2.bf16.xpose.msra.mxu0 0
        %2511 = vmatprep.mubr.bf16.mxu0 0
        %2512 = vmatmul.mubr.bf16.gmra.mxu0 %v2474
        %v2513 = vpop.f32.mrf.mxu0
        %v2514 = vadd.f32 0.0, %v2513
        %v2515 = vpop.f32.mrf.mxu0
        %v2516 = vpop.f32.mrf.mxu0
        %v2517 = vpop.f32.mrf.mxu0
        %2518 = vdwg.mxu0
        %v2519 = vmul.f32 %v2192, 0.17677669
        %v2520 = vmul.f32 %v2238, 0.17677669
        %v2521 = vmul.f32 %v2284, 0.17677669
        %v2522 = vmul.f32 %v2330, 0.17677669
        %v2523 = vmul.f32 %v2376, 0.17677669
        %v2524 = vmul.f32 %v2422, 0.17677669
        %v2525 = vmul.f32 %v2468, 0.17677669
        %v2526 = vmul.f32 %v2514, 0.17677669
        %v2527 = vld [vmem:[%s1] sm:$0x1]
        %v2528 = vld [vmem:[%s1 + $0x1] sm:$0x1]
        %v2529 = vld [vmem:[%s1 + $0x2] sm:$0x1]
        %v2530 = vld [vmem:[%s1 + $0x3] sm:$0x1]
        %v2531 = vld [vmem:[%s1 + $0x4] sm:$0x1]
        %v2532 = vld [vmem:[%s1 + $0x5] sm:$0x1]
        %v2533 = vld [vmem:[%s1 + $0x6] sm:$0x1]
        %v2534 = vld [vmem:[%s1 + $0x7] sm:$0x1]
        %v2543 = vlaneseq
        %v2544 = vshrl.u32 %v2543, 7
        %v2545 = vsub.s32 0, %v2544
        %v2546 = vrot.slane %v2527, %v2545
        %v2547 = vlaneseq
        %v2548 = vshrl.u32 %v2547, 7
        %v2549 = vsub.s32 0, %v2548
        %v2550 = vrot.slane %v2528, %v2549
        %v2551 = vlaneseq
        %v2552 = vshrl.u32 %v2551, 7
        %v2553 = vsub.s32 0, %v2552
        %v2554 = vrot.slane %v2529, %v2553
        %v2555 = vlaneseq
        %v2556 = vshrl.u32 %v2555, 7
        %v2557 = vsub.s32 0, %v2556
        %v2558 = vrot.slane %v2530, %v2557
        %v2559 = vlaneseq
        %v2560 = vshrl.u32 %v2559, 7
        %v2561 = vsub.s32 0, %v2560
        %v2562 = vrot.slane %v2531, %v2561
        %v2563 = vlaneseq
        %v2564 = vshrl.u32 %v2563, 7
        %v2565 = vsub.s32 0, %v2564
        %v2566 = vrot.slane %v2532, %v2565
        %v2567 = vlaneseq
        %v2568 = vshrl.u32 %v2567, 7
        %v2569 = vsub.s32 0, %v2568
        %v2570 = vrot.slane %v2533, %v2569
        %v2571 = vlaneseq
        %v2572 = vshrl.u32 %v2571, 7
        %v2573 = vsub.s32 0, %v2572
        %v2574 = vrot.slane %v2534, %v2573
        %v2583 = vadd.f32 %v2519, %v2546
        %v2584 = vadd.f32 %v2520, %v2550
        %v2585 = vadd.f32 %v2521, %v2554
        %v2586 = vadd.f32 %v2522, %v2558
        %v2587 = vadd.f32 %v2523, %v2562
        %v2588 = vadd.f32 %v2524, %v2566
        %v2589 = vadd.f32 %v2525, %v2570
        %v2590 = vadd.f32 %v2526, %v2574
        %vm2591 = vcmask 64512
        %v2592 = vsel %vm2591, %v2583, -inf
        %2593 = vmax.xlane.f32.xlu0 %v2592
        %v2594 = vpop.xlane.xlu0 %2593
        %v2595 = vsel %vm2591, %v2584, -inf
        %2596 = vmax.xlane.f32.xlu0 %v2595
        %v2597 = vpop.xlane.xlu0 %2596
        %v2598 = vsel %vm2591, %v2585, -inf
        %2599 = vmax.xlane.f32.xlu0 %v2598
        %v2600 = vpop.xlane.xlu0 %2599
        %v2601 = vsel %vm2591, %v2586, -inf
        %2602 = vmax.xlane.f32.xlu0 %v2601
        %v2603 = vpop.xlane.xlu0 %2602
        %v2604 = vsel %vm2591, %v2587, -inf
        %2605 = vmax.xlane.f32.xlu0 %v2604
        %v2606 = vpop.xlane.xlu0 %2605
        %v2607 = vsel %vm2591, %v2588, -inf
        %2608 = vmax.xlane.f32.xlu0 %v2607
        %v2609 = vpop.xlane.xlu0 %2608
        %v2610 = vsel %vm2591, %v2589, -inf
        %2611 = vmax.xlane.f32.xlu0 %v2610
        %v2612 = vpop.xlane.xlu0 %2611
        %v2613 = vsel %vm2591, %v2590, -inf
        %2614 = vmax.xlane.f32.xlu0 %v2613
        %v2615 = vpop.xlane.xlu0 %2614
        %v2616 = vsub.f32 %v2583, %v2594
        %v2617 = vsub.f32 %v2584, %v2597
        %v2618 = vsub.f32 %v2585, %v2600
        %v2619 = vsub.f32 %v2586, %v2603
        %v2620 = vsub.f32 %v2587, %v2606
        %v2621 = vsub.f32 %v2588, %v2609
        %v2622 = vsub.f32 %v2589, %v2612
        %v2623 = vsub.f32 %v2590, %v2615
        %v2624 = vmul.f32 %v2616, 1.442695
        %v2625 = vpow.pop %v2624
        %v2626 = vmul.f32 %v2617, 1.442695
        %v2627 = vpow.pop %v2626
        %v2628 = vmul.f32 %v2618, 1.442695
        %v2629 = vpow.pop %v2628
        %v2630 = vmul.f32 %v2619, 1.442695
        %v2631 = vpow.pop %v2630
        %v2632 = vmul.f32 %v2620, 1.442695
        %v2633 = vpow.pop %v2632
        %v2634 = vmul.f32 %v2621, 1.442695
        %v2635 = vpow.pop %v2634
        %v2636 = vmul.f32 %v2622, 1.442695
        %v2637 = vpow.pop %v2636
        %v2638 = vmul.f32 %v2623, 1.442695
        %v2639 = vpow.pop %v2638
        %v2640 = vsel %vm2591, %v2625, 0.0
        %2641 = vadd.xlane.f32.xlu0 %v2640
        %v2642 = vpop.xlane.xlu0 %2641
        %v2643 = vsel %vm2591, %v2627, 0.0
        %2644 = vadd.xlane.f32.xlu0 %v2643
        %v2645 = vpop.xlane.xlu0 %2644
        %v2646 = vsel %vm2591, %v2629, 0.0
        %2647 = vadd.xlane.f32.xlu0 %v2646
        %v2648 = vpop.xlane.xlu0 %2647
        %v2649 = vsel %vm2591, %v2631, 0.0
        %2650 = vadd.xlane.f32.xlu0 %v2649
        %v2651 = vpop.xlane.xlu0 %2650
        %v2652 = vsel %vm2591, %v2633, 0.0
        %2653 = vadd.xlane.f32.xlu0 %v2652
        %v2654 = vpop.xlane.xlu0 %2653
        %v2655 = vsel %vm2591, %v2635, 0.0
        %2656 = vadd.xlane.f32.xlu0 %v2655
        %v2657 = vpop.xlane.xlu0 %2656
        %v2658 = vsel %vm2591, %v2637, 0.0
        %2659 = vadd.xlane.f32.xlu0 %v2658
        %v2660 = vpop.xlane.xlu0 %2659
        %v2661 = vsel %vm2591, %v2639, 0.0
        %2662 = vadd.xlane.f32.xlu0 %v2661
        %v2663 = vpop.xlane.xlu0 %2662
        %v2664 = vrcp.pop %v2642
        %v2665 = vrcp.pop %v2645
        %v2666 = vrcp.pop %v2648
        %v2667 = vrcp.pop %v2651
        %v2668 = vrcp.pop %v2654
        %v2669 = vrcp.pop %v2657
        %v2670 = vrcp.pop %v2660
        %v2671 = vrcp.pop %v2663
        %v2672 = vmul.f32 %v2625, %v2664
        %v2673 = vmul.f32 %v2627, %v2665
        %v2674 = vmul.f32 %v2629, %v2666
        %v2675 = vmul.f32 %v2631, %v2667
        %v2676 = vmul.f32 %v2633, %v2668
        %v2677 = vmul.f32 %v2635, %v2669
        %v2678 = vmul.f32 %v2637, %v2670
        %v2679 = vmul.f32 %v2639, %v2671
        %v2680 = vpack.c.bf16 %v2672, %v2672
        %v2681 = vpack.c.bf16 %v2673, %v2673
        %v2682 = vpack.c.bf16 %v2674, %v2674
        %v2683 = vpack.c.bf16 %v2675, %v2675
        %v2684 = vpack.c.bf16 %v2676, %v2676
        %v2685 = vpack.c.bf16 %v2677, %v2677
        %v2686 = vpack.c.bf16 %v2678, %v2678
        %v2687 = vpack.c.bf16 %v2679, %v2679
        %v2689 = vsel %vm2591, %v2680, 0
        %vm2691 = vcmask 1043456
        %v2693 = vsel %vm2691, %v2142, 0
        %2695 = vmatprep.subr.bf16.mxu0 0
        %2696 = vmatpush1.bf16.msra.mxu0 0
        %2697 = vmatprep.subr.bf16.mxu0 0
        %2698 = vmatpush1.bf16.msra.mxu0 0
        %2699 = vmatprep.subr.bf16.mxu0 0
        %2700 = vmatpush1.bf16.msra.mxu0 0
        %2701 = vmatprep.subr.bf16.mxu0 0
        %2702 = vmatpush1.bf16.msra.mxu0 0
        %2703 = vmatprep.subr.bf16.mxu0 0
        %2704 = vmatpush1.bf16.msra.mxu0 0
        %2705 = vmatprep.subr.bf16.mxu0 0
        %2706 = vmatpush1.bf16.msra.mxu0 0
        %2707 = vmatprep.subr.bf16.mxu0 0
        %2708 = vmatpush1.bf16.msra.mxu0 0
        %2709 = vmatprep.subr.bf16.mxu0 0
        %2710 = vmatpush1.bf16.msra.mxu0 %v2693
        %2711 = vmatprep.subr.bf16.mxu0 0
        %2712 = vmatpush2.bf16.msra.mxu0 0
        %2713 = vmatprep.subr.bf16.mxu0 0
        %2714 = vmatpush2.bf16.msra.mxu0 0
        %2715 = vmatprep.subr.bf16.mxu0 0
        %2716 = vmatpush2.bf16.msra.mxu0 0
        %2717 = vmatprep.subr.bf16.mxu0 0
        %2718 = vmatpush2.bf16.msra.mxu0 0
        %2719 = vmatprep.subr.bf16.mxu0 0
        %2720 = vmatpush2.bf16.msra.mxu0 0
        %2721 = vmatprep.subr.bf16.mxu0 0
        %2722 = vmatpush2.bf16.msra.mxu0 0
        %2723 = vmatprep.subr.bf16.mxu0 0
        %2724 = vmatpush2.bf16.msra.mxu0 0
        %2725 = vmatprep.subr.bf16.mxu0 0
        %2726 = vmatpush2.bf16.msra.mxu0 0
        %2727 = vmatprep.mubr.bf16.mxu0 0
        %2728 = vmatmul.mubr.bf16.gmra.mxu0 %v2689
        %v2729 = vpop.f32.mrf.mxu0
        %v2730 = vadd.f32 0.0, %v2729
        %v2731 = vpop.f32.mrf.mxu0
        %v2732 = vpop.f32.mrf.mxu0
        %v2733 = vpop.f32.mrf.mxu0
        %2734 = vdwg.mxu0
        %v2736 = vsel %vm2591, %v2681, 0
        %v2739 = vsel %vm2691, %v2143, 0
        %2741 = vmatprep.subr.bf16.mxu0 0
        %2742 = vmatpush1.bf16.msra.mxu0 0
        %2743 = vmatprep.subr.bf16.mxu0 0
        %2744 = vmatpush1.bf16.msra.mxu0 0
        %2745 = vmatprep.subr.bf16.mxu0 0
        %2746 = vmatpush1.bf16.msra.mxu0 0
        %2747 = vmatprep.subr.bf16.mxu0 0
        %2748 = vmatpush1.bf16.msra.mxu0 0
        %2749 = vmatprep.subr.bf16.mxu0 0
        %2750 = vmatpush1.bf16.msra.mxu0 0
        %2751 = vmatprep.subr.bf16.mxu0 0
        %2752 = vmatpush1.bf16.msra.mxu0 0
        %2753 = vmatprep.subr.bf16.mxu0 0
        %2754 = vmatpush1.bf16.msra.mxu0 0
        %2755 = vmatprep.subr.bf16.mxu0 0
        %2756 = vmatpush1.bf16.msra.mxu0 %v2739
        %2757 = vmatprep.subr.bf16.mxu0 0
        %2758 = vmatpush2.bf16.msra.mxu0 0
        %2759 = vmatprep.subr.bf16.mxu0 0
        %2760 = vmatpush2.bf16.msra.mxu0 0
        %2761 = vmatprep.subr.bf16.mxu0 0
        %2762 = vmatpush2.bf16.msra.mxu0 0
        %2763 = vmatprep.subr.bf16.mxu0 0
        %2764 = vmatpush2.bf16.msra.mxu0 0
        %2765 = vmatprep.subr.bf16.mxu0 0
        %2766 = vmatpush2.bf16.msra.mxu0 0
        %2767 = vmatprep.subr.bf16.mxu0 0
        %2768 = vmatpush2.bf16.msra.mxu0 0
        %2769 = vmatprep.subr.bf16.mxu0 0
        %2770 = vmatpush2.bf16.msra.mxu0 0
        %2771 = vmatprep.subr.bf16.mxu0 0
        %2772 = vmatpush2.bf16.msra.mxu0 0
        %2773 = vmatprep.mubr.bf16.mxu0 0
        %2774 = vmatmul.mubr.bf16.gmra.mxu0 %v2736
        %v2775 = vpop.f32.mrf.mxu0
        %v2776 = vadd.f32 0.0, %v2775
        %v2777 = vpop.f32.mrf.mxu0
        %v2778 = vpop.f32.mrf.mxu0
        %v2779 = vpop.f32.mrf.mxu0
        %2780 = vdwg.mxu0
        %v2782 = vsel %vm2591, %v2682, 0
        %v2785 = vsel %vm2691, %v2144, 0
        %2787 = vmatprep.subr.bf16.mxu0 0
        %2788 = vmatpush1.bf16.msra.mxu0 0
        %2789 = vmatprep.subr.bf16.mxu0 0
        %2790 = vmatpush1.bf16.msra.mxu0 0
        %2791 = vmatprep.subr.bf16.mxu0 0
        %2792 = vmatpush1.bf16.msra.mxu0 0
        %2793 = vmatprep.subr.bf16.mxu0 0
        %2794 = vmatpush1.bf16.msra.mxu0 0
        %2795 = vmatprep.subr.bf16.mxu0 0
        %2796 = vmatpush1.bf16.msra.mxu0 0
        %2797 = vmatprep.subr.bf16.mxu0 0
        %2798 = vmatpush1.bf16.msra.mxu0 0
        %2799 = vmatprep.subr.bf16.mxu0 0
        %2800 = vmatpush1.bf16.msra.mxu0 0
        %2801 = vmatprep.subr.bf16.mxu0 0
        %2802 = vmatpush1.bf16.msra.mxu0 %v2785
        %2803 = vmatprep.subr.bf16.mxu0 0
        %2804 = vmatpush2.bf16.msra.mxu0 0
        %2805 = vmatprep.subr.bf16.mxu0 0
        %2806 = vmatpush2.bf16.msra.mxu0 0
        %2807 = vmatprep.subr.bf16.mxu0 0
        %2808 = vmatpush2.bf16.msra.mxu0 0
        %2809 = vmatprep.subr.bf16.mxu0 0
        %2810 = vmatpush2.bf16.msra.mxu0 0
        %2811 = vmatprep.subr.bf16.mxu0 0
        %2812 = vmatpush2.bf16.msra.mxu0 0
        %2813 = vmatprep.subr.bf16.mxu0 0
        %2814 = vmatpush2.bf16.msra.mxu0 0
        %2815 = vmatprep.subr.bf16.mxu0 0
        %2816 = vmatpush2.bf16.msra.mxu0 0
        %2817 = vmatprep.subr.bf16.mxu0 0
        %2818 = vmatpush2.bf16.msra.mxu0 0
        %2819 = vmatprep.mubr.bf16.mxu0 0
        %2820 = vmatmul.mubr.bf16.gmra.mxu0 %v2782
        %v2821 = vpop.f32.mrf.mxu0
        %v2822 = vadd.f32 0.0, %v2821
        %v2823 = vpop.f32.mrf.mxu0
        %v2824 = vpop.f32.mrf.mxu0
        %v2825 = vpop.f32.mrf.mxu0
        %2826 = vdwg.mxu0
        %v2828 = vsel %vm2591, %v2683, 0
        %v2831 = vsel %vm2691, %v2145, 0
        %2833 = vmatprep.subr.bf16.mxu0 0
        %2834 = vmatpush1.bf16.msra.mxu0 0
        %2835 = vmatprep.subr.bf16.mxu0 0
        %2836 = vmatpush1.bf16.msra.mxu0 0
        %2837 = vmatprep.subr.bf16.mxu0 0
        %2838 = vmatpush1.bf16.msra.mxu0 0
        %2839 = vmatprep.subr.bf16.mxu0 0
        %2840 = vmatpush1.bf16.msra.mxu0 0
        %2841 = vmatprep.subr.bf16.mxu0 0
        %2842 = vmatpush1.bf16.msra.mxu0 0
        %2843 = vmatprep.subr.bf16.mxu0 0
        %2844 = vmatpush1.bf16.msra.mxu0 0
        %2845 = vmatprep.subr.bf16.mxu0 0
        %2846 = vmatpush1.bf16.msra.mxu0 0
        %2847 = vmatprep.subr.bf16.mxu0 0
        %2848 = vmatpush1.bf16.msra.mxu0 %v2831
        %2849 = vmatprep.subr.bf16.mxu0 0
        %2850 = vmatpush2.bf16.msra.mxu0 0
        %2851 = vmatprep.subr.bf16.mxu0 0
        %2852 = vmatpush2.bf16.msra.mxu0 0
        %2853 = vmatprep.subr.bf16.mxu0 0
        %2854 = vmatpush2.bf16.msra.mxu0 0
        %2855 = vmatprep.subr.bf16.mxu0 0
        %2856 = vmatpush2.bf16.msra.mxu0 0
        %2857 = vmatprep.subr.bf16.mxu0 0
        %2858 = vmatpush2.bf16.msra.mxu0 0
        %2859 = vmatprep.subr.bf16.mxu0 0
        %2860 = vmatpush2.bf16.msra.mxu0 0
        %2861 = vmatprep.subr.bf16.mxu0 0
        %2862 = vmatpush2.bf16.msra.mxu0 0
        %2863 = vmatprep.subr.bf16.mxu0 0
        %2864 = vmatpush2.bf16.msra.mxu0 0
        %2865 = vmatprep.mubr.bf16.mxu0 0
        %2866 = vmatmul.mubr.bf16.gmra.mxu0 %v2828
        %v2867 = vpop.f32.mrf.mxu0
        %v2868 = vadd.f32 0.0, %v2867
        %v2869 = vpop.f32.mrf.mxu0
        %v2870 = vpop.f32.mrf.mxu0
        %v2871 = vpop.f32.mrf.mxu0
        %2872 = vdwg.mxu0
        %v2874 = vsel %vm2591, %v2684, 0
        %v2877 = vsel %vm2691, %v2146, 0
        %2879 = vmatprep.subr.bf16.mxu0 0
        %2880 = vmatpush1.bf16.msra.mxu0 0
        %2881 = vmatprep.subr.bf16.mxu0 0
        %2882 = vmatpush1.bf16.msra.mxu0 0
        %2883 = vmatprep.subr.bf16.mxu0 0
        %2884 = vmatpush1.bf16.msra.mxu0 0
        %2885 = vmatprep.subr.bf16.mxu0 0
        %2886 = vmatpush1.bf16.msra.mxu0 0
        %2887 = vmatprep.subr.bf16.mxu0 0
        %2888 = vmatpush1.bf16.msra.mxu0 0
        %2889 = vmatprep.subr.bf16.mxu0 0
        %2890 = vmatpush1.bf16.msra.mxu0 0
        %2891 = vmatprep.subr.bf16.mxu0 0
        %2892 = vmatpush1.bf16.msra.mxu0 0
        %2893 = vmatprep.subr.bf16.mxu0 0
        %2894 = vmatpush1.bf16.msra.mxu0 %v2877
        %2895 = vmatprep.subr.bf16.mxu0 0
        %2896 = vmatpush2.bf16.msra.mxu0 0
        %2897 = vmatprep.subr.bf16.mxu0 0
        %2898 = vmatpush2.bf16.msra.mxu0 0
        %2899 = vmatprep.subr.bf16.mxu0 0
        %2900 = vmatpush2.bf16.msra.mxu0 0
        %2901 = vmatprep.subr.bf16.mxu0 0
        %2902 = vmatpush2.bf16.msra.mxu0 0
        %2903 = vmatprep.subr.bf16.mxu0 0
        %2904 = vmatpush2.bf16.msra.mxu0 0
        %2905 = vmatprep.subr.bf16.mxu0 0
        %2906 = vmatpush2.bf16.msra.mxu0 0
        %2907 = vmatprep.subr.bf16.mxu0 0
        %2908 = vmatpush2.bf16.msra.mxu0 0
        %2909 = vmatprep.subr.bf16.mxu0 0
        %2910 = vmatpush2.bf16.msra.mxu0 0
        %2911 = vmatprep.mubr.bf16.mxu0 0
        %2912 = vmatmul.mubr.bf16.gmra.mxu0 %v2874
        %v2913 = vpop.f32.mrf.mxu0
        %v2914 = vadd.f32 0.0, %v2913
        %v2915 = vpop.f32.mrf.mxu0
        %v2916 = vpop.f32.mrf.mxu0
        %v2917 = vpop.f32.mrf.mxu0
        %2918 = vdwg.mxu0
        %v2920 = vsel %vm2591, %v2685, 0
        %v2923 = vsel %vm2691, %v2147, 0
        %2925 = vmatprep.subr.bf16.mxu0 0
        %2926 = vmatpush1.bf16.msra.mxu0 0
        %2927 = vmatprep.subr.bf16.mxu0 0
        %2928 = vmatpush1.bf16.msra.mxu0 0
        %2929 = vmatprep.subr.bf16.mxu0 0
        %2930 = vmatpush1.bf16.msra.mxu0 0
        %2931 = vmatprep.subr.bf16.mxu0 0
        %2932 = vmatpush1.bf16.msra.mxu0 0
        %2933 = vmatprep.subr.bf16.mxu0 0
        %2934 = vmatpush1.bf16.msra.mxu0 0
        %2935 = vmatprep.subr.bf16.mxu0 0
        %2936 = vmatpush1.bf16.msra.mxu0 0
        %2937 = vmatprep.subr.bf16.mxu0 0
        %2938 = vmatpush1.bf16.msra.mxu0 0
        %2939 = vmatprep.subr.bf16.mxu0 0
        %2940 = vmatpush1.bf16.msra.mxu0 %v2923
        %2941 = vmatprep.subr.bf16.mxu0 0
        %2942 = vmatpush2.bf16.msra.mxu0 0
        %2943 = vmatprep.subr.bf16.mxu0 0
        %2944 = vmatpush2.bf16.msra.mxu0 0
        %2945 = vmatprep.subr.bf16.mxu0 0
        %2946 = vmatpush2.bf16.msra.mxu0 0
        %2947 = vmatprep.subr.bf16.mxu0 0
        %2948 = vmatpush2.bf16.msra.mxu0 0
        %2949 = vmatprep.subr.bf16.mxu0 0
        %2950 = vmatpush2.bf16.msra.mxu0 0
        %2951 = vmatprep.subr.bf16.mxu0 0
        %2952 = vmatpush2.bf16.msra.mxu0 0
        %2953 = vmatprep.subr.bf16.mxu0 0
        %2954 = vmatpush2.bf16.msra.mxu0 0
        %2955 = vmatprep.subr.bf16.mxu0 0
        %2956 = vmatpush2.bf16.msra.mxu0 0
        %2957 = vmatprep.mubr.bf16.mxu0 0
        %2958 = vmatmul.mubr.bf16.gmra.mxu0 %v2920
        %v2959 = vpop.f32.mrf.mxu0
        %v2960 = vadd.f32 0.0, %v2959
        %v2961 = vpop.f32.mrf.mxu0
        %v2962 = vpop.f32.mrf.mxu0
        %v2963 = vpop.f32.mrf.mxu0
        %2964 = vdwg.mxu0
        %v2966 = vsel %vm2591, %v2686, 0
        %v2969 = vsel %vm2691, %v2148, 0
        %2971 = vmatprep.subr.bf16.mxu0 0
        %2972 = vmatpush1.bf16.msra.mxu0 0
        %2973 = vmatprep.subr.bf16.mxu0 0
        %2974 = vmatpush1.bf16.msra.mxu0 0
        %2975 = vmatprep.subr.bf16.mxu0 0
        %2976 = vmatpush1.bf16.msra.mxu0 0
        %2977 = vmatprep.subr.bf16.mxu0 0
        %2978 = vmatpush1.bf16.msra.mxu0 0
        %2979 = vmatprep.subr.bf16.mxu0 0
        %2980 = vmatpush1.bf16.msra.mxu0 0
        %2981 = vmatprep.subr.bf16.mxu0 0
        %2982 = vmatpush1.bf16.msra.mxu0 0
        %2983 = vmatprep.subr.bf16.mxu0 0
        %2984 = vmatpush1.bf16.msra.mxu0 0
        %2985 = vmatprep.subr.bf16.mxu0 0
        %2986 = vmatpush1.bf16.msra.mxu0 %v2969
        %2987 = vmatprep.subr.bf16.mxu0 0
        %2988 = vmatpush2.bf16.msra.mxu0 0
        %2989 = vmatprep.subr.bf16.mxu0 0
        %2990 = vmatpush2.bf16.msra.mxu0 0
        %2991 = vmatprep.subr.bf16.mxu0 0
        %2992 = vmatpush2.bf16.msra.mxu0 0
        %2993 = vmatprep.subr.bf16.mxu0 0
        %2994 = vmatpush2.bf16.msra.mxu0 0
        %2995 = vmatprep.subr.bf16.mxu0 0
        %2996 = vmatpush2.bf16.msra.mxu0 0
        %2997 = vmatprep.subr.bf16.mxu0 0
        %2998 = vmatpush2.bf16.msra.mxu0 0
        %2999 = vmatprep.subr.bf16.mxu0 0
        %3000 = vmatpush2.bf16.msra.mxu0 0
        %3001 = vmatprep.subr.bf16.mxu0 0
        %3002 = vmatpush2.bf16.msra.mxu0 0
        %3003 = vmatprep.mubr.bf16.mxu0 0
        %3004 = vmatmul.mubr.bf16.gmra.mxu0 %v2966
        %v3005 = vpop.f32.mrf.mxu0
        %v3006 = vadd.f32 0.0, %v3005
        %v3007 = vpop.f32.mrf.mxu0
        %v3008 = vpop.f32.mrf.mxu0
        %v3009 = vpop.f32.mrf.mxu0
        %3010 = vdwg.mxu0
        %v3012 = vsel %vm2591, %v2687, 0
        %v3015 = vsel %vm2691, %v2149, 0
        %3017 = vmatprep.subr.bf16.mxu0 0
        %3018 = vmatpush1.bf16.msra.mxu0 0
        %3019 = vmatprep.subr.bf16.mxu0 0
        %3020 = vmatpush1.bf16.msra.mxu0 0
        %3021 = vmatprep.subr.bf16.mxu0 0
        %3022 = vmatpush1.bf16.msra.mxu0 0
        %3023 = vmatprep.subr.bf16.mxu0 0
        %3024 = vmatpush1.bf16.msra.mxu0 0
        %3025 = vmatprep.subr.bf16.mxu0 0
        %3026 = vmatpush1.bf16.msra.mxu0 0
        %3027 = vmatprep.subr.bf16.mxu0 0
        %3028 = vmatpush1.bf16.msra.mxu0 0
        %3029 = vmatprep.subr.bf16.mxu0 0
        %3030 = vmatpush1.bf16.msra.mxu0 0
        %3031 = vmatprep.subr.bf16.mxu0 0
        %3032 = vmatpush1.bf16.msra.mxu0 %v3015
        %3033 = vmatprep.subr.bf16.mxu0 0
        %3034 = vmatpush2.bf16.msra.mxu0 0
        %3035 = vmatprep.subr.bf16.mxu0 0
        %3036 = vmatpush2.bf16.msra.mxu0 0
        %3037 = vmatprep.subr.bf16.mxu0 0
        %3038 = vmatpush2.bf16.msra.mxu0 0
        %3039 = vmatprep.subr.bf16.mxu0 0
        %3040 = vmatpush2.bf16.msra.mxu0 0
        %3041 = vmatprep.subr.bf16.mxu0 0
        %3042 = vmatpush2.bf16.msra.mxu0 0
        %3043 = vmatprep.subr.bf16.mxu0 0
        %3044 = vmatpush2.bf16.msra.mxu0 0
        %3045 = vmatprep.subr.bf16.mxu0 0
        %3046 = vmatpush2.bf16.msra.mxu0 0
        %3047 = vmatprep.subr.bf16.mxu0 0
        %3048 = vmatpush2.bf16.msra.mxu0 0
        %3049 = vmatprep.mubr.bf16.mxu0 0
        %3050 = vmatmul.mubr.bf16.gmra.mxu0 %v3012
        %v3051 = vpop.f32.mrf.mxu0
        %v3052 = vadd.f32 0.0, %v3051
        %v3053 = vpop.f32.mrf.mxu0
        %v3054 = vpop.f32.mrf.mxu0
        %v3055 = vpop.f32.mrf.mxu0
        %3056 = vdwg.mxu0
        %v3057 = vcombine.low %v2730, %v2822
        %v3058 = vcombine.high %v2730, %v2822
        %v3060 = vunpack.c.l.s4 1983009808
        %v3061 = vunpack.c.0.s8 %v3060
        %v3062 = vlaneseq
        %v3063 = vshrl.u32 %v3062, 7
        %v3064 = vsub.s32 %v3061, %v3063
        %v3065 = vrot.slane %v3057, %v3064
        %v3067 = vunpack.c.l.s4 1983009808
        %v3068 = vunpack.c.0.s8 %v3067
        %v3069 = vlaneseq
        %v3070 = vshrl.u32 %v3069, 7
        %v3071 = vsub.s32 %v3068, %v3070
        %v3072 = vrot.slane %v3058, %v3071
        %v3073 = vcombine.low %v2776, %v2868
        %v3074 = vcombine.high %v2776, %v2868
        %v3076 = vunpack.c.l.s4 1983009808
        %v3077 = vunpack.c.0.s8 %v3076
        %v3078 = vlaneseq
        %v3079 = vshrl.u32 %v3078, 7
        %v3080 = vsub.s32 %v3077, %v3079
        %v3081 = vrot.slane %v3073, %v3080
        %v3083 = vunpack.c.l.s4 1983009808
        %v3084 = vunpack.c.0.s8 %v3083
        %v3085 = vlaneseq
        %v3086 = vshrl.u32 %v3085, 7
        %v3087 = vsub.s32 %v3084, %v3086
        %v3088 = vrot.slane %v3074, %v3087
        %v3089 = vcombine.low %v3065, %v3081
        %v3090 = vcombine.high %v3065, %v3081
        %v3092 = vunpack.c.l.s4 1934713408
        %v3093 = vunpack.c.0.s8 %v3092
        %v3094 = vlaneseq
        %v3095 = vshrl.u32 %v3094, 7
        %v3096 = vsub.s32 %v3093, %v3095
        %v3097 = vrot.slane %v3089, %v3096
        %v3099 = vunpack.c.l.s4 1934713408
        %v3100 = vunpack.c.0.s8 %v3099
        %v3101 = vlaneseq
        %v3102 = vshrl.u32 %v3101, 7
        %v3103 = vsub.s32 %v3100, %v3102
        %v3104 = vrot.slane %v3090, %v3103
        %v3105 = vcombine.low %v3072, %v3088
        %v3106 = vcombine.high %v3072, %v3088
        %v3108 = vunpack.c.l.s4 1934713408
        %v3109 = vunpack.c.0.s8 %v3108
        %v3110 = vlaneseq
        %v3111 = vshrl.u32 %v3110, 7
        %v3112 = vsub.s32 %v3109, %v3111
        %v3113 = vrot.slane %v3105, %v3112
        %v3115 = vunpack.c.l.s4 1934713408
        %v3116 = vunpack.c.0.s8 %v3115
        %v3117 = vlaneseq
        %v3118 = vshrl.u32 %v3117, 7
        %v3119 = vsub.s32 %v3116, %v3118
        %v3120 = vrot.slane %v3106, %v3119
        %v3121 = vcombine.high %v3097, 0.0
        %v3122 = vcombine.high %v3104, 0.0
        %v3123 = vcombine.high %v3113, 0.0
        %v3124 = vcombine.high %v3120, 0.0
        %v3125 = vcombine.low %v2914, %v3006
        %v3126 = vcombine.high %v2914, %v3006
        %v3128 = vunpack.c.l.s4 1983009808
        %v3129 = vunpack.c.0.s8 %v3128
        %v3130 = vlaneseq
        %v3131 = vshrl.u32 %v3130, 7
        %v3132 = vsub.s32 %v3129, %v3131
        %v3133 = vrot.slane %v3125, %v3132
        %v3135 = vunpack.c.l.s4 1983009808
        %v3136 = vunpack.c.0.s8 %v3135
        %v3137 = vlaneseq
        %v3138 = vshrl.u32 %v3137, 7
        %v3139 = vsub.s32 %v3136, %v3138
        %v3140 = vrot.slane %v3126, %v3139
        %v3141 = vcombine.low %v2960, %v3052
        %v3142 = vcombine.high %v2960, %v3052
        %v3144 = vunpack.c.l.s4 1983009808
        %v3145 = vunpack.c.0.s8 %v3144
        %v3146 = vlaneseq
        %v3147 = vshrl.u32 %v3146, 7
        %v3148 = vsub.s32 %v3145, %v3147
        %v3149 = vrot.slane %v3141, %v3148
        %v3151 = vunpack.c.l.s4 1983009808
        %v3152 = vunpack.c.0.s8 %v3151
        %v3153 = vlaneseq
        %v3154 = vshrl.u32 %v3153, 7
        %v3155 = vsub.s32 %v3152, %v3154
        %v3156 = vrot.slane %v3142, %v3155
        %v3157 = vcombine.low %v3133, %v3149
        %v3158 = vcombine.high %v3133, %v3149
        %v3160 = vunpack.c.l.s4 1934713408
        %v3161 = vunpack.c.0.s8 %v3160
        %v3162 = vlaneseq
        %v3163 = vshrl.u32 %v3162, 7
        %v3164 = vsub.s32 %v3161, %v3163
        %v3165 = vrot.slane %v3157, %v3164
        %v3167 = vunpack.c.l.s4 1934713408
        %v3168 = vunpack.c.0.s8 %v3167
        %v3169 = vlaneseq
        %v3170 = vshrl.u32 %v3169, 7
        %v3171 = vsub.s32 %v3168, %v3170
        %v3172 = vrot.slane %v3158, %v3171
        %v3173 = vcombine.low %v3140, %v3156
        %v3174 = vcombine.high %v3140, %v3156
        %v3176 = vunpack.c.l.s4 1934713408
        %v3177 = vunpack.c.0.s8 %v3176
        %v3178 = vlaneseq
        %v3179 = vshrl.u32 %v3178, 7
        %v3180 = vsub.s32 %v3177, %v3179
        %v3181 = vrot.slane %v3173, %v3180
        %v3183 = vunpack.c.l.s4 1934713408
        %v3184 = vunpack.c.0.s8 %v3183
        %v3185 = vlaneseq
        %v3186 = vshrl.u32 %v3185, 7
        %v3187 = vsub.s32 %v3184, %v3186
        %v3188 = vrot.slane %v3174, %v3187
        %v3189 = vcombine.high %v3165, 0.0
        %v3190 = vcombine.high %v3172, 0.0
        %v3191 = vcombine.high %v3181, 0.0
        %v3192 = vcombine.high %v3188, 0.0
        %v3193 = vcombine.low %v3097, %v3104
        %v3195 = vunpack.c.l.s4 1983009808
        %v3196 = vunpack.c.0.s8 %v3195
        %v3197 = vlaneseq
        %v3198 = vshrl.u32 %v3197, 7
        %v3199 = vsub.s32 %v3196, %v3198
        %v3200 = vrot.slane %v3193, %v3199
        %v3201 = vcombine.low %v3121, %v3122
        %v3203 = vunpack.c.l.s4 1983009808
        %v3204 = vunpack.c.0.s8 %v3203
        %v3205 = vlaneseq
        %v3206 = vshrl.u32 %v3205, 7
        %v3207 = vsub.s32 %v3204, %v3206
        %v3208 = vrot.slane %v3201, %v3207
        %v3209 = vcombine.low %v3113, %v3120
        %v3211 = vunpack.c.l.s4 1983009808
        %v3212 = vunpack.c.0.s8 %v3211
        %v3213 = vlaneseq
        %v3214 = vshrl.u32 %v3213, 7
        %v3215 = vsub.s32 %v3212, %v3214
        %v3216 = vrot.slane %v3209, %v3215
        %v3217 = vcombine.low %v3123, %v3124
        %v3219 = vunpack.c.l.s4 1983009808
        %v3220 = vunpack.c.0.s8 %v3219
        %v3221 = vlaneseq
        %v3222 = vshrl.u32 %v3221, 7
        %v3223 = vsub.s32 %v3220, %v3222
        %v3224 = vrot.slane %v3217, %v3223
        %v3225 = vcombine.low %v3200, %v3208
        %v3226 = vcombine.high %v3200, %v3208
        %v3228 = vunpack.c.l.s4 1934713408
        %v3229 = vunpack.c.0.s8 %v3228
        %v3230 = vlaneseq
        %v3231 = vshrl.u32 %v3230, 7
        %v3232 = vsub.s32 %v3229, %v3231
        %v3233 = vrot.slane %v3225, %v3232
        %v3235 = vunpack.c.l.s4 1934713408
        %v3236 = vunpack.c.0.s8 %v3235
        %v3237 = vlaneseq
        %v3238 = vshrl.u32 %v3237, 7
        %v3239 = vsub.s32 %v3236, %v3238
        %v3240 = vrot.slane %v3226, %v3239
        %v3241 = vcombine.low %v3216, %v3224
        %v3242 = vcombine.high %v3216, %v3224
        %v3244 = vunpack.c.l.s4 1934713408
        %v3245 = vunpack.c.0.s8 %v3244
        %v3246 = vlaneseq
        %v3247 = vshrl.u32 %v3246, 7
        %v3248 = vsub.s32 %v3245, %v3247
        %v3249 = vrot.slane %v3241, %v3248
        %v3251 = vunpack.c.l.s4 1934713408
        %v3252 = vunpack.c.0.s8 %v3251
        %v3253 = vlaneseq
        %v3254 = vshrl.u32 %v3253, 7
        %v3255 = vsub.s32 %v3252, %v3254
        %v3256 = vrot.slane %v3242, %v3255
        %v3257 = vcombine.low %v3233, %v3249
        %v3258 = vcombine.high %v3233, %v3249
        %v3259 = vcombine.low %v3240, %v3256
        %v3260 = vcombine.high %v3240, %v3256
        %v3261 = vcombine.low %v3165, %v3172
        %v3263 = vunpack.c.l.s4 1983009808
        %v3264 = vunpack.c.0.s8 %v3263
        %v3265 = vlaneseq
        %v3266 = vshrl.u32 %v3265, 7
        %v3267 = vsub.s32 %v3264, %v3266
        %v3268 = vrot.slane %v3261, %v3267
        %v3269 = vcombine.low %v3189, %v3190
        %v3271 = vunpack.c.l.s4 1983009808
        %v3272 = vunpack.c.0.s8 %v3271
        %v3273 = vlaneseq
        %v3274 = vshrl.u32 %v3273, 7
        %v3275 = vsub.s32 %v3272, %v3274
        %v3276 = vrot.slane %v3269, %v3275
        %v3277 = vcombine.low %v3181, %v3188
        %v3279 = vunpack.c.l.s4 1983009808
        %v3280 = vunpack.c.0.s8 %v3279
        %v3281 = vlaneseq
        %v3282 = vshrl.u32 %v3281, 7
        %v3283 = vsub.s32 %v3280, %v3282
        %v3284 = vrot.slane %v3277, %v3283
        %v3285 = vcombine.low %v3191, %v3192
        %v3287 = vunpack.c.l.s4 1983009808
        %v3288 = vunpack.c.0.s8 %v3287
        %v3289 = vlaneseq
        %v3290 = vshrl.u32 %v3289, 7
        %v3291 = vsub.s32 %v3288, %v3290
        %v3292 = vrot.slane %v3285, %v3291
        %v3293 = vcombine.low %v3268, %v3276
        %v3294 = vcombine.high %v3268, %v3276
        %v3296 = vunpack.c.l.s4 1934713408
        %v3297 = vunpack.c.0.s8 %v3296
        %v3298 = vlaneseq
        %v3299 = vshrl.u32 %v3298, 7
        %v3300 = vsub.s32 %v3297, %v3299
        %v3301 = vrot.slane %v3293, %v3300
        %v3303 = vunpack.c.l.s4 1934713408
        %v3304 = vunpack.c.0.s8 %v3303
        %v3305 = vlaneseq
        %v3306 = vshrl.u32 %v3305, 7
        %v3307 = vsub.s32 %v3304, %v3306
        %v3308 = vrot.slane %v3294, %v3307
        %v3309 = vcombine.low %v3284, %v3292
        %v3310 = vcombine.high %v3284, %v3292
        %v3312 = vunpack.c.l.s4 1934713408
        %v3313 = vunpack.c.0.s8 %v3312
        %v3314 = vlaneseq
        %v3315 = vshrl.u32 %v3314, 7
        %v3316 = vsub.s32 %v3313, %v3315
        %v3317 = vrot.slane %v3309, %v3316
        %v3319 = vunpack.c.l.s4 1934713408
        %v3320 = vunpack.c.0.s8 %v3319
        %v3321 = vlaneseq
        %v3322 = vshrl.u32 %v3321, 7
        %v3323 = vsub.s32 %v3320, %v3322
        %v3324 = vrot.slane %v3310, %v3323
        %v3325 = vcombine.low %v3301, %v3317
        %v3326 = vcombine.high %v3301, %v3317
        %v3327 = vcombine.low %v3308, %v3324
        %v3328 = vcombine.high %v3308, %v3324
        %3331 = vrot.lane.b32.xlu0 %v3258, 32
        %v3332 = vpop.permute.xlu0 %3331
        %3333 = vrot.lane.b32.xlu0 %v3326, 32
        %v3334 = vpop.permute.xlu0 %3333
        %3339 = vrot.lane.b32.xlu0 %v3259, 64
        %v3340 = vpop.permute.xlu0 %3339
        %3341 = vrot.lane.b32.xlu0 %v3327, 64
        %v3342 = vpop.permute.xlu0 %3341
        %3347 = vrot.lane.b32.xlu0 %v3260, 96
        %v3348 = vpop.permute.xlu0 %3347
        %3349 = vrot.lane.b32.xlu0 %v3328, 96
        %v3350 = vpop.permute.xlu0 %3349
        %v3353 = vsel %vm2150, %v3257, %v3332
        %v3354 = vsel %vm2150, %v3325, %v3334
        %vm3355 = vcmask 523264
        %v3356 = vsel %vm3355, %v3353, %v3340
        %v3357 = vsel %vm3355, %v3354, %v3342
        %vm3358 = vcmask 785408
        %v3359 = vsel %vm3358, %v3356, %v3348
        %v3360 = vsel %vm3358, %v3357, %v3350
        %v3361 = vpack.c.bf16 %v3360, %v3359
        %v3362 = vld [vmem:[%s777] sm:$0xf]
        %v3363 = vld [vmem:[%s777 + $0x4] sm:$0xf]
        %v3364 = vld [vmem:[%s777 + $0x8] sm:$0xf]
        %v3365 = vld [vmem:[%s777 + $0xc] sm:$0xf]
        %v3366 = vld [vmem:[%s777 + $0x10] sm:$0xf]
        %v3367 = vld [vmem:[%s777 + $0x14] sm:$0xf]
        %v3368 = vld [vmem:[%s777 + $0x18] sm:$0xf]
        %v3369 = vld [vmem:[%s777 + $0x1c] sm:$0xf]
        %v3370 = vld [vmem:[%s777 + $0x20] sm:$0xf]
        %v3371 = vld [vmem:[%s777 + $0x24] sm:$0xf]
        %v3372 = vld [vmem:[%s777 + $0x28] sm:$0xf]
        %v3373 = vld [vmem:[%s777 + $0x2c] sm:$0xf]
        %v3374 = vld [vmem:[%s777 + $0x30] sm:$0xf]
        %v3375 = vld [vmem:[%s777 + $0x34] sm:$0xf]
        %v3376 = vld [vmem:[%s777 + $0x38] sm:$0xf]
        %v3377 = vld [vmem:[%s777 + $0x3c] sm:$0xf]
        %v3378 = vld [vmem:[%s911] sm:$0x1]
        %v3380 = vlaneseq
        %v3381 = vshrl.u32 %v3380, 7
        %v3382 = vsub.s32 0, %v3381
        %v3383 = vrot.slane %v3378, %v3382
        %v3401 = vunpack.c.l.b16 %v3362
        %v3402 = vunpack.c.l.b16 %v3363
        %v3403 = vunpack.c.l.b16 %v3364
        %v3404 = vunpack.c.l.b16 %v3365
        %v3405 = vunpack.c.l.b16 %v3366
        %v3406 = vunpack.c.l.b16 %v3367
        %v3407 = vunpack.c.l.b16 %v3368
        %v3408 = vunpack.c.l.b16 %v3369
        %v3409 = vunpack.c.l.b16 %v3370
        %v3410 = vunpack.c.l.b16 %v3371
        %v3411 = vunpack.c.l.b16 %v3372
        %v3412 = vunpack.c.l.b16 %v3373
        %v3413 = vunpack.c.l.b16 %v3374
        %v3414 = vunpack.c.l.b16 %v3375
        %v3415 = vunpack.c.l.b16 %v3376
        %v3416 = vunpack.c.l.b16 %v3377
        %v3417 = vpack.c.b16 %v3402, %v3401
        %v3418 = vpack.c.b16 %v3404, %v3403
        %v3419 = vpack.c.b16 %v3406, %v3405
        %v3420 = vpack.c.b16 %v3408, %v3407
        %v3421 = vpack.c.b16 %v3410, %v3409
        %v3422 = vpack.c.b16 %v3412, %v3411
        %v3423 = vpack.c.b16 %v3414, %v3413
        %v3424 = vpack.c.b16 %v3416, %v3415
        %3433 = vmatprep.subr.bf16.mxu0 0
        %3434 = vmatpush1.bf16.msra.mxu0 %v3424
        %3435 = vmatprep.subr.bf16.mxu0 0
        %3436 = vmatpush1.bf16.msra.mxu0 %v3423
        %3437 = vmatprep.subr.bf16.mxu0 0
        %3438 = vmatpush1.bf16.msra.mxu0 %v3422
        %3439 = vmatprep.subr.bf16.mxu0 0
        %3440 = vmatpush1.bf16.msra.mxu0 %v3421
        %3441 = vmatprep.subr.bf16.mxu0 0
        %3442 = vmatpush1.bf16.msra.mxu0 %v3420
        %3443 = vmatprep.subr.bf16.mxu0 0
        %3444 = vmatpush1.bf16.msra.mxu0 %v3419
        %3445 = vmatprep.subr.bf16.mxu0 0
        %3446 = vmatpush1.bf16.msra.mxu0 %v3418
        %3447 = vmatprep.subr.bf16.mxu0 0
        %3448 = vmatpush1.bf16.msra.mxu0 %v3417
        %3449 = vmatprep.subr.bf16.mxu0 0
        %3450 = vmatpush2.bf16.msra.mxu0 0
        %3451 = vmatprep.subr.bf16.mxu0 0
        %3452 = vmatpush2.bf16.msra.mxu0 0
        %3453 = vmatprep.subr.bf16.mxu0 0
        %3454 = vmatpush2.bf16.msra.mxu0 0
        %3455 = vmatprep.subr.bf16.mxu0 0
        %3456 = vmatpush2.bf16.msra.mxu0 0
        %3457 = vmatprep.subr.bf16.mxu0 0
        %3458 = vmatpush2.bf16.msra.mxu0 0
        %3459 = vmatprep.subr.bf16.mxu0 0
        %3460 = vmatpush2.bf16.msra.mxu0 0
        %3461 = vmatprep.subr.bf16.mxu0 0
        %3462 = vmatpush2.bf16.msra.mxu0 0
        %3463 = vmatprep.subr.bf16.mxu0 0
        %3464 = vmatpush2.bf16.msra.mxu0 0
        %3465 = vmatprep.mubr.bf16.mxu0 0
        %3466 = vmatmul.mubr.bf16.gmra.mxu0 %v3361
        %v3467 = vpop.f32.mrf.mxu0
        %v3468 = vadd.f32 %v3383, %v3467
        %v3469 = vpop.f32.mrf.mxu0
        %v3470 = vpop.f32.mrf.mxu0
        %v3471 = vadd.f32 %v3383, %v3470
        %v3472 = vpop.f32.mrf.mxu0
        %3473 = vdwg.mxu0
        %v3474 = vadd.f32 %v3468, %v986
        %v3475 = vadd.f32 %v3471, %v987
        %v3476 = vld [vmem:[%s914] sm:$0x1]
        %v3477 = vld [vmem:[%s917] sm:$0x1]
        %3478 = vadd.xlane.f32.xlu0 %v3474
        %v3479 = vpop.xlane.xlu0 %3478
        %3480 = vadd.xlane.f32.xlu0 %v3475
        %v3481 = vpop.xlane.xlu0 %3480
        %v3482 = vrcp.pop 128.0
        %v3483 = vmul.f32 %v3479, %v3482
        %v3484 = vmul.f32 %v3481, %v3482
        %v3485 = vmul.f32 %v3474, %v3474
        %v3486 = vmul.f32 %v3475, %v3475
        %3487 = vadd.xlane.f32.xlu0 %v3485
        %v3488 = vpop.xlane.xlu0 %3487
        %3489 = vadd.xlane.f32.xlu0 %v3486
        %v3490 = vpop.xlane.xlu0 %3489
        %v3491 = vmul.f32 %v3488, %v3482
        %v3492 = vmul.f32 %v3490, %v3482
        %v3493 = vmul.f32 %v3483, %v3483
        %v3494 = vmul.f32 %v3484, %v3484
        %v3495 = vsub.f32 %v3491, %v3493
        %v3496 = vsub.f32 %v3492, %v3494
        %v3497 = vmax.f32 %v3495, 0.0
        %v3498 = vmax.f32 %v3496, 0.0
        %v3499 = vsub.f32 %v3474, %v3483
        %v3500 = vsub.f32 %v3475, %v3484
        %v3501 = vadd.f32 %v3497, 1e-12
        %v3502 = vadd.f32 %v3498, 1e-12
        %v3503 = vrsqrt.pop %v3501
        %v3504 = vrsqrt.pop %v3502
        %v3505 = vmul.f32 %v3499, %v3503
        %v3506 = vmul.f32 %v3500, %v3504
        %v3508 = vlaneseq
        %v3509 = vshrl.u32 %v3508, 7
        %v3510 = vsub.s32 0, %v3509
        %v3511 = vrot.slane %v3476, %v3510
        %v3513 = vmul.f32 %v3505, %v3511
        %v3514 = vmul.f32 %v3506, %v3511
        %v3516 = vlaneseq
        %v3517 = vshrl.u32 %v3516, 7
        %v3518 = vsub.s32 0, %v3517
        %v3519 = vrot.slane %v3477, %v3518
        %v3521 = vadd.f32 %v3513, %v3519
        %v3522 = vadd.f32 %v3514, %v3519
        %v3523 = vpack.c.bf16 %v3522, %v3521
        %v3524 = vld [vmem:[%s922] sm:$0xff]
        %v3525 = vld [vmem:[%s922 + $0x8] sm:$0xff]
        %v3526 = vld [vmem:[%s922 + $0x10] sm:$0xff]
        %v3527 = vld [vmem:[%s922 + $0x18] sm:$0xff]
        %v3528 = vld [vmem:[%s922 + $0x20] sm:$0xff]
        %v3529 = vld [vmem:[%s922 + $0x28] sm:$0xff]
        %v3530 = vld [vmem:[%s922 + $0x30] sm:$0xff]
        %v3531 = vld [vmem:[%s922 + $0x38] sm:$0xff]
        %v3532 = vld [vmem:[%s922 + $0x40] sm:$0xff]
        %v3533 = vld [vmem:[%s922 + $0x48] sm:$0xff]
        %v3534 = vld [vmem:[%s922 + $0x50] sm:$0xff]
        %v3535 = vld [vmem:[%s922 + $0x58] sm:$0xff]
        %v3536 = vld [vmem:[%s922 + $0x60] sm:$0xff]
        %v3537 = vld [vmem:[%s922 + $0x68] sm:$0xff]
        %v3538 = vld [vmem:[%s922 + $0x70] sm:$0xff]
        %v3539 = vld [vmem:[%s922 + $0x78] sm:$0xff]
        %v3540 = vld [vmem:[%s926] sm:$0x3]
        %v3542 = vlaneseq
        %v3543 = vshrl.u32 %v3542, 7
        %v3544 = vsub.s32 0, %v3543
        %v3545 = vrot.slane %v3540, %v3544
        %v3546 = vlaneseq
        %v3547 = vshrl.u32 %v3546, 7
        %v3548 = vsub.s32 1, %v3547
        %v3549 = vrot.slane %v3540, %v3548
        %v3568 = vunpack.c.l.b16 %v3524
        %v3569 = vunpack.c.h.b16 %v3524
        %v3570 = vunpack.c.l.b16 %v3525
        %v3571 = vunpack.c.h.b16 %v3525
        %v3572 = vunpack.c.l.b16 %v3526
        %v3573 = vunpack.c.h.b16 %v3526
        %v3574 = vunpack.c.l.b16 %v3527
        %v3575 = vunpack.c.h.b16 %v3527
        %v3576 = vunpack.c.l.b16 %v3528
        %v3577 = vunpack.c.h.b16 %v3528
        %v3578 = vunpack.c.l.b16 %v3529
        %v3579 = vunpack.c.h.b16 %v3529
        %v3580 = vunpack.c.l.b16 %v3530
        %v3581 = vunpack.c.h.b16 %v3530
        %v3582 = vunpack.c.l.b16 %v3531
        %v3583 = vunpack.c.h.b16 %v3531
        %v3584 = vunpack.c.l.b16 %v3532
        %v3585 = vunpack.c.h.b16 %v3532
        %v3586 = vunpack.c.l.b16 %v3533
        %v3587 = vunpack.c.h.b16 %v3533
        %v3588 = vunpack.c.l.b16 %v3534
        %v3589 = vunpack.c.h.b16 %v3534
        %v3590 = vunpack.c.l.b16 %v3535
        %v3591 = vunpack.c.h.b16 %v3535
        %v3592 = vunpack.c.l.b16 %v3536
        %v3593 = vunpack.c.h.b16 %v3536
        %v3594 = vunpack.c.l.b16 %v3537
        %v3595 = vunpack.c.h.b16 %v3537
        %v3596 = vunpack.c.l.b16 %v3538
        %v3597 = vunpack.c.h.b16 %v3538
        %v3598 = vunpack.c.l.b16 %v3539
        %v3599 = vunpack.c.h.b16 %v3539
        %v3600 = vpack.c.b16 %v3570, %v3568
        %v3601 = vpack.c.b16 %v3571, %v3569
        %v3602 = vpack.c.b16 %v3574, %v3572
        %v3603 = vpack.c.b16 %v3575, %v3573
        %v3604 = vpack.c.b16 %v3578, %v3576
        %v3605 = vpack.c.b16 %v3579, %v3577
        %v3606 = vpack.c.b16 %v3582, %v3580
        %v3607 = vpack.c.b16 %v3583, %v3581
        %v3608 = vpack.c.b16 %v3586, %v3584
        %v3609 = vpack.c.b16 %v3587, %v3585
        %v3610 = vpack.c.b16 %v3590, %v3588
        %v3611 = vpack.c.b16 %v3591, %v3589
        %v3612 = vpack.c.b16 %v3594, %v3592
        %v3613 = vpack.c.b16 %v3595, %v3593
        %v3614 = vpack.c.b16 %v3598, %v3596
        %v3615 = vpack.c.b16 %v3599, %v3597
        %3632 = vmatprep.subr.bf16.mxu0 %v3615
        %3633 = vmatpush1.bf16.msra.mxu0 %v3614
        %3634 = vmatprep.subr.bf16.mxu0 %v3613
        %3635 = vmatpush1.bf16.msra.mxu0 %v3612
        %3636 = vmatprep.subr.bf16.mxu0 %v3611
        %3637 = vmatpush1.bf16.msra.mxu0 %v3610
        %3638 = vmatprep.subr.bf16.mxu0 %v3609
        %3639 = vmatpush1.bf16.msra.mxu0 %v3608
        %3640 = vmatprep.subr.bf16.mxu0 %v3607
        %3641 = vmatpush1.bf16.msra.mxu0 %v3606
        %3642 = vmatprep.subr.bf16.mxu0 %v3605
        %3643 = vmatpush1.bf16.msra.mxu0 %v3604
        %3644 = vmatprep.subr.bf16.mxu0 %v3603
        %3645 = vmatpush1.bf16.msra.mxu0 %v3602
        %3646 = vmatprep.subr.bf16.mxu0 %v3601
        %3647 = vmatpush1.bf16.msra.mxu0 %v3600
        %3648 = vmatprep.subr.bf16.mxu0 0
        %3649 = vmatpush2.bf16.msra.mxu0 0
        %3650 = vmatprep.subr.bf16.mxu0 0
        %3651 = vmatpush2.bf16.msra.mxu0 0
        %3652 = vmatprep.subr.bf16.mxu0 0
        %3653 = vmatpush2.bf16.msra.mxu0 0
        %3654 = vmatprep.subr.bf16.mxu0 0
        %3655 = vmatpush2.bf16.msra.mxu0 0
        %3656 = vmatprep.subr.bf16.mxu0 0
        %3657 = vmatpush2.bf16.msra.mxu0 0
        %3658 = vmatprep.subr.bf16.mxu0 0
        %3659 = vmatpush2.bf16.msra.mxu0 0
        %3660 = vmatprep.subr.bf16.mxu0 0
        %3661 = vmatpush2.bf16.msra.mxu0 0
        %3662 = vmatprep.subr.bf16.mxu0 0
        %3663 = vmatpush2.bf16.msra.mxu0 0
        %3664 = vmatprep.mubr.bf16.mxu0 0
        %3665 = vmatmul.mubr.bf16.gmra.mxu0 %v3523
        %v3666 = vpop.f32.mrf.mxu0
        %v3667 = vadd.f32 %v3545, %v3666
        %v3668 = vpop.f32.mrf.mxu0
        %v3669 = vadd.f32 %v3549, %v3668
        %v3670 = vpop.f32.mrf.mxu0
        %v3671 = vadd.f32 %v3545, %v3670
        %v3672 = vpop.f32.mrf.mxu0
        %v3673 = vadd.f32 %v3549, %v3672
        %3674 = vdwg.mxu0
        %v3675 = vmul.f32 %v3667, 0.5
        %v3676 = vmul.f32 %v3669, 0.5
        %v3677 = vmul.f32 %v3671, 0.5
        %v3678 = vmul.f32 %v3673, 0.5
        %v3679 = vmul.f32 %v3667, 0.044715
        %v3680 = vmul.f32 %v3669, 0.044715
        %v3681 = vmul.f32 %v3671, 0.044715
        %v3682 = vmul.f32 %v3673, 0.044715
        %v3683 = vmul.f32 %v3679, %v3667
        %v3684 = vmul.f32 %v3680, %v3669
        %v3685 = vmul.f32 %v3681, %v3671
        %v3686 = vmul.f32 %v3682, %v3673
        %v3687 = vmul.f32 %v3683, %v3667
        %v3688 = vmul.f32 %v3684, %v3669
        %v3689 = vmul.f32 %v3685, %v3671
        %v3690 = vmul.f32 %v3686, %v3673
        %v3691 = vadd.f32 %v3667, %v3687
        %v3692 = vadd.f32 %v3669, %v3688
        %v3693 = vadd.f32 %v3671, %v3689
        %v3694 = vadd.f32 %v3673, %v3690
        %v3695 = vmul.f32 %v3691, 0.7978846
        %v3696 = vmul.f32 %v3692, 0.7978846
        %v3697 = vmul.f32 %v3693, 0.7978846
        %v3698 = vmul.f32 %v3694, 0.7978846
        %v3699 = vtanh.pop %v3695
        %v3700 = vtanh.pop %v3696
        %v3701 = vtanh.pop %v3697
        %v3702 = vtanh.pop %v3698
        %v3703 = vadd.f32 %v3699, 1.0
        %v3704 = vadd.f32 %v3700, 1.0
        %v3705 = vadd.f32 %v3701, 1.0
        %v3706 = vadd.f32 %v3702, 1.0
        %v3707 = vmul.f32 %v3675, %v3703
        %v3708 = vmul.f32 %v3676, %v3704
        %v3709 = vmul.f32 %v3677, %v3705
        %v3710 = vmul.f32 %v3678, %v3706
        %v3711 = vpack.c.bf16 %v3709, %v3707
        %v3712 = vpack.c.bf16 %v3710, %v3708
        %v3713 = vld [vmem:[%s786] sm:$0xf]
        %v3714 = vld [vmem:[%s786 + $0x4] sm:$0xf]
        %v3715 = vld [vmem:[%s786 + $0x8] sm:$0xf]
        %v3716 = vld [vmem:[%s786 + $0xc] sm:$0xf]
        %v3717 = vld [vmem:[%s786 + $0x10] sm:$0xf]
        %v3718 = vld [vmem:[%s786 + $0x14] sm:$0xf]
        %v3719 = vld [vmem:[%s786 + $0x18] sm:$0xf]
        %v3720 = vld [vmem:[%s786 + $0x1c] sm:$0xf]
        %v3721 = vld [vmem:[%s786 + $0x20] sm:$0xf]
        %v3722 = vld [vmem:[%s786 + $0x24] sm:$0xf]
        %v3723 = vld [vmem:[%s786 + $0x28] sm:$0xf]
        %v3724 = vld [vmem:[%s786 + $0x2c] sm:$0xf]
        %v3725 = vld [vmem:[%s786 + $0x30] sm:$0xf]
        %v3726 = vld [vmem:[%s786 + $0x34] sm:$0xf]
        %v3727 = vld [vmem:[%s786 + $0x38] sm:$0xf]
        %v3728 = vld [vmem:[%s786 + $0x3c] sm:$0xf]
        %v3729 = vld [vmem:[%s786 + $0x40] sm:$0xf]
        %v3730 = vld [vmem:[%s786 + $0x44] sm:$0xf]
        %v3731 = vld [vmem:[%s786 + $0x48] sm:$0xf]
        %v3732 = vld [vmem:[%s786 + $0x4c] sm:$0xf]
        %v3733 = vld [vmem:[%s786 + $0x50] sm:$0xf]
        %v3734 = vld [vmem:[%s786 + $0x54] sm:$0xf]
        %v3735 = vld [vmem:[%s786 + $0x58] sm:$0xf]
        %v3736 = vld [vmem:[%s786 + $0x5c] sm:$0xf]
        %v3737 = vld [vmem:[%s786 + $0x60] sm:$0xf]
        %v3738 = vld [vmem:[%s786 + $0x64] sm:$0xf]
        %v3739 = vld [vmem:[%s786 + $0x68] sm:$0xf]
        %v3740 = vld [vmem:[%s786 + $0x6c] sm:$0xf]
        %v3741 = vld [vmem:[%s786 + $0x70] sm:$0xf]
        %v3742 = vld [vmem:[%s786 + $0x74] sm:$0xf]
        %v3743 = vld [vmem:[%s786 + $0x78] sm:$0xf]
        %v3744 = vld [vmem:[%s786 + $0x7c] sm:$0xf]
        %v3745 = vld [vmem:[%s929] sm:$0x1]
        %v3747 = vlaneseq
        %v3748 = vshrl.u32 %v3747, 7
        %v3749 = vsub.s32 0, %v3748
        %v3750 = vrot.slane %v3745, %v3749
        %v3784 = vunpack.c.l.b16 %v3713
        %v3785 = vunpack.c.l.b16 %v3714
        %v3786 = vunpack.c.l.b16 %v3715
        %v3787 = vunpack.c.l.b16 %v3716
        %v3788 = vunpack.c.l.b16 %v3717
        %v3789 = vunpack.c.l.b16 %v3718
        %v3790 = vunpack.c.l.b16 %v3719
        %v3791 = vunpack.c.l.b16 %v3720
        %v3792 = vunpack.c.l.b16 %v3721
        %v3793 = vunpack.c.l.b16 %v3722
        %v3794 = vunpack.c.l.b16 %v3723
        %v3795 = vunpack.c.l.b16 %v3724
        %v3796 = vunpack.c.l.b16 %v3725
        %v3797 = vunpack.c.l.b16 %v3726
        %v3798 = vunpack.c.l.b16 %v3727
        %v3799 = vunpack.c.l.b16 %v3728
        %v3800 = vunpack.c.l.b16 %v3729
        %v3801 = vunpack.c.l.b16 %v3730
        %v3802 = vunpack.c.l.b16 %v3731
        %v3803 = vunpack.c.l.b16 %v3732
        %v3804 = vunpack.c.l.b16 %v3733
        %v3805 = vunpack.c.l.b16 %v3734
        %v3806 = vunpack.c.l.b16 %v3735
        %v3807 = vunpack.c.l.b16 %v3736
        %v3808 = vunpack.c.l.b16 %v3737
        %v3809 = vunpack.c.l.b16 %v3738
        %v3810 = vunpack.c.l.b16 %v3739
        %v3811 = vunpack.c.l.b16 %v3740
        %v3812 = vunpack.c.l.b16 %v3741
        %v3813 = vunpack.c.l.b16 %v3742
        %v3814 = vunpack.c.l.b16 %v3743
        %v3815 = vunpack.c.l.b16 %v3744
        %v3816 = vpack.c.b16 %v3785, %v3784
        %v3817 = vpack.c.b16 %v3787, %v3786
        %v3818 = vpack.c.b16 %v3789, %v3788
        %v3819 = vpack.c.b16 %v3791, %v3790
        %v3820 = vpack.c.b16 %v3793, %v3792
        %v3821 = vpack.c.b16 %v3795, %v3794
        %v3822 = vpack.c.b16 %v3797, %v3796
        %v3823 = vpack.c.b16 %v3799, %v3798
        %v3824 = vpack.c.b16 %v3801, %v3800
        %v3825 = vpack.c.b16 %v3803, %v3802
        %v3826 = vpack.c.b16 %v3805, %v3804
        %v3827 = vpack.c.b16 %v3807, %v3806
        %v3828 = vpack.c.b16 %v3809, %v3808
        %v3829 = vpack.c.b16 %v3811, %v3810
        %v3830 = vpack.c.b16 %v3813, %v3812
        %v3831 = vpack.c.b16 %v3815, %v3814
        %3848 = vmatprep.subr.bf16.mxu0 0
        %3849 = vmatpush1.bf16.msra.mxu0 %v3823
        %3850 = vmatprep.subr.bf16.mxu0 0
        %3851 = vmatpush1.bf16.msra.mxu0 %v3822
        %3852 = vmatprep.subr.bf16.mxu0 0
        %3853 = vmatpush1.bf16.msra.mxu0 %v3821
        %3854 = vmatprep.subr.bf16.mxu0 0
        %3855 = vmatpush1.bf16.msra.mxu0 %v3820
        %3856 = vmatprep.subr.bf16.mxu0 0
        %3857 = vmatpush1.bf16.msra.mxu0 %v3819
        %3858 = vmatprep.subr.bf16.mxu0 0
        %3859 = vmatpush1.bf16.msra.mxu0 %v3818
        %3860 = vmatprep.subr.bf16.mxu0 0
        %3861 = vmatpush1.bf16.msra.mxu0 %v3817
        %3862 = vmatprep.subr.bf16.mxu0 0
        %3863 = vmatpush1.bf16.msra.mxu0 %v3816
        %3864 = vmatprep.subr.bf16.mxu0 0
        %3865 = vmatpush2.bf16.msra.mxu0 %v3831
        %3866 = vmatprep.subr.bf16.mxu0 0
        %3867 = vmatpush2.bf16.msra.mxu0 %v3830
        %3868 = vmatprep.subr.bf16.mxu0 0
        %3869 = vmatpush2.bf16.msra.mxu0 %v3829
        %3870 = vmatprep.subr.bf16.mxu0 0
        %3871 = vmatpush2.bf16.msra.mxu0 %v3828
        %3872 = vmatprep.subr.bf16.mxu0 0
        %3873 = vmatpush2.bf16.msra.mxu0 %v3827
        %3874 = vmatprep.subr.bf16.mxu0 0
        %3875 = vmatpush2.bf16.msra.mxu0 %v3826
        %3876 = vmatprep.subr.bf16.mxu0 0
        %3877 = vmatpush2.bf16.msra.mxu0 %v3825
        %3878 = vmatprep.subr.bf16.mxu0 0
        %3879 = vmatpush2.bf16.msra.mxu0 %v3824
        %3880 = vmatprep.mubr.bf16.mxu0 %v3712
        %3881 = vmatmul.mubr.bf16.gmra.mxu0 %v3711
        %v3882 = vpop.f32.mrf.mxu0
        %v3883 = vadd.f32 %v3750, %v3882
        %v3884 = vpop.f32.mrf.mxu0
        %v3885 = vpop.f32.mrf.mxu0
        %v3886 = vadd.f32 %v3750, %v3885
        %v3887 = vpop.f32.mrf.mxu0
        %3888 = vdwg.mxu0
        %v3889 = vadd.f32 %v3883, %v3521
        %v3890 = vadd.f32 %v3886, %v3522
        %v3891 = vld [vmem:[%s794] sm:$0x1]
        %v3892 = vld [vmem:[%s802] sm:$0x1]
        %3893 = vadd.xlane.f32.xlu0 %v3889
        %v3894 = vpop.xlane.xlu0 %3893
        %3895 = vadd.xlane.f32.xlu0 %v3890
        %v3896 = vpop.xlane.xlu0 %3895
        %v3897 = vmul.f32 %v3894, %v3482
        %v3898 = vmul.f32 %v3896, %v3482
        %v3899 = vmul.f32 %v3889, %v3889
        %v3900 = vmul.f32 %v3890, %v3890
        %3901 = vadd.xlane.f32.xlu0 %v3899
        %v3902 = vpop.xlane.xlu0 %3901
        %3903 = vadd.xlane.f32.xlu0 %v3900
        %v3904 = vpop.xlane.xlu0 %3903
        %v3905 = vmul.f32 %v3902, %v3482
        %v3906 = vmul.f32 %v3904, %v3482
        %v3907 = vmul.f32 %v3897, %v3897
        %v3908 = vmul.f32 %v3898, %v3898
        %v3909 = vsub.f32 %v3905, %v3907
        %v3910 = vsub.f32 %v3906, %v3908
        %v3911 = vmax.f32 %v3909, 0.0
        %v3912 = vmax.f32 %v3910, 0.0
        %v3913 = vsub.f32 %v3889, %v3897
        %v3914 = vsub.f32 %v3890, %v3898
        %v3915 = vadd.f32 %v3911, 1e-12
        %v3916 = vadd.f32 %v3912, 1e-12
        %v3917 = vrsqrt.pop %v3915
        %v3918 = vrsqrt.pop %v3916
        %v3919 = vmul.f32 %v3913, %v3917
        %v3920 = vmul.f32 %v3914, %v3918
        %v3922 = vlaneseq
        %v3923 = vshrl.u32 %v3922, 7
        %v3924 = vsub.s32 0, %v3923
        %v3925 = vrot.slane %v3891, %v3924
        %v3927 = vmul.f32 %v3919, %v3925
        %v3928 = vmul.f32 %v3920, %v3925
        %v3930 = vlaneseq
        %v3931 = vshrl.u32 %v3930, 7
        %v3932 = vsub.s32 0, %v3931
        %v3933 = vrot.slane %v3892, %v3932
        %v3935 = vadd.f32 %v3927, %v3933
        %v3936 = vadd.f32 %v3928, %v3933
        %3937 = vst [vmem:[#allocation2] sm:$0xff] %v3935
        %3938 = vst [vmem:[#allocation2 + $0x8] sm:$0xff] %v3936
        %p3939 = scmp.eq.s32.totalorder %s35, 1
        // Predicated region
        $region141: #{clf_model_forward.1} parent=99 // pred_check
          %p3940 = pneg %p3939
        $region142: #{clf_model_forward.1} parent=99 // pred_check_branch
          %3942 = sbr.rel (%p3940) target = $region144
        $region143: #{clf_model_forward.1} parent=99 // pred_region
          %v3943 = vpack.c.bf16 %v3935, %v3935
          %v3944 = vpack.c.bf16 %v3936, %v3936
          %v3945 = vld [vmem:[%s16] sm:$0xf]
          %v3946 = vld [vmem:[%s16 + $0x4] sm:$0xf]
          %v3947 = vld [vmem:[%s16 + $0x8] sm:$0xf]
          %v3948 = vld [vmem:[%s16 + $0xc] sm:$0xf]
          %v3949 = vld [vmem:[%s16 + $0x10] sm:$0xf]
          %v3950 = vld [vmem:[%s16 + $0x14] sm:$0xf]
          %v3951 = vld [vmem:[%s16 + $0x18] sm:$0xf]
          %v3952 = vld [vmem:[%s16 + $0x1c] sm:$0xf]
          %v3953 = vld [vmem:[%s16 + $0x20] sm:$0xf]
          %v3954 = vld [vmem:[%s16 + $0x24] sm:$0xf]
          %v3955 = vld [vmem:[%s16 + $0x28] sm:$0xf]
          %v3956 = vld [vmem:[%s16 + $0x2c] sm:$0xf]
          %v3957 = vld [vmem:[%s16 + $0x30] sm:$0xf]
          %v3958 = vld [vmem:[%s16 + $0x34] sm:$0xf]
          %v3959 = vld [vmem:[%s16 + $0x38] sm:$0xf]
          %v3960 = vld [vmem:[%s16 + $0x3c] sm:$0xf]
          %v3961 = vld [vmem:[#allocation13] sm:$0x1]
          %v3963 = vlaneseq
          %v3964 = vshrl.u32 %v3963, 7
          %v3965 = vsub.s32 0, %v3964
          %v3966 = vrot.slane %v3961, %v3965
          %v3970 = vunpack.c.l.b16 %v3943
          %v3971 = vunpack.c.l.b16 %v3944
          %v3972 = vrot.slane %v3971, 7
          %vm3973 = vcmask 1041409
          %v3974 = vsel %vm3973, %v3972, %v3970
          %v3975 = vpack.c.b16 %v3974, %v3974
          %v3993 = vunpack.c.l.b16 %v3945
          %v3994 = vunpack.c.l.b16 %v3946
          %v3995 = vunpack.c.l.b16 %v3947
          %v3996 = vunpack.c.l.b16 %v3948
          %v3997 = vunpack.c.l.b16 %v3949
          %v3998 = vunpack.c.l.b16 %v3950
          %v3999 = vunpack.c.l.b16 %v3951
          %v4000 = vunpack.c.l.b16 %v3952
          %v4001 = vunpack.c.l.b16 %v3953
          %v4002 = vunpack.c.l.b16 %v3954
          %v4003 = vunpack.c.l.b16 %v3955
          %v4004 = vunpack.c.l.b16 %v3956
          %v4005 = vunpack.c.l.b16 %v3957
          %v4006 = vunpack.c.l.b16 %v3958
          %v4007 = vunpack.c.l.b16 %v3959
          %v4008 = vunpack.c.l.b16 %v3960
          %v4009 = vpack.c.b16 %v3994, %v3993
          %v4010 = vpack.c.b16 %v3996, %v3995
          %v4011 = vpack.c.b16 %v3998, %v3997
          %v4012 = vpack.c.b16 %v4000, %v3999
          %v4013 = vpack.c.b16 %v4002, %v4001
          %v4014 = vpack.c.b16 %v4004, %v4003
          %v4015 = vpack.c.b16 %v4006, %v4005
          %v4016 = vpack.c.b16 %v4008, %v4007
          %4025 = vmatprep.subr.bf16.mxu0 0
          %4026 = vmatpush1.bf16.msra.mxu0 %v4016
          %4027 = vmatprep.subr.bf16.mxu0 0
          %4028 = vmatpush1.bf16.msra.mxu0 %v4015
          %4029 = vmatprep.subr.bf16.mxu0 0
          %4030 = vmatpush1.bf16.msra.mxu0 %v4014
          %4031 = vmatprep.subr.bf16.mxu0 0
          %4032 = vmatpush1.bf16.msra.mxu0 %v4013
          %4033 = vmatprep.subr.bf16.mxu0 0
          %4034 = vmatpush1.bf16.msra.mxu0 %v4012
          %4035 = vmatprep.subr.bf16.mxu0 0
          %4036 = vmatpush1.bf16.msra.mxu0 %v4011
          %4037 = vmatprep.subr.bf16.mxu0 0
          %4038 = vmatpush1.bf16.msra.mxu0 %v4010
          %4039 = vmatprep.subr.bf16.mxu0 0
          %4040 = vmatpush1.bf16.msra.mxu0 %v4009
          %4041 = vmatprep.subr.bf16.mxu0 0
          %4042 = vmatpush2.bf16.msra.mxu0 0
          %4043 = vmatprep.subr.bf16.mxu0 0
          %4044 = vmatpush2.bf16.msra.mxu0 0
          %4045 = vmatprep.subr.bf16.mxu0 0
          %4046 = vmatpush2.bf16.msra.mxu0 0
          %4047 = vmatprep.subr.bf16.mxu0 0
          %4048 = vmatpush2.bf16.msra.mxu0 0
          %4049 = vmatprep.subr.bf16.mxu0 0
          %4050 = vmatpush2.bf16.msra.mxu0 0
          %4051 = vmatprep.subr.bf16.mxu0 0
          %4052 = vmatpush2.bf16.msra.mxu0 0
          %4053 = vmatprep.subr.bf16.mxu0 0
          %4054 = vmatpush2.bf16.msra.mxu0 0
          %4055 = vmatprep.subr.bf16.mxu0 0
          %4056 = vmatpush2.bf16.msra.mxu0 0
          %4057 = vmatprep.mubr.bf16.mxu0 0
          %4058 = vmatmul.mubr.bf16.gmra.mxu0 %v3975
          %v4059 = vpop.f32.mrf.mxu0
          %v4060 = vadd.f32 %v3966, %v4059
          %v4061 = vpop.f32.mrf.mxu0
          %v4062 = vpop.f32.mrf.mxu0
          %v4063 = vpop.f32.mrf.mxu0
          %4064 = vdwg.mxu0
          %v4065 = vtanh.pop %v4060
          %v4066 = vpack.c.bf16 %v4065, %v4065
          %v4067 = vld [vmem:[%s18] sm:$0xf]
          %v4068 = vld [vmem:[%s18 + $0x4] sm:$0xf]
          %v4069 = vld [vmem:[%s18 + $0x8] sm:$0xf]
          %v4070 = vld [vmem:[%s18 + $0xc] sm:$0xf]
          %v4071 = vld [vmem:[%s18 + $0x10] sm:$0xf]
          %v4072 = vld [vmem:[%s18 + $0x14] sm:$0xf]
          %v4073 = vld [vmem:[%s18 + $0x18] sm:$0xf]
          %v4074 = vld [vmem:[%s18 + $0x1c] sm:$0xf]
          %v4075 = vld [vmem:[%s18 + $0x20] sm:$0xf]
          %v4076 = vld [vmem:[%s18 + $0x24] sm:$0xf]
          %v4077 = vld [vmem:[%s18 + $0x28] sm:$0xf]
          %v4078 = vld [vmem:[%s18 + $0x2c] sm:$0xf]
          %v4079 = vld [vmem:[%s18 + $0x30] sm:$0xf]
          %v4080 = vld [vmem:[%s18 + $0x34] sm:$0xf]
          %v4081 = vld [vmem:[%s18 + $0x38] sm:$0xf]
          %v4082 = vld [vmem:[%s18 + $0x3c] sm:$0xf]
          %v4083 = vld [vmem:[#allocation14] sm:$0x1]
          %v4085 = vlaneseq
          %v4086 = vshrl.u32 %v4085, 7
          %v4087 = vsub.s32 0, %v4086
          %v4088 = vrot.slane %v4083, %v4087
          %v4106 = vunpack.c.l.b16 %v4067
          %v4107 = vunpack.c.l.b16 %v4068
          %v4108 = vunpack.c.l.b16 %v4069
          %v4109 = vunpack.c.l.b16 %v4070
          %v4110 = vunpack.c.l.b16 %v4071
          %v4111 = vunpack.c.l.b16 %v4072
          %v4112 = vunpack.c.l.b16 %v4073
          %v4113 = vunpack.c.l.b16 %v4074
          %v4114 = vunpack.c.l.b16 %v4075
          %v4115 = vunpack.c.l.b16 %v4076
          %v4116 = vunpack.c.l.b16 %v4077
          %v4117 = vunpack.c.l.b16 %v4078
          %v4118 = vunpack.c.l.b16 %v4079
          %v4119 = vunpack.c.l.b16 %v4080
          %v4120 = vunpack.c.l.b16 %v4081
          %v4121 = vunpack.c.l.b16 %v4082
          %v4122 = vpack.c.b16 %v4107, %v4106
          %v4123 = vpack.c.b16 %v4109, %v4108
          %v4124 = vpack.c.b16 %v4111, %v4110
          %v4125 = vpack.c.b16 %v4113, %v4112
          %v4126 = vpack.c.b16 %v4115, %v4114
          %v4127 = vpack.c.b16 %v4117, %v4116
          %v4128 = vpack.c.b16 %v4119, %v4118
          %v4129 = vpack.c.b16 %v4121, %v4120
          %4138 = vmatprep.subr.bf16.mxu0 0
          %4139 = vmatpush1.bf16.msra.mxu0 %v4129
          %4140 = vmatprep.subr.bf16.mxu0 0
          %4141 = vmatpush1.bf16.msra.mxu0 %v4128
          %4142 = vmatprep.subr.bf16.mxu0 0
          %4143 = vmatpush1.bf16.msra.mxu0 %v4127
          %4144 = vmatprep.subr.bf16.mxu0 0
          %4145 = vmatpush1.bf16.msra.mxu0 %v4126
          %4146 = vmatprep.subr.bf16.mxu0 0
          %4147 = vmatpush1.bf16.msra.mxu0 %v4125
          %4148 = vmatprep.subr.bf16.mxu0 0
          %4149 = vmatpush1.bf16.msra.mxu0 %v4124
          %4150 = vmatprep.subr.bf16.mxu0 0
          %4151 = vmatpush1.bf16.msra.mxu0 %v4123
          %4152 = vmatprep.subr.bf16.mxu0 0
          %4153 = vmatpush1.bf16.msra.mxu0 %v4122
          %4154 = vmatprep.subr.bf16.mxu0 0
          %4155 = vmatpush2.bf16.msra.mxu0 0
          %4156 = vmatprep.subr.bf16.mxu0 0
          %4157 = vmatpush2.bf16.msra.mxu0 0
          %4158 = vmatprep.subr.bf16.mxu0 0
          %4159 = vmatpush2.bf16.msra.mxu0 0
          %4160 = vmatprep.subr.bf16.mxu0 0
          %4161 = vmatpush2.bf16.msra.mxu0 0
          %4162 = vmatprep.subr.bf16.mxu0 0
          %4163 = vmatpush2.bf16.msra.mxu0 0
          %4164 = vmatprep.subr.bf16.mxu0 0
          %4165 = vmatpush2.bf16.msra.mxu0 0
          %4166 = vmatprep.subr.bf16.mxu0 0
          %4167 = vmatpush2.bf16.msra.mxu0 0
          %4168 = vmatprep.subr.bf16.mxu0 0
          %4169 = vmatpush2.bf16.msra.mxu0 0
          %4170 = vmatprep.mubr.bf16.mxu0 0
          %4171 = vmatmul.mubr.bf16.gmra.mxu0 %v4066
          %v4172 = vpop.f32.mrf.mxu0
          %v4173 = vadd.f32 %v4088, %v4172
          %v4174 = vpop.f32.mrf.mxu0
          %v4175 = vpop.f32.mrf.mxu0
          %v4176 = vpop.f32.mrf.mxu0
          %4177 = vdwg.mxu0
          %vm4178 = vcmask 9216
          %v4179 = vsel %vm4178, %v4173, -inf
          %4180 = vmax.xlane.f32.xlu0 %v4179
          %v4181 = vpop.xlane.xlu0 %4180
          %v4182 = vsub.f32 %v4173, %v4181
          %v4183 = vmul.f32 %v4182, 1.442695
          %v4184 = vpow.pop %v4183
          %v4185 = vsel %vm4178, %v4184, 0.0
          %4186 = vadd.xlane.f32.xlu0 %v4185
          %v4187 = vpop.xlane.xlu0 %4186
          %v4188 = vrcp.pop %v4187
          %v4189 = vmul.f32 %v4184, %v4188
          %4190 = vst.msk [vmem:[#allocation16] sm:$0x3] %vm4178, %v4189
        $region144: #{clf_model_forward.1} parent=99 // pred_fallthru
          _
        // Predicated region
        $region145: #{clf_model_forward.1} parent=99 // pred_check
          %p4191 = pneg %p528
        $region146: #{clf_model_forward.1} parent=99 // pred_check_branch
          %4193 = sbr.rel (%p4191) target = $region148
        $region147: #{clf_model_forward.1} parent=99 // pred_region
          %s4195 = ssub.s32 32, 32
          %4196 = vsyncadd [#allocation5], %s4195
          %s4198 = sshll.u32 [#allocation16], 4
          %s4199 = int_to_ptr.vmem [resolvable:$true] %s4198
          %4201 = dma.vmem_to_hbm [thread:$0]  %s4199, 32, %s20, [#allocation5]
        $region148: #{clf_model_forward.1} parent=99 // pred_fallthru
          _
        // Predicated region
        $region149: #{clf_model_forward.1} parent=99 // pred_check
          %p4202 = pneg %p528
        $region150: #{clf_model_forward.1} parent=99 // pred_check_branch
          %4204 = sbr.rel (%p4202) target = $region152
        $region151: #{clf_model_forward.1} parent=99 // pred_region
          %4205 = dma.done [#allocation5], 32
        $region152: #{clf_model_forward.1} parent=99 // pred_fallthru
          _
      $region100: #{clf_model_forward.1} parent=5 // pred_fallthru
        _
      %p4206 = scmp.le.s32.totalorder 2, %s30
      // Predicated region
      $region153: #{clf_model_forward.1} parent=5 // pred_check
        %p4207 = pneg %p4206
      $region154: #{clf_model_forward.1} parent=5 // pred_check_branch
        %4209 = sbr.rel (%p4207) target = $region156
      $region155: #{clf_model_forward.1} parent=5 // pred_region
        %s4210 = ssub.s32 %s30, 2
      $region156: #{clf_model_forward.1} parent=5 // pred_fallthru
        _
    $region6: #{clf_model_forward.1} parent=1 // loop_footer
      %s34 = sadd.s32 1, %s30
    $region7: #{clf_model_forward.1} parent=1 // loop_footer_branch
      %29 = sbr.rel target = $region3
    $region8: #{clf_model_forward.1} parent=1 // loop_exit
      _
    %4211 = vsyncpa [#allocation4], 1
    %s4212 = scalar_lea.sflag [#allocation4], 1
    %4213 = vsyncpa %s4212, 1
    %4214 = vsyncpa [#allocation7], 1
    %4215 = vsyncpa [#allocation15], 1
    %4216 = vsyncpa [#allocation5], 1
    %s4217 = scalar_lea.sflag [#allocation5], 1
    %4218 = vsyncpa %s4217, 1

</llo_original>
